<compile_context>
chip_gen: v7x
topology: tpu7x:2x2x1
jax: 0.10.0
libtpu: 0.0.40
codegen_flags: <defaults>
</compile_context>

<pallas_src>
import math

import jax
import jax.numpy as jnp
from jax.experimental import pallas as pl
from jax.experimental.pallas import tpu as pltpu

LATENT_DIM = 32       # D
TIME_EMBED_DIM = 32   # TE
EPS = 1e-5            # torch.nn.LayerNorm default eps
LANES = 128           # TPU vreg lane width
_HI = jax.lax.Precision.HIGHEST


def _adaln_kernel(h_ref, emb_ref, wemb_ref, wout_ref, out_ref):
    """All operands are lane-dense (last dim 128 / 256).

    h_ref   : (Bblk, R, 128)    R = T // G lane-dense rows, G = 128 // D tokens/row
    emb_ref : (Bblk, 1, TE)
    wemb_ref: (TE+1, 256)       lane-tiled emb weight | bias  -> [scale | shift]
    wout_ref: (2*128 + 3, 128)  block-diag W_out, block-diag mean matrix,
                                tiled gamma / beta / out-bias rows
    out_ref : (Bblk, R, 128)
    """
    Bblk = h_ref.shape[0]
    L = LANES

    # Static slices of the packed weight slabs (zero-cost ref views), hoisted
    # above the per-batch loop.
    we    = wemb_ref[:-1, :]                 # (TE, 2L)
    be    = wemb_ref[-1:, :]                 # (1, 2L)
    wo    = wout_ref[:L, :]                  # (L, L) block-diag zero_module Linear
    mmean = wout_ref[L:2 * L, :]             # (L, L) block-diag per-token mean matrix
    gamma = wout_ref[2 * L:2 * L + 1, :]     # (1, L)
    beta  = wout_ref[2 * L + 1:2 * L + 2, :] # (1, L)
    bo    = wout_ref[2 * L + 2:2 * L + 3, :] # (1, L)

    # emb_layers: SiLU -> Linear(TE, 2D), emitted directly in lane-tiled form so
    # scale / shift land at 128-aligned lane offsets (no misaligned lane slice).
    emb = emb_ref[...].reshape(Bblk, -1)                       # (Bblk, TE)
    emb = emb * jax.nn.sigmoid(emb)                            # SiLU
    emb_out = jnp.dot(emb, we, preferred_element_type=jnp.float32,
                      precision=_HI) + be                      # (Bblk, 2L)

    for b in range(Bblk):   # static unroll; wrapper keeps Bblk small (<= 8)
        x = h_ref[b]                                           # (R, L) lane-dense
        # Per-token LayerNorm on the lane-dense layout: the block-diagonal mean
        # matrix broadcasts each token's mean over its own D-lane group (MXU,
        # which is otherwise idle here).
        mu = jnp.dot(x, mmean, preferred_element_type=jnp.float32, precision=_HI)
        xc = x - mu
        var = jnp.dot(xc * xc, mmean, preferred_element_type=jnp.float32,
                      precision=_HI)
        hn = xc * jax.lax.rsqrt(var + EPS) * gamma + beta
        # AdaLN modulation (per batch row, broadcast over tokens / rows).
        hn = hn * (1.0 + emb_out[b:b + 1, :L]) + emb_out[b:b + 1, L:]
        # out_layers: SiLU -> Dropout (identity in eval) -> zero_module Linear,
        # applied per token via the block-diagonal weight on the MXU.
        act = hn * jax.nn.sigmoid(hn)
        y = jnp.dot(act, wo, preferred_element_type=jnp.float32,
                    precision=_HI) + bo
        out_ref[b] = y.astype(out_ref.dtype)


def _num_tensorcores():
    """2 TensorCores per device on v7x, 1 on v5e/v6e."""
    try:
        kind = jax.devices()[0].device_kind
    except Exception:
        return 1
    return 2 if "7" in kind else 1


def _choose_num_blocks(B, bytes_per_batch_elt):
    """Chip/shape adaptive grid depth over the batch axis."""
    ntc = _num_tensorcores()
    nb = ntc if (B % ntc == 0) else 1
    # Split further (a) for DMA/compute pipelining once blocks get big (~1 MiB
    # targets) and (b) to cap the static per-block unroll length.
    # TODO(synk): odd/prime large B keeps a single large block; fine for the
    # shapes this module sees.
    while (B % (nb * 2) == 0) and (
            (B // nb) * bytes_per_batch_elt > (1 << 20) or (B // nb) > 8):
        nb *= 2
    return nb


def pack_params(params):
    """One-time packing of the 6 parameters into 2 lane-dense slabs.

    Hoisted out of the per-call wrapper so the forward pass issues one DMA per
    slab and no per-call concatenates.
    """
    we, be, g, b, wo, bo = params
    TE, twoD = we.shape
    D = twoD // 2
    assert LANES % D == 0, "latent_dim must divide 128"
    G = LANES // D                                             # tokens per lane row

    # emb slab: lane-tiled weight columns so the projection directly produces
    # [scale | shift], each tiled G times across a full 128-lane group.
    we_scale = jnp.tile(we[:, :D], (1, G))                     # (TE, 128)
    we_shift = jnp.tile(we[:, D:], (1, G))                     # (TE, 128)
    be_row = jnp.concatenate([jnp.tile(be[:D], (G,)),
                              jnp.tile(be[D:], (G,))])[None, :]          # (1, 256)
    emb_slab = jnp.concatenate(
        [jnp.concatenate([we_scale, we_shift], axis=1), be_row], axis=0)  # (TE+1, 256)

    # out slab: block-diagonal output projection + block-diagonal mean matrix
    # (per-token reduction on the MXU) + tiled gamma / beta / out-bias rows.
    eye_g = jnp.eye(G, dtype=jnp.float32)
    wo_bd = jnp.kron(eye_g, wo.astype(jnp.float32))                       # (128, 128)
    mean_bd = jnp.kron(eye_g, jnp.full((D, D), 1.0 / D, jnp.float32))     # (128, 128)
    rows = jnp.stack([jnp.tile(g, (G,)), jnp.tile(b, (G,)),
                      jnp.tile(bo, (G,))], axis=0)                        # (3, 128)
    out_slab = jnp.concatenate([wo_bd, mean_bd, rows], axis=0)            # (259, 128)
    return emb_slab.astype(jnp.float32), out_slab.astype(jnp.float32)


def adaln(h, emb, emb_slab, out_slab):
    """h: (B, T, D) f32, emb: (B, TE) f32, slabs from pack_params()."""
    B, T, D = h.shape
    TE = emb.shape[-1]
    assert LANES % D == 0, "latent_dim must divide 128"
    G = LANES // D
    assert T % G == 0, f"T must be a multiple of {G} for the lane-dense layout"
    R = T // G

    # Lane-dense views: contiguous reshapes (no HBM data movement); removes the
    # 32->128 lane padding on the h / out DMAs and masked partial stores.
    h_dense = h.reshape(B, R, LANES)
    emb3 = emb.reshape(B, 1, TE)

    block_bytes = R * LANES * 4
    nb = _choose_num_blocks(B, block_bytes)
    Bblk = B // nb

    slab_bytes = (emb_slab.size + out_slab.size) * 4
    # in + out blocks double-buffered + the two (non-rotating) weight slabs.
    vmem_needed = 4 * Bblk * block_bytes + 2 * slab_bytes + (1 << 20)
    vmem_limit = int(min(32 << 20, max(16 << 20, vmem_needed)))

    cost = pl.CostEstimate(
        flops=int(6 * B * R * LANES * LANES + 4 * B * TE * LANES),
        transcendentals=int(B * T * D + B * TE),
        bytes_accessed=int((2 * B * T * D + B * TE) * 4 + slab_bytes),
    )

    out = pl.pallas_call(
        _adaln_kernel,
        out_shape=jax.ShapeDtypeStruct((B, R, LANES), h.dtype),
        grid_spec=pltpu.PrefetchScalarGridSpec(
            num_scalar_prefetch=0,
            grid=(nb,),
            in_specs=[
                pl.BlockSpec((Bblk, R, LANES), lambda i: (i, 0, 0)),
                pl.BlockSpec((Bblk, 1, TE), lambda i: (i, 0, 0)),
                pl.BlockSpec(emb_slab.shape, lambda i: (0, 0)),
                pl.BlockSpec(out_slab.shape, lambda i: (0, 0)),
            ],
            out_specs=pl.BlockSpec((Bblk, R, LANES), lambda i: (i, 0, 0)),
        ),
        compiler_params=pltpu.CompilerParams(
            dimension_semantics=("parallel",),
            vmem_limit_bytes=vmem_limit),
        cost_estimate=cost,
    )(h_dense, emb3, emb_slab, out_slab)
    return out.reshape(B, T, D)


def init_params(key):
    """Parameter init mirroring the module's __init__ (weights stored (in, out))."""
    D, TE = LATENT_DIM, TIME_EMBED_DIM
    kw, kb = jax.random.split(key)
    bound = 1.0 / math.sqrt(TE)
    we = jax.random.uniform(kw, (TE, 2 * D), jnp.float32, -bound, bound)  # emb_layers Linear
    be = jax.random.uniform(kb, (2 * D,), jnp.float32, -bound, bound)
    g = jnp.ones((D,), jnp.float32)                                       # LayerNorm gamma
    b = jnp.zeros((D,), jnp.float32)                                      # LayerNorm beta
    wo = jnp.zeros((D, D), jnp.float32)                                   # zero_module(Linear(D, D))
    bo = jnp.zeros((D,), jnp.float32)
    return (we, be, g, b, wo, bo)


def reference(h, emb, params):
    """Pure-JAX mirror of the PyTorch AdaLN.forward (eval mode)."""
    we, be, g, b, wo, bo = params
    D = h.shape[-1]

    def silu(z):
        return z * jax.nn.sigmoid(z)

    mu = h.mean(-1, keepdims=True)
    var = ((h - mu) ** 2).mean(-1, keepdims=True)
    hn = (h - mu) / jnp.sqrt(var + EPS) * g + b
    emb_out = (jnp.matmul(silu(emb), we, precision=_HI) + be)[:, None, :]
    scale, shift = emb_out[..., :D], emb_out[..., D:]
    hn = hn * (1.0 + scale) + shift
    return jnp.matmul(silu(hn), wo, precision=_HI) + bo


if __name__ == "__main__":
    key = jax.random.PRNGKey(0)
    kh, ke, kp, kw2, kb2 = jax.random.split(key, 5)

    B, T, D, TE = 2, 16, LATENT_DIM, TIME_EMBED_DIM
    h = jax.random.normal(kh, (B, T, D), jnp.float32)
    emb = jax.random.normal(ke, (B, TE), jnp.float32)

    # Faithful parameters (out Linear zeroed by zero_module in __init__).
    # Slabs are packed ONCE here — hoisted out of the forward call.
    params = init_params(kp)
    emb_slab, out_slab = pack_params(params)
    out = jax.block_until_ready(adaln(h, emb, emb_slab, out_slab))
    ref = reference(h, emb, params)
    assert jnp.allclose(out, ref, atol=1e-4, rtol=1e-4), float(jnp.max(jnp.abs(out - ref)))

    # Verification variant: non-zero output projection so the full fused path
    # (block-diagonal out matmul included) is exercised.
    p2 = list(params)
    p2[-2] = 0.05 * jax.random.normal(kw2, (D, D), jnp.float32)
    p2[-1] = 0.05 * jax.random.normal(kb2, (D,), jnp.float32)
    p2 = tuple(p2)
    emb_slab2, out_slab2 = pack_params(p2)
    out2 = jax.block_until_ready(adaln(h, emb, emb_slab2, out_slab2))
    ref2 = reference(h, emb, p2)
    assert jnp.allclose(out2, ref2, atol=1e-4, rtol=1e-4), float(jnp.max(jnp.abs(out2 - ref2)))

    print("KERNEL_OK")
</pallas_src>

<mosaic_0001>
module attributes {stable_mosaic.version = 11 : i64} {
  func.func @_adaln_kernel(%arg0: i32, %arg1: memref<2x4x128xf32, #tpu.memory_space<vmem>>, %arg2: memref<2x1x32xf32, #tpu.memory_space<vmem>>, %arg3: memref<33x256xf32, #tpu.memory_space<vmem>>, %arg4: memref<259x128xf32, #tpu.memory_space<vmem>>, %arg5: memref<2x4x128xf32, #tpu.memory_space<vmem>>) attributes {dimension_semantics = [#tpu.dimension_semantics<parallel>], iteration_bounds = array<i64: 1>, scalar_prefetch = 0 : i64, scratch_operands = 0 : i64, tpu.core_type = #tpu.core_type<tc>, window_params = [{transform_indices = @transform_0, window_bounds = array<i64: 2, 4, 128>}, {transform_indices = @transform_1, window_bounds = array<i64: 2, 1, 32>}, {pipeline_mode = #tpu.pipeline_mode<synchronous>, transform_indices = @transform_2, window_bounds = array<i64: 33, 256>}, {pipeline_mode = #tpu.pipeline_mode<synchronous>, transform_indices = @transform_3, window_bounds = array<i64: 259, 128>}, {transform_indices = @transform_4, window_bounds = array<i64: 2, 4, 128>}]} {
    %c0 = arith.constant 0 : index
    %c0_0 = arith.constant 0 : index
    %0 = vector.load %arg3[%c0, %c0_0] : memref<33x256xf32, #tpu.memory_space<vmem>>, vector<32x256xf32>
    %c32 = arith.constant 32 : index
    %c0_1 = arith.constant 0 : index
    %1 = vector.load %arg3[%c32, %c0_1] : memref<33x256xf32, #tpu.memory_space<vmem>>, vector<1x256xf32>
    %c0_2 = arith.constant 0 : index
    %c0_3 = arith.constant 0 : index
    %2 = vector.load %arg4[%c0_2, %c0_3] : memref<259x128xf32, #tpu.memory_space<vmem>>, vector<128x128xf32>
    %c128 = arith.constant 128 : index
    %c0_4 = arith.constant 0 : index
    %3 = vector.load %arg4[%c128, %c0_4] : memref<259x128xf32, #tpu.memory_space<vmem>>, vector<128x128xf32>
    %c256 = arith.constant 256 : index
    %c0_5 = arith.constant 0 : index
    %4 = vector.load %arg4[%c256, %c0_5] : memref<259x128xf32, #tpu.memory_space<vmem>>, vector<1x128xf32>
    %c257 = arith.constant 257 : index
    %c0_6 = arith.constant 0 : index
    %5 = vector.load %arg4[%c257, %c0_6] : memref<259x128xf32, #tpu.memory_space<vmem>>, vector<1x128xf32>
    %c258 = arith.constant 258 : index
    %c0_7 = arith.constant 0 : index
    %6 = vector.load %arg4[%c258, %c0_7] : memref<259x128xf32, #tpu.memory_space<vmem>>, vector<1x128xf32>
    %c0_8 = arith.constant 0 : index
    %c0_9 = arith.constant 0 : index
    %c0_10 = arith.constant 0 : index
    %7 = vector.load %arg2[%c0_8, %c0_9, %c0_10] : memref<2x1x32xf32, #tpu.memory_space<vmem>>, vector<2x1x32xf32>
    %8 = vector.shape_cast %7 : vector<2x1x32xf32> to vector<2x32xf32>
    %9 = arith.negf %8 : vector<2x32xf32>
    %10 = math.exp %9 : vector<2x32xf32>
    %cst = arith.constant 1.000000e+00 : f32
    %11 = vector.broadcast %cst : f32 to vector<2x32xf32>
    %12 = arith.addf %11, %10 : vector<2x32xf32>
    %13 = arith.divf %11, %12 : vector<2x32xf32>
    %14 = arith.mulf %8, %13 : vector<2x32xf32>
    %cst_11 = arith.constant dense<0.000000e+00> : vector<2x256xf32>
    %15 = tpu.matmul %14, %0, %cst_11 {dimension_numbers = #tpu.dot_dimension_numbers<[1], [0], [0], [1], [0, 0, 1, 1], [], []>, precision = #tpu.contract_precision<fp32>} : vector<2x32xf32>, vector<32x256xf32>, vector<2x256xf32> -> vector<2x256xf32>
    %16 = vector.broadcast %1 : vector<1x256xf32> to vector<2x256xf32>
    %17 = arith.addf %15, %16 : vector<2x256xf32>
    %c0_12 = arith.constant 0 : index
    %c0_13 = arith.constant 0 : index
    %c0_14 = arith.constant 0 : index
    %18 = vector.load %arg1[%c0_12, %c0_13, %c0_14] : memref<2x4x128xf32, #tpu.memory_space<vmem>>, vector<1x4x128xf32>
    %19 = vector.shape_cast %18 : vector<1x4x128xf32> to vector<4x128xf32>
    %cst_15 = arith.constant dense<0.000000e+00> : vector<4x128xf32>
    %20 = tpu.matmul %19, %3, %cst_15 {dimension_numbers = #tpu.dot_dimension_numbers<[1], [0], [0], [1], [0, 0, 1, 1], [], []>, precision = #tpu.contract_precision<fp32>} : vector<4x128xf32>, vector<128x128xf32>, vector<4x128xf32> -> vector<4x128xf32>
    %21 = arith.subf %19, %20 : vector<4x128xf32>
    %22 = arith.mulf %21, %21 : vector<4x128xf32>
    %cst_16 = arith.constant dense<0.000000e+00> : vector<4x128xf32>
    %23 = tpu.matmul %22, %3, %cst_16 {dimension_numbers = #tpu.dot_dimension_numbers<[1], [0], [0], [1], [0, 0, 1, 1], [], []>, precision = #tpu.contract_precision<fp32>} : vector<4x128xf32>, vector<128x128xf32>, vector<4x128xf32> -> vector<4x128xf32>
    %cst_17 = arith.constant 9.99999974E-6 : f32
    %24 = vector.broadcast %cst_17 : f32 to vector<4x128xf32>
    %25 = arith.addf %23, %24 : vector<4x128xf32>
    %26 = math.rsqrt %25 : vector<4x128xf32>
    %27 = arith.mulf %21, %26 : vector<4x128xf32>
    %28 = vector.broadcast %4 : vector<1x128xf32> to vector<4x128xf32>
    %29 = arith.mulf %27, %28 : vector<4x128xf32>
    %30 = vector.broadcast %5 : vector<1x128xf32> to vector<4x128xf32>
    %31 = arith.addf %29, %30 : vector<4x128xf32>
    %32 = vector.extract_strided_slice %17 {offsets = [0, 0], sizes = [1, 128], strides = [1, 1]} : vector<2x256xf32> to vector<1x128xf32>
    %cst_18 = arith.constant 1.000000e+00 : f32
    %33 = vector.broadcast %cst_18 : f32 to vector<1x128xf32>
    %34 = arith.addf %33, %32 : vector<1x128xf32>
    %35 = vector.broadcast %34 : vector<1x128xf32> to vector<4x128xf32>
    %36 = arith.mulf %31, %35 : vector<4x128xf32>
    %37 = vector.extract_strided_slice %17 {offsets = [0, 128], sizes = [1, 128], strides = [1, 1]} : vector<2x256xf32> to vector<1x128xf32>
    %38 = vector.broadcast %37 : vector<1x128xf32> to vector<4x128xf32>
    %39 = arith.addf %36, %38 : vector<4x128xf32>
    %40 = arith.negf %39 : vector<4x128xf32>
    %41 = math.exp %40 : vector<4x128xf32>
    %cst_19 = arith.constant 1.000000e+00 : f32
    %42 = vector.broadcast %cst_19 : f32 to vector<4x128xf32>
    %43 = arith.addf %42, %41 : vector<4x128xf32>
    %44 = arith.divf %42, %43 : vector<4x128xf32>
    %45 = arith.mulf %39, %44 : vector<4x128xf32>
    %cst_20 = arith.constant dense<0.000000e+00> : vector<4x128xf32>
    %46 = tpu.matmul %45, %2, %cst_20 {dimension_numbers = #tpu.dot_dimension_numbers<[1], [0], [0], [1], [0, 0, 1, 1], [], []>, precision = #tpu.contract_precision<fp32>} : vector<4x128xf32>, vector<128x128xf32>, vector<4x128xf32> -> vector<4x128xf32>
    %47 = vector.broadcast %6 : vector<1x128xf32> to vector<4x128xf32>
    %48 = arith.addf %46, %47 : vector<4x128xf32>
    %c0_21 = arith.constant 0 : index
    %c0_22 = arith.constant 0 : index
    %c0_23 = arith.constant 0 : index
    %49 = vector.load %arg5[%c0_21, %c0_22, %c0_23] : memref<2x4x128xf32, #tpu.memory_space<vmem>>, vector<1x4x128xf32>
    %50 = vector.shape_cast %49 : vector<1x4x128xf32> to vector<4x128xf32>
    %51 = vector.shape_cast %48 : vector<4x128xf32> to vector<1x4x128xf32>
    tpu.vector_store %arg5[%c0_21, %c0_22, %c0_23], %51 {strides = array<i32>} : memref<2x4x128xf32, #tpu.memory_space<vmem>>, vector<1x4x128xf32>,
    %c1 = arith.constant 1 : index
    %c0_24 = arith.constant 0 : index
    %c0_25 = arith.constant 0 : index
    %52 = vector.load %arg1[%c1, %c0_24, %c0_25] : memref<2x4x128xf32, #tpu.memory_space<vmem>>, vector<1x4x128xf32>
    %53 = vector.shape_cast %52 : vector<1x4x128xf32> to vector<4x128xf32>
    %cst_26 = arith.constant dense<0.000000e+00> : vector<4x128xf32>
    %54 = tpu.matmul %53, %3, %cst_26 {dimension_numbers = #tpu.dot_dimension_numbers<[1], [0], [0], [1], [0, 0, 1, 1], [], []>, precision = #tpu.contract_precision<fp32>} : vector<4x128xf32>, vector<128x128xf32>, vector<4x128xf32> -> vector<4x128xf32>
    %55 = arith.subf %53, %54 : vector<4x128xf32>
    %56 = arith.mulf %55, %55 : vector<4x128xf32>
    %cst_27 = arith.constant dense<0.000000e+00> : vector<4x128xf32>
    %57 = tpu.matmul %56, %3, %cst_27 {dimension_numbers = #tpu.dot_dimension_numbers<[1], [0], [0], [1], [0, 0, 1, 1], [], []>, precision = #tpu.contract_precision<fp32>} : vector<4x128xf32>, vector<128x128xf32>, vector<4x128xf32> -> vector<4x128xf32>
    %cst_28 = arith.constant 9.99999974E-6 : f32
    %58 = vector.broadcast %cst_28 : f32 to vector<4x128xf32>
    %59 = arith.addf %57, %58 : vector<4x128xf32>
    %60 = math.rsqrt %59 : vector<4x128xf32>
    %61 = arith.mulf %55, %60 : vector<4x128xf32>
    %62 = vector.broadcast %4 : vector<1x128xf32> to vector<4x128xf32>
    %63 = arith.mulf %61, %62 : vector<4x128xf32>
    %64 = vector.broadcast %5 : vector<1x128xf32> to vector<4x128xf32>
    %65 = arith.addf %63, %64 : vector<4x128xf32>
    %66 = vector.extract_strided_slice %17 {offsets = [1, 0], sizes = [1, 128], strides = [1, 1]} : vector<2x256xf32> to vector<1x128xf32>
    %cst_29 = arith.constant 1.000000e+00 : f32
    %67 = vector.broadcast %cst_29 : f32 to vector<1x128xf32>
    %68 = arith.addf %67, %66 : vector<1x128xf32>
    %69 = vector.broadcast %68 : vector<1x128xf32> to vector<4x128xf32>
    %70 = arith.mulf %65, %69 : vector<4x128xf32>
    %71 = vector.extract_strided_slice %17 {offsets = [1, 128], sizes = [1, 128], strides = [1, 1]} : vector<2x256xf32> to vector<1x128xf32>
    %72 = vector.broadcast %71 : vector<1x128xf32> to vector<4x128xf32>
    %73 = arith.addf %70, %72 : vector<4x128xf32>
    %74 = arith.negf %73 : vector<4x128xf32>
    %75 = math.exp %74 : vector<4x128xf32>
    %cst_30 = arith.constant 1.000000e+00 : f32
    %76 = vector.broadcast %cst_30 : f32 to vector<4x128xf32>
    %77 = arith.addf %76, %75 : vector<4x128xf32>
    %78 = arith.divf %76, %77 : vector<4x128xf32>
    %79 = arith.mulf %73, %78 : vector<4x128xf32>
    %cst_31 = arith.constant dense<0.000000e+00> : vector<4x128xf32>
    %80 = tpu.matmul %79, %2, %cst_31 {dimension_numbers = #tpu.dot_dimension_numbers<[1], [0], [0], [1], [0, 0, 1, 1], [], []>, precision = #tpu.contract_precision<fp32>} : vector<4x128xf32>, vector<128x128xf32>, vector<4x128xf32> -> vector<4x128xf32>
    %81 = vector.broadcast %6 : vector<1x128xf32> to vector<4x128xf32>
    %82 = arith.addf %80, %81 : vector<4x128xf32>
    %c1_32 = arith.constant 1 : index
    %c0_33 = arith.constant 0 : index
    %c0_34 = arith.constant 0 : index
    %83 = vector.load %arg5[%c1_32, %c0_33, %c0_34] : memref<2x4x128xf32, #tpu.memory_space<vmem>>, vector<1x4x128xf32>
    %84 = vector.shape_cast %83 : vector<1x4x128xf32> to vector<4x128xf32>
    %85 = vector.shape_cast %82 : vector<4x128xf32> to vector<1x4x128xf32>
    tpu.vector_store %arg5[%c1_32, %c0_33, %c0_34], %85 {strides = array<i32>} : memref<2x4x128xf32, #tpu.memory_space<vmem>>, vector<1x4x128xf32>,
    return
  }
  func.func @transform_0(%arg0: i32) -> (i32, i32, i32) {
    %c0_i32 = arith.constant 0 : i32
    %c0_i32_0 = arith.constant 0 : i32
    %c0_i32_1 = arith.constant 0 : i32
    return %arg0, %c0_i32, %c0_i32_0 : i32, i32, i32
  }
  func.func @transform_1(%arg0: i32) -> (i32, i32, i32) {
    %c0_i32 = arith.constant 0 : i32
    %c0_i32_0 = arith.constant 0 : i32
    %c0_i32_1 = arith.constant 0 : i32
    return %arg0, %c0_i32, %c0_i32_0 : i32, i32, i32
  }
  func.func @transform_2(%arg0: i32) -> (i32, i32) {
    %c0_i32 = arith.constant 0 : i32
    %c0_i32_0 = arith.constant 0 : i32
    %c0_i32_1 = arith.constant 0 : i32
    return %c0_i32, %c0_i32_0 : i32, i32
  }
  func.func @transform_3(%arg0: i32) -> (i32, i32) {
    %c0_i32 = arith.constant 0 : i32
    %c0_i32_0 = arith.constant 0 : i32
    %c0_i32_1 = arith.constant 0 : i32
    return %c0_i32, %c0_i32_0 : i32, i32
  }
  func.func @transform_4(%arg0: i32) -> (i32, i32, i32) {
    %c0_i32 = arith.constant 0 : i32
    %c0_i32_0 = arith.constant 0 : i32
    %c0_i32_1 = arith.constant 0 : i32
    return %arg0, %c0_i32, %c0_i32_0 : i32, i32, i32
  }
}

</mosaic_0001>

<llo_original>
// kernel: tpu_custom_call.1
$region0: #{tpu_custom_call.1}
  #allocation0 [shape = 'u32[]', space=smem, size = 0x4, offset = 0x4, fixed_abs, tag = 'smem constant byte address 0x4 - core index']
  #allocation1 [shape = 'u32[144,128]{1,0:T(1,128)}', space=vmem, size = 0x12000, scoped, tag = 'internal scratch']
  %s0 = inlined_call_operand.hbm [shape: f32[2,4,128], index: 0, kind: input, shape index: {}]
  %s1 = inlined_call_operand.vmem [shape: f32[2,1,32], index: 1, kind: input, shape index: {}]
  %s2 = inlined_call_operand.hbm [shape: f32[33,256], index: 2, kind: input, shape index: {}]
  %s3 = inlined_call_operand.hbm [shape: f32[259,128], index: 3, kind: input, shape index: {}]
  %s4 = inlined_call_operand.hbm [shape: f32[2,4,128], index: 4, kind: output, shape index: {}]
  %s5 = sld [smem:[#allocation0]]
  $region38: #{tpu_custom_call.1} parent=0
    _
  %s7 = ssub.s32 1, %s5
  %s8 = scalar_select 0, %s7, %s5
  $region1: #{tpu_custom_call.1} parent=0
    #allocation2 [shape = 'u8[4096]{0}', space=vmem, size = 0x1000, scoped, tag = 'input window, operand 0, single buffered']
    #allocation3 [shape = 's32[1]{0}', space=sflag, size = 0x4, scoped, tag = 'scoped memory for tpu_custom_call.1']
    #allocation4 [shape = 's32[1]{0}', space=sflag, size = 0x4, scoped, tag = 'scoped memory for tpu_custom_call.1']
    #allocation5 [shape = 'u8[40960]{0}', space=vmem, size = 0xa000, scoped, tag = 'input window, operand 2, single buffered']
    #allocation6 [shape = 's32[1]{0}', space=sflag, size = 0x4, scoped, tag = 'scoped memory for tpu_custom_call.1']
    #allocation7 [shape = 'u8[135168]{0}', space=vmem, size = 0x21000, scoped, tag = 'input window, operand 3, single buffered']
    #allocation8 [shape = 'u8[4096]{0}', space=vmem, size = 0x1000, scoped, tag = 'output window, operand 0, single buffered']
    %9 = vsyncpa [#allocation3], 0
    %10 = vsyncpa [#allocation6], 0
    %11 = vsyncpa [#allocation4], 0
    // Predicated region
    $region2: #{tpu_custom_call.1} parent=1 // pred_check
      _
    $region3: #{tpu_custom_call.1} parent=1 // pred_check_branch
      %13 = sbr.rel (0) target = $region5
    $region4: #{tpu_custom_call.1} parent=1 // pred_region
      %s15 = ssub.s32 128, 128
      %16 = vsyncadd [#allocation3], %s15
      %s17 = sshll.u32 [#allocation2], 4
      %s18 = int_to_ptr.vmem [resolvable:$true] %s17
      %23 = dma.hbm_to_vmem [thread:$0]  %s0, 128, %s18, [#allocation3], 64, 64, 4
    $region5: #{tpu_custom_call.1} parent=1 // pred_fallthru
      _
    // Predicated region
    $region6: #{tpu_custom_call.1} parent=1 // pred_check
      _
    $region7: #{tpu_custom_call.1} parent=1 // pred_check_branch
      %25 = sbr.rel (0) target = $region9
    $region8: #{tpu_custom_call.1} parent=1 // pred_region
      _
    $region9: #{tpu_custom_call.1} parent=1 // pred_fallthru
      _
    // Predicated region
    $region10: #{tpu_custom_call.1} parent=1 // pred_check
      _
    $region11: #{tpu_custom_call.1} parent=1 // pred_check_branch
      %27 = sbr.rel (0) target = $region13
    $region12: #{tpu_custom_call.1} parent=1 // pred_region
      %s29 = ssub.s32 1280, 1280
      %30 = vsyncadd [#allocation6], %s29
      %s31 = sshll.u32 [#allocation5], 4
      %s32 = int_to_ptr.vmem [resolvable:$true] %s31
      %37 = dma.hbm_to_vmem [thread:$0]  %s2, 1280, %s32, [#allocation6], 256, 256, 16
    $region13: #{tpu_custom_call.1} parent=1 // pred_fallthru
      _
    // Predicated region
    $region14: #{tpu_custom_call.1} parent=1 // pred_check
      _
    $region15: #{tpu_custom_call.1} parent=1 // pred_check_branch
      %39 = sbr.rel (0) target = $region17
    $region16: #{tpu_custom_call.1} parent=1 // pred_region
      %s41 = ssub.s32 4224, 4224
      %42 = vsyncadd [#allocation6], %s41
      %s43 = sshll.u32 [#allocation7], 4
      %s44 = int_to_ptr.vmem [resolvable:$true] %s43
      %49 = dma.hbm_to_vmem [thread:$0]  %s3, 4224, %s44, [#allocation6], 128, 128, 8
    $region17: #{tpu_custom_call.1} parent=1 // pred_fallthru
      _
    // Predicated region
    $region18: #{tpu_custom_call.1} parent=1 // pred_check
      _
    $region19: #{tpu_custom_call.1} parent=1 // pred_check_branch
      %51 = sbr.rel (0) target = $region21
    $region20: #{tpu_custom_call.1} parent=1 // pred_region
      %52 = dma.done [#allocation3], 128
    $region21: #{tpu_custom_call.1} parent=1 // pred_fallthru
      _
    // Predicated region
    $region22: #{tpu_custom_call.1} parent=1 // pred_check
      _
    $region23: #{tpu_custom_call.1} parent=1 // pred_check_branch
      %54 = sbr.rel (0) target = $region25
    $region24: #{tpu_custom_call.1} parent=1 // pred_region
      %55 = dma.done [#allocation6], 1280
    $region25: #{tpu_custom_call.1} parent=1 // pred_fallthru
      _
    // Predicated region
    $region26: #{tpu_custom_call.1} parent=1 // pred_check
      _
    $region27: #{tpu_custom_call.1} parent=1 // pred_check_branch
      %57 = sbr.rel (0) target = $region29
    $region28: #{tpu_custom_call.1} parent=1 // pred_region
      %58 = dma.done [#allocation6], 4224
    $region29: #{tpu_custom_call.1} parent=1 // pred_fallthru
      _
    %v59 = vld [vmem:[#allocation5] sm:$0xff]
    %v60 = vld [vmem:[#allocation5 + $0x8] sm:$0xff]
    %v61 = vld [vmem:[#allocation5 + $0x10] sm:$0xff]
    %v62 = vld [vmem:[#allocation5 + $0x18] sm:$0xff]
    %v63 = vld [vmem:[#allocation5 + $0x20] sm:$0xff]
    %v64 = vld [vmem:[#allocation5 + $0x28] sm:$0xff]
    %v65 = vld [vmem:[#allocation5 + $0x30] sm:$0xff]
    %v66 = vld [vmem:[#allocation5 + $0x38] sm:$0xff]
    %s67 = scalar_lea.vmem [#allocation5], 64
    %v68 = vld [vmem:[%s67] ss:$8 sm:$0x3]
    %v69 = vld [vmem:[#allocation7] sm:$0xff]
    %v70 = vld [vmem:[#allocation7 + $0x8] sm:$0xff]
    %v71 = vld [vmem:[#allocation7 + $0x10] sm:$0xff]
    %v72 = vld [vmem:[#allocation7 + $0x18] sm:$0xff]
    %v73 = vld [vmem:[#allocation7 + $0x20] sm:$0xff]
    %v74 = vld [vmem:[#allocation7 + $0x28] sm:$0xff]
    %v75 = vld [vmem:[#allocation7 + $0x30] sm:$0xff]
    %v76 = vld [vmem:[#allocation7 + $0x38] sm:$0xff]
    %v77 = vld [vmem:[#allocation7 + $0x40] sm:$0xff]
    %v78 = vld [vmem:[#allocation7 + $0x48] sm:$0xff]
    %v79 = vld [vmem:[#allocation7 + $0x50] sm:$0xff]
    %v80 = vld [vmem:[#allocation7 + $0x58] sm:$0xff]
    %v81 = vld [vmem:[#allocation7 + $0x60] sm:$0xff]
    %v82 = vld [vmem:[#allocation7 + $0x68] sm:$0xff]
    %v83 = vld [vmem:[#allocation7 + $0x70] sm:$0xff]
    %v84 = vld [vmem:[#allocation7 + $0x78] sm:$0xff]
    %v85 = vld [vmem:[#allocation7 + $0x80] sm:$0xff]
    %v86 = vld [vmem:[#allocation7 + $0x88] sm:$0xff]
    %v87 = vld [vmem:[#allocation7 + $0x90] sm:$0xff]
    %v88 = vld [vmem:[#allocation7 + $0x98] sm:$0xff]
    %v89 = vld [vmem:[#allocation7 + $0xa0] sm:$0xff]
    %v90 = vld [vmem:[#allocation7 + $0xa8] sm:$0xff]
    %v91 = vld [vmem:[#allocation7 + $0xb0] sm:$0xff]
    %v92 = vld [vmem:[#allocation7 + $0xb8] sm:$0xff]
    %v93 = vld [vmem:[#allocation7 + $0xc0] sm:$0xff]
    %v94 = vld [vmem:[#allocation7 + $0xc8] sm:$0xff]
    %v95 = vld [vmem:[#allocation7 + $0xd0] sm:$0xff]
    %v96 = vld [vmem:[#allocation7 + $0xd8] sm:$0xff]
    %v97 = vld [vmem:[#allocation7 + $0xe0] sm:$0xff]
    %v98 = vld [vmem:[#allocation7 + $0xe8] sm:$0xff]
    %v99 = vld [vmem:[#allocation7 + $0xf0] sm:$0xff]
    %v100 = vld [vmem:[#allocation7 + $0xf8] sm:$0xff]
    %v101 = vld [vmem:[#allocation7 + $0x100] sm:$0x1]
    %v102 = vld [vmem:[#allocation7 + $0x101] sm:$0x1]
    %v103 = vld [vmem:[#allocation7 + $0x102] sm:$0x1]
    %v104 = vld [vmem:[%s1] sm:$0x1]
    %v105 = vld [vmem:[%s1 + $0x1] sm:$0x1]
    %v106 = vxor.u32 %v104, 2147483648
    %v107 = vxor.u32 %v105, 2147483648
    %v108 = vmul.f32 %v106, 1.442695
    %v109 = vpow.pop %v108
    %v110 = vmul.f32 %v107, 1.442695
    %v111 = vpow.pop %v110
    %v112 = vadd.f32 %v109, 1.0
    %v113 = vadd.f32 %v111, 1.0
    %v114 = vrcp.pop %v112
    %v115 = vmul.f32 1.0, %v114
    %v116 = vrcp.pop %v113
    %v117 = vmul.f32 1.0, %v116
    %v118 = vmul.f32 %v104, %v115
    %v119 = vmul.f32 %v105, %v117
    %v121 = vlaneseq
    %v122 = vshrl.u32 %v121, 7
    %v123 = vsub.s32 0, %v122
    %v124 = vrot.slane %v68, %v123
    %v125 = vlaneseq
    %v126 = vshrl.u32 %v125, 7
    %v127 = vsub.s32 1, %v126
    %v128 = vrot.slane %v68, %v127
    %v133 = vcombine.low %v118, %v119
    %v135 = vunpack.c.l.s4 1966171168
    %v136 = vunpack.c.0.s8 %v135
    %v137 = vlaneseq
    %v138 = vshrl.u32 %v137, 7
    %v139 = vsub.s32 %v136, %v138
    %v140 = vrot.slane %v133, %v139
    %v142 = vunpack.c.l.s4 1966171168
    %v143 = vunpack.c.0.s8 %v142
    %v144 = vlaneseq
    %v145 = vshrl.u32 %v144, 7
    %v146 = vsub.s32 %v143, %v145
    %v147 = vrot.slane %v140, %v146
    %vm148 = vcmask 261120
    %v149 = vsel %vm148, %v147, 0
    %v151 = vand.u32 %v60, 4294901760
    %152 = vmatprep.subr.mxu0 %v151
    %v153 = vand.u32 %v59, 4294901760
    %154 = vmatpush1.msra.mxu0 %v153
    %v155 = vand.u32 %v62, 4294901760
    %156 = vmatprep.subr.mxu0 %v155
    %v157 = vand.u32 %v61, 4294901760
    %158 = vmatpush1.msra.mxu0 %v157
    %v159 = vand.u32 %v64, 4294901760
    %160 = vmatprep.subr.mxu0 %v159
    %v161 = vand.u32 %v63, 4294901760
    %162 = vmatpush1.msra.mxu0 %v161
    %v163 = vand.u32 %v66, 4294901760
    %164 = vmatprep.subr.mxu0 %v163
    %v165 = vand.u32 %v65, 4294901760
    %166 = vmatpush1.msra.mxu0 %v165
    %167 = vmatprep.subr.mxu0 0.0
    %168 = vmatpush1.msra.mxu0 0.0
    %169 = vmatprep.subr.mxu0 0.0
    %170 = vmatpush1.msra.mxu0 0.0
    %171 = vmatprep.subr.mxu0 0.0
    %172 = vmatpush1.msra.mxu0 0.0
    %173 = vmatprep.subr.mxu0 0.0
    %174 = vmatpush1.msra.mxu0 0.0
    %175 = vmatprep.subr.mxu0 0.0
    %176 = vmatpush1.msra.mxu0 0.0
    %177 = vmatprep.subr.mxu0 0.0
    %178 = vmatpush1.msra.mxu0 0.0
    %179 = vmatprep.subr.mxu0 0.0
    %180 = vmatpush1.msra.mxu0 0.0
    %181 = vmatprep.subr.mxu0 0.0
    %182 = vmatpush1.msra.mxu0 0.0
    %183 = vmatprep.subr.mxu0 0.0
    %184 = vmatpush1.msra.mxu0 0.0
    %185 = vmatprep.subr.mxu0 0.0
    %186 = vmatpush1.msra.mxu0 0.0
    %187 = vmatprep.subr.mxu0 0.0
    %188 = vmatpush1.msra.mxu0 0.0
    %189 = vmatprep.subr.mxu0 0.0
    %190 = vmatpush1.msra.mxu0 0.0
    %191 = vmatprep.subr.mxu0 0.0
    %192 = vmatpush1.msra.mxu0 0.0
    %193 = vmatprep.subr.mxu0 0.0
    %194 = vmatpush1.msra.mxu0 0.0
    %195 = vmatprep.subr.mxu0 0.0
    %196 = vmatpush1.msra.mxu0 0.0
    %197 = vmatprep.subr.mxu0 0.0
    %198 = vmatpush1.msra.mxu0 0.0
    %199 = vmatprep.subr.mxu0 0.0
    %200 = vmatpush1.msra.mxu0 0.0
    %201 = vmatprep.subr.mxu0 0.0
    %202 = vmatpush1.msra.mxu0 0.0
    %203 = vmatprep.subr.mxu0 0.0
    %204 = vmatpush1.msra.mxu0 0.0
    %205 = vmatprep.subr.mxu0 0.0
    %206 = vmatpush1.msra.mxu0 0.0
    %207 = vmatprep.subr.mxu0 0.0
    %208 = vmatpush1.msra.mxu0 0.0
    %209 = vmatprep.subr.mxu0 0.0
    %210 = vmatpush1.msra.mxu0 0.0
    %211 = vmatprep.subr.mxu0 0.0
    %212 = vmatpush1.msra.mxu0 0.0
    %213 = vmatprep.subr.mxu0 0.0
    %214 = vmatpush1.msra.mxu0 0.0
    %215 = vmatprep.subr.mxu0 0.0
    %216 = vmatpush1.msra.mxu0 0.0
    %217 = vmatprep.subr.mxu0 0.0
    %218 = vmatpush1.msra.mxu0 0.0
    %219 = vmatprep.subr.mxu0 0.0
    %220 = vmatpush1.msra.mxu0 0.0
    %221 = vmatprep.subr.mxu0 0.0
    %222 = vmatpush1.msra.mxu0 0.0
    %223 = vmatprep.mubr.f32.mxu0 0.0
    %v224 = vand.u32 %v149, 4294901760
    %v225 = vsub.f32 %v149, %v224
    %v226 = vand.u32 %v225, 4294901760
    %v227 = vsub.f32 %v225, %v226
    %v228 = vand.u32 %v227, 4294901760
    %229 = vmatmul.mubr.f32.gmra.mrb[0].mxu0 %v228
    %v230 = vpop.f32.mrb[0].mxu0
    %v231 = vadd.f32 %v124, %v230
    %v232 = vpop.f32.mrb[0].mxu0
    %v233 = vadd.f32 %v128, %v232
    %234 = vdwg.mxu0
    %v235 = vand.u32 %v60, 4294901760
    %v236 = vsub.f32 %v60, %v235
    %v237 = vand.u32 %v236, 4294901760
    %v238 = vsub.f32 %v236, %v237
    %v239 = vand.u32 %v238, 4294901760
    %240 = vmatprep.subr.mxu0 %v239
    %v241 = vand.u32 %v59, 4294901760
    %v242 = vsub.f32 %v59, %v241
    %v243 = vand.u32 %v242, 4294901760
    %v244 = vsub.f32 %v242, %v243
    %v245 = vand.u32 %v244, 4294901760
    %246 = vmatpush1.msra.mxu0 %v245
    %v247 = vand.u32 %v62, 4294901760
    %v248 = vsub.f32 %v62, %v247
    %v249 = vand.u32 %v248, 4294901760
    %v250 = vsub.f32 %v248, %v249
    %v251 = vand.u32 %v250, 4294901760
    %252 = vmatprep.subr.mxu0 %v251
    %v253 = vand.u32 %v61, 4294901760
    %v254 = vsub.f32 %v61, %v253
    %v255 = vand.u32 %v254, 4294901760
    %v256 = vsub.f32 %v254, %v255
    %v257 = vand.u32 %v256, 4294901760
    %258 = vmatpush1.msra.mxu0 %v257
    %v259 = vand.u32 %v64, 4294901760
    %v260 = vsub.f32 %v64, %v259
    %v261 = vand.u32 %v260, 4294901760
    %v262 = vsub.f32 %v260, %v261
    %v263 = vand.u32 %v262, 4294901760
    %264 = vmatprep.subr.mxu0 %v263
    %v265 = vand.u32 %v63, 4294901760
    %v266 = vsub.f32 %v63, %v265
    %v267 = vand.u32 %v266, 4294901760
    %v268 = vsub.f32 %v266, %v267
    %v269 = vand.u32 %v268, 4294901760
    %270 = vmatpush1.msra.mxu0 %v269
    %v271 = vand.u32 %v66, 4294901760
    %v272 = vsub.f32 %v66, %v271
    %v273 = vand.u32 %v272, 4294901760
    %v274 = vsub.f32 %v272, %v273
    %v275 = vand.u32 %v274, 4294901760
    %276 = vmatprep.subr.mxu0 %v275
    %v277 = vand.u32 %v65, 4294901760
    %v278 = vsub.f32 %v65, %v277
    %v279 = vand.u32 %v278, 4294901760
    %v280 = vsub.f32 %v278, %v279
    %v281 = vand.u32 %v280, 4294901760
    %282 = vmatpush1.msra.mxu0 %v281
    %283 = vmatprep.subr.mxu0 0.0
    %284 = vmatpush1.msra.mxu0 0.0
    %285 = vmatprep.subr.mxu0 0.0
    %286 = vmatpush1.msra.mxu0 0.0
    %287 = vmatprep.subr.mxu0 0.0
    %288 = vmatpush1.msra.mxu0 0.0
    %289 = vmatprep.subr.mxu0 0.0
    %290 = vmatpush1.msra.mxu0 0.0
    %291 = vmatprep.subr.mxu0 0.0
    %292 = vmatpush1.msra.mxu0 0.0
    %293 = vmatprep.subr.mxu0 0.0
    %294 = vmatpush1.msra.mxu0 0.0
    %295 = vmatprep.subr.mxu0 0.0
    %296 = vmatpush1.msra.mxu0 0.0
    %297 = vmatprep.subr.mxu0 0.0
    %298 = vmatpush1.msra.mxu0 0.0
    %299 = vmatprep.subr.mxu0 0.0
    %300 = vmatpush1.msra.mxu0 0.0
    %301 = vmatprep.subr.mxu0 0.0
    %302 = vmatpush1.msra.mxu0 0.0
    %303 = vmatprep.subr.mxu0 0.0
    %304 = vmatpush1.msra.mxu0 0.0
    %305 = vmatprep.subr.mxu0 0.0
    %306 = vmatpush1.msra.mxu0 0.0
    %307 = vmatprep.subr.mxu0 0.0
    %308 = vmatpush1.msra.mxu0 0.0
    %309 = vmatprep.subr.mxu0 0.0
    %310 = vmatpush1.msra.mxu0 0.0
    %311 = vmatprep.subr.mxu0 0.0
    %312 = vmatpush1.msra.mxu0 0.0
    %313 = vmatprep.subr.mxu0 0.0
    %314 = vmatpush1.msra.mxu0 0.0
    %315 = vmatprep.subr.mxu0 0.0
    %316 = vmatpush1.msra.mxu0 0.0
    %317 = vmatprep.subr.mxu0 0.0
    %318 = vmatpush1.msra.mxu0 0.0
    %319 = vmatprep.subr.mxu0 0.0
    %320 = vmatpush1.msra.mxu0 0.0
    %321 = vmatprep.subr.mxu0 0.0
    %322 = vmatpush1.msra.mxu0 0.0
    %323 = vmatprep.subr.mxu0 0.0
    %324 = vmatpush1.msra.mxu0 0.0
    %325 = vmatprep.subr.mxu0 0.0
    %326 = vmatpush1.msra.mxu0 0.0
    %327 = vmatprep.subr.mxu0 0.0
    %328 = vmatpush1.msra.mxu0 0.0
    %329 = vmatprep.subr.mxu0 0.0
    %330 = vmatpush1.msra.mxu0 0.0
    %331 = vmatprep.subr.mxu0 0.0
    %332 = vmatpush1.msra.mxu0 0.0
    %333 = vmatprep.subr.mxu0 0.0
    %334 = vmatpush1.msra.mxu0 0.0
    %335 = vmatprep.subr.mxu0 0.0
    %336 = vmatpush1.msra.mxu0 0.0
    %337 = vmatprep.subr.mxu0 0.0
    %338 = vmatpush1.msra.mxu0 0.0
    %339 = vmatprep.mubr.f32.mxu0 0.0
    %v340 = vand.u32 %v149, 4294901760
    %341 = vmatmul.mubr.f32.gmra.mrb[0].mxu0 %v340
    %v342 = vpop.f32.mrb[0].mxu0
    %v343 = vadd.f32 %v231, %v342
    %v344 = vpop.f32.mrb[0].mxu0
    %v345 = vadd.f32 %v233, %v344
    %346 = vdwg.mxu0
    %v347 = vand.u32 %v60, 4294901760
    %v348 = vsub.f32 %v60, %v347
    %349 = vmatprep.subr.mxu0 %v348
    %v350 = vand.u32 %v59, 4294901760
    %v351 = vsub.f32 %v59, %v350
    %352 = vmatpush1.msra.mxu0 %v351
    %v353 = vand.u32 %v62, 4294901760
    %v354 = vsub.f32 %v62, %v353
    %355 = vmatprep.subr.mxu0 %v354
    %v356 = vand.u32 %v61, 4294901760
    %v357 = vsub.f32 %v61, %v356
    %358 = vmatpush1.msra.mxu0 %v357
    %v359 = vand.u32 %v64, 4294901760
    %v360 = vsub.f32 %v64, %v359
    %361 = vmatprep.subr.mxu0 %v360
    %v362 = vand.u32 %v63, 4294901760
    %v363 = vsub.f32 %v63, %v362
    %364 = vmatpush1.msra.mxu0 %v363
    %v365 = vand.u32 %v66, 4294901760
    %v366 = vsub.f32 %v66, %v365
    %367 = vmatprep.subr.mxu0 %v366
    %v368 = vand.u32 %v65, 4294901760
    %v369 = vsub.f32 %v65, %v368
    %370 = vmatpush1.msra.mxu0 %v369
    %371 = vmatprep.subr.mxu0 0.0
    %372 = vmatpush1.msra.mxu0 0.0
    %373 = vmatprep.subr.mxu0 0.0
    %374 = vmatpush1.msra.mxu0 0.0
    %375 = vmatprep.subr.mxu0 0.0
    %376 = vmatpush1.msra.mxu0 0.0
    %377 = vmatprep.subr.mxu0 0.0
    %378 = vmatpush1.msra.mxu0 0.0
    %379 = vmatprep.subr.mxu0 0.0
    %380 = vmatpush1.msra.mxu0 0.0
    %381 = vmatprep.subr.mxu0 0.0
    %382 = vmatpush1.msra.mxu0 0.0
    %383 = vmatprep.subr.mxu0 0.0
    %384 = vmatpush1.msra.mxu0 0.0
    %385 = vmatprep.subr.mxu0 0.0
    %386 = vmatpush1.msra.mxu0 0.0
    %387 = vmatprep.subr.mxu0 0.0
    %388 = vmatpush1.msra.mxu0 0.0
    %389 = vmatprep.subr.mxu0 0.0
    %390 = vmatpush1.msra.mxu0 0.0
    %391 = vmatprep.subr.mxu0 0.0
    %392 = vmatpush1.msra.mxu0 0.0
    %393 = vmatprep.subr.mxu0 0.0
    %394 = vmatpush1.msra.mxu0 0.0
    %395 = vmatprep.subr.mxu0 0.0
    %396 = vmatpush1.msra.mxu0 0.0
    %397 = vmatprep.subr.mxu0 0.0
    %398 = vmatpush1.msra.mxu0 0.0
    %399 = vmatprep.subr.mxu0 0.0
    %400 = vmatpush1.msra.mxu0 0.0
    %401 = vmatprep.subr.mxu0 0.0
    %402 = vmatpush1.msra.mxu0 0.0
    %403 = vmatprep.subr.mxu0 0.0
    %404 = vmatpush1.msra.mxu0 0.0
    %405 = vmatprep.subr.mxu0 0.0
    %406 = vmatpush1.msra.mxu0 0.0
    %407 = vmatprep.subr.mxu0 0.0
    %408 = vmatpush1.msra.mxu0 0.0
    %409 = vmatprep.subr.mxu0 0.0
    %410 = vmatpush1.msra.mxu0 0.0
    %411 = vmatprep.subr.mxu0 0.0
    %412 = vmatpush1.msra.mxu0 0.0
    %413 = vmatprep.subr.mxu0 0.0
    %414 = vmatpush1.msra.mxu0 0.0
    %415 = vmatprep.subr.mxu0 0.0
    %416 = vmatpush1.msra.mxu0 0.0
    %417 = vmatprep.subr.mxu0 0.0
    %418 = vmatpush1.msra.mxu0 0.0
    %419 = vmatprep.subr.mxu0 0.0
    %420 = vmatpush1.msra.mxu0 0.0
    %421 = vmatprep.subr.mxu0 0.0
    %422 = vmatpush1.msra.mxu0 0.0
    %423 = vmatprep.subr.mxu0 0.0
    %424 = vmatpush1.msra.mxu0 0.0
    %425 = vmatprep.subr.mxu0 0.0
    %426 = vmatpush1.msra.mxu0 0.0
    %427 = vmatprep.mubr.f32.mxu0 0.0
    %v428 = vand.u32 %v149, 4294901760
    %v429 = vsub.f32 %v149, %v428
    %430 = vmatmul.mubr.f32.gmra.mrb[0].mxu0 %v429
    %v431 = vpop.f32.mrb[0].mxu0
    %v432 = vadd.f32 %v343, %v431
    %v433 = vpop.f32.mrb[0].mxu0
    %v434 = vadd.f32 %v345, %v433
    %435 = vdwg.mxu0
    %v436 = vand.u32 %v60, 4294901760
    %437 = vmatprep.subr.mxu0 %v436
    %v438 = vand.u32 %v59, 4294901760
    %439 = vmatpush1.msra.mxu0 %v438
    %v440 = vand.u32 %v62, 4294901760
    %441 = vmatprep.subr.mxu0 %v440
    %v442 = vand.u32 %v61, 4294901760
    %443 = vmatpush1.msra.mxu0 %v442
    %v444 = vand.u32 %v64, 4294901760
    %445 = vmatprep.subr.mxu0 %v444
    %v446 = vand.u32 %v63, 4294901760
    %447 = vmatpush1.msra.mxu0 %v446
    %v448 = vand.u32 %v66, 4294901760
    %449 = vmatprep.subr.mxu0 %v448
    %v450 = vand.u32 %v65, 4294901760
    %451 = vmatpush1.msra.mxu0 %v450
    %452 = vmatprep.subr.mxu0 0.0
    %453 = vmatpush1.msra.mxu0 0.0
    %454 = vmatprep.subr.mxu0 0.0
    %455 = vmatpush1.msra.mxu0 0.0
    %456 = vmatprep.subr.mxu0 0.0
    %457 = vmatpush1.msra.mxu0 0.0
    %458 = vmatprep.subr.mxu0 0.0
    %459 = vmatpush1.msra.mxu0 0.0
    %460 = vmatprep.subr.mxu0 0.0
    %461 = vmatpush1.msra.mxu0 0.0
    %462 = vmatprep.subr.mxu0 0.0
    %463 = vmatpush1.msra.mxu0 0.0
    %464 = vmatprep.subr.mxu0 0.0
    %465 = vmatpush1.msra.mxu0 0.0
    %466 = vmatprep.subr.mxu0 0.0
    %467 = vmatpush1.msra.mxu0 0.0
    %468 = vmatprep.subr.mxu0 0.0
    %469 = vmatpush1.msra.mxu0 0.0
    %470 = vmatprep.subr.mxu0 0.0
    %471 = vmatpush1.msra.mxu0 0.0
    %472 = vmatprep.subr.mxu0 0.0
    %473 = vmatpush1.msra.mxu0 0.0
    %474 = vmatprep.subr.mxu0 0.0
    %475 = vmatpush1.msra.mxu0 0.0
    %476 = vmatprep.subr.mxu0 0.0
    %477 = vmatpush1.msra.mxu0 0.0
    %478 = vmatprep.subr.mxu0 0.0
    %479 = vmatpush1.msra.mxu0 0.0
    %480 = vmatprep.subr.mxu0 0.0
    %481 = vmatpush1.msra.mxu0 0.0
    %482 = vmatprep.subr.mxu0 0.0
    %483 = vmatpush1.msra.mxu0 0.0
    %484 = vmatprep.subr.mxu0 0.0
    %485 = vmatpush1.msra.mxu0 0.0
    %486 = vmatprep.subr.mxu0 0.0
    %487 = vmatpush1.msra.mxu0 0.0
    %488 = vmatprep.subr.mxu0 0.0
    %489 = vmatpush1.msra.mxu0 0.0
    %490 = vmatprep.subr.mxu0 0.0
    %491 = vmatpush1.msra.mxu0 0.0
    %492 = vmatprep.subr.mxu0 0.0
    %493 = vmatpush1.msra.mxu0 0.0
    %494 = vmatprep.subr.mxu0 0.0
    %495 = vmatpush1.msra.mxu0 0.0
    %496 = vmatprep.subr.mxu0 0.0
    %497 = vmatpush1.msra.mxu0 0.0
    %498 = vmatprep.subr.mxu0 0.0
    %499 = vmatpush1.msra.mxu0 0.0
    %500 = vmatprep.subr.mxu0 0.0
    %501 = vmatpush1.msra.mxu0 0.0
    %502 = vmatprep.subr.mxu0 0.0
    %503 = vmatpush1.msra.mxu0 0.0
    %504 = vmatprep.subr.mxu0 0.0
    %505 = vmatpush1.msra.mxu0 0.0
    %506 = vmatprep.subr.mxu0 0.0
    %507 = vmatpush1.msra.mxu0 0.0
    %508 = vmatprep.mubr.f32.mxu0 0.0
    %v509 = vand.u32 %v149, 4294901760
    %v510 = vsub.f32 %v149, %v509
    %v511 = vand.u32 %v510, 4294901760
    %512 = vmatmul.mubr.f32.gmra.mrb[0].mxu0 %v511
    %v513 = vpop.f32.mrb[0].mxu0
    %v514 = vadd.f32 %v432, %v513
    %v515 = vpop.f32.mrb[0].mxu0
    %v516 = vadd.f32 %v434, %v515
    %517 = vdwg.mxu0
    %v518 = vand.u32 %v60, 4294901760
    %v519 = vsub.f32 %v60, %v518
    %v520 = vand.u32 %v519, 4294901760
    %521 = vmatprep.subr.mxu0 %v520
    %v522 = vand.u32 %v59, 4294901760
    %v523 = vsub.f32 %v59, %v522
    %v524 = vand.u32 %v523, 4294901760
    %525 = vmatpush1.msra.mxu0 %v524
    %v526 = vand.u32 %v62, 4294901760
    %v527 = vsub.f32 %v62, %v526
    %v528 = vand.u32 %v527, 4294901760
    %529 = vmatprep.subr.mxu0 %v528
    %v530 = vand.u32 %v61, 4294901760
    %v531 = vsub.f32 %v61, %v530
    %v532 = vand.u32 %v531, 4294901760
    %533 = vmatpush1.msra.mxu0 %v532
    %v534 = vand.u32 %v64, 4294901760
    %v535 = vsub.f32 %v64, %v534
    %v536 = vand.u32 %v535, 4294901760
    %537 = vmatprep.subr.mxu0 %v536
    %v538 = vand.u32 %v63, 4294901760
    %v539 = vsub.f32 %v63, %v538
    %v540 = vand.u32 %v539, 4294901760
    %541 = vmatpush1.msra.mxu0 %v540
    %v542 = vand.u32 %v66, 4294901760
    %v543 = vsub.f32 %v66, %v542
    %v544 = vand.u32 %v543, 4294901760
    %545 = vmatprep.subr.mxu0 %v544
    %v546 = vand.u32 %v65, 4294901760
    %v547 = vsub.f32 %v65, %v546
    %v548 = vand.u32 %v547, 4294901760
    %549 = vmatpush1.msra.mxu0 %v548
    %550 = vmatprep.subr.mxu0 0.0
    %551 = vmatpush1.msra.mxu0 0.0
    %552 = vmatprep.subr.mxu0 0.0
    %553 = vmatpush1.msra.mxu0 0.0
    %554 = vmatprep.subr.mxu0 0.0
    %555 = vmatpush1.msra.mxu0 0.0
    %556 = vmatprep.subr.mxu0 0.0
    %557 = vmatpush1.msra.mxu0 0.0
    %558 = vmatprep.subr.mxu0 0.0
    %559 = vmatpush1.msra.mxu0 0.0
    %560 = vmatprep.subr.mxu0 0.0
    %561 = vmatpush1.msra.mxu0 0.0
    %562 = vmatprep.subr.mxu0 0.0
    %563 = vmatpush1.msra.mxu0 0.0
    %564 = vmatprep.subr.mxu0 0.0
    %565 = vmatpush1.msra.mxu0 0.0
    %566 = vmatprep.subr.mxu0 0.0
    %567 = vmatpush1.msra.mxu0 0.0
    %568 = vmatprep.subr.mxu0 0.0
    %569 = vmatpush1.msra.mxu0 0.0
    %570 = vmatprep.subr.mxu0 0.0
    %571 = vmatpush1.msra.mxu0 0.0
    %572 = vmatprep.subr.mxu0 0.0
    %573 = vmatpush1.msra.mxu0 0.0
    %574 = vmatprep.subr.mxu0 0.0
    %575 = vmatpush1.msra.mxu0 0.0
    %576 = vmatprep.subr.mxu0 0.0
    %577 = vmatpush1.msra.mxu0 0.0
    %578 = vmatprep.subr.mxu0 0.0
    %579 = vmatpush1.msra.mxu0 0.0
    %580 = vmatprep.subr.mxu0 0.0
    %581 = vmatpush1.msra.mxu0 0.0
    %582 = vmatprep.subr.mxu0 0.0
    %583 = vmatpush1.msra.mxu0 0.0
    %584 = vmatprep.subr.mxu0 0.0
    %585 = vmatpush1.msra.mxu0 0.0
    %586 = vmatprep.subr.mxu0 0.0
    %587 = vmatpush1.msra.mxu0 0.0
    %588 = vmatprep.subr.mxu0 0.0
    %589 = vmatpush1.msra.mxu0 0.0
    %590 = vmatprep.subr.mxu0 0.0
    %591 = vmatpush1.msra.mxu0 0.0
    %592 = vmatprep.subr.mxu0 0.0
    %593 = vmatpush1.msra.mxu0 0.0
    %594 = vmatprep.subr.mxu0 0.0
    %595 = vmatpush1.msra.mxu0 0.0
    %596 = vmatprep.subr.mxu0 0.0
    %597 = vmatpush1.msra.mxu0 0.0
    %598 = vmatprep.subr.mxu0 0.0
    %599 = vmatpush1.msra.mxu0 0.0
    %600 = vmatprep.subr.mxu0 0.0
    %601 = vmatpush1.msra.mxu0 0.0
    %602 = vmatprep.subr.mxu0 0.0
    %603 = vmatpush1.msra.mxu0 0.0
    %604 = vmatprep.subr.mxu0 0.0
    %605 = vmatpush1.msra.mxu0 0.0
    %606 = vmatprep.mubr.f32.mxu0 0.0
    %v607 = vand.u32 %v149, 4294901760
    %608 = vmatmul.mubr.f32.gmra.mrb[0].mxu0 %v607
    %v609 = vpop.f32.mrb[0].mxu0
    %v610 = vadd.f32 %v514, %v609
    %v611 = vpop.f32.mrb[0].mxu0
    %v612 = vadd.f32 %v516, %v611
    %613 = vdwg.mxu0
    %v614 = vand.u32 %v60, 4294901760
    %615 = vmatprep.subr.mxu0 %v614
    %v616 = vand.u32 %v59, 4294901760
    %617 = vmatpush1.msra.mxu0 %v616
    %v618 = vand.u32 %v62, 4294901760
    %619 = vmatprep.subr.mxu0 %v618
    %v620 = vand.u32 %v61, 4294901760
    %621 = vmatpush1.msra.mxu0 %v620
    %v622 = vand.u32 %v64, 4294901760
    %623 = vmatprep.subr.mxu0 %v622
    %v624 = vand.u32 %v63, 4294901760
    %625 = vmatpush1.msra.mxu0 %v624
    %v626 = vand.u32 %v66, 4294901760
    %627 = vmatprep.subr.mxu0 %v626
    %v628 = vand.u32 %v65, 4294901760
    %629 = vmatpush1.msra.mxu0 %v628
    %630 = vmatprep.subr.mxu0 0.0
    %631 = vmatpush1.msra.mxu0 0.0
    %632 = vmatprep.subr.mxu0 0.0
    %633 = vmatpush1.msra.mxu0 0.0
    %634 = vmatprep.subr.mxu0 0.0
    %635 = vmatpush1.msra.mxu0 0.0
    %636 = vmatprep.subr.mxu0 0.0
    %637 = vmatpush1.msra.mxu0 0.0
    %638 = vmatprep.subr.mxu0 0.0
    %639 = vmatpush1.msra.mxu0 0.0
    %640 = vmatprep.subr.mxu0 0.0
    %641 = vmatpush1.msra.mxu0 0.0
    %642 = vmatprep.subr.mxu0 0.0
    %643 = vmatpush1.msra.mxu0 0.0
    %644 = vmatprep.subr.mxu0 0.0
    %645 = vmatpush1.msra.mxu0 0.0
    %646 = vmatprep.subr.mxu0 0.0
    %647 = vmatpush1.msra.mxu0 0.0
    %648 = vmatprep.subr.mxu0 0.0
    %649 = vmatpush1.msra.mxu0 0.0
    %650 = vmatprep.subr.mxu0 0.0
    %651 = vmatpush1.msra.mxu0 0.0
    %652 = vmatprep.subr.mxu0 0.0
    %653 = vmatpush1.msra.mxu0 0.0
    %654 = vmatprep.subr.mxu0 0.0
    %655 = vmatpush1.msra.mxu0 0.0
    %656 = vmatprep.subr.mxu0 0.0
    %657 = vmatpush1.msra.mxu0 0.0
    %658 = vmatprep.subr.mxu0 0.0
    %659 = vmatpush1.msra.mxu0 0.0
    %660 = vmatprep.subr.mxu0 0.0
    %661 = vmatpush1.msra.mxu0 0.0
    %662 = vmatprep.subr.mxu0 0.0
    %663 = vmatpush1.msra.mxu0 0.0
    %664 = vmatprep.subr.mxu0 0.0
    %665 = vmatpush1.msra.mxu0 0.0
    %666 = vmatprep.subr.mxu0 0.0
    %667 = vmatpush1.msra.mxu0 0.0
    %668 = vmatprep.subr.mxu0 0.0
    %669 = vmatpush1.msra.mxu0 0.0
    %670 = vmatprep.subr.mxu0 0.0
    %671 = vmatpush1.msra.mxu0 0.0
    %672 = vmatprep.subr.mxu0 0.0
    %673 = vmatpush1.msra.mxu0 0.0
    %674 = vmatprep.subr.mxu0 0.0
    %675 = vmatpush1.msra.mxu0 0.0
    %676 = vmatprep.subr.mxu0 0.0
    %677 = vmatpush1.msra.mxu0 0.0
    %678 = vmatprep.subr.mxu0 0.0
    %679 = vmatpush1.msra.mxu0 0.0
    %680 = vmatprep.subr.mxu0 0.0
    %681 = vmatpush1.msra.mxu0 0.0
    %682 = vmatprep.subr.mxu0 0.0
    %683 = vmatpush1.msra.mxu0 0.0
    %684 = vmatprep.subr.mxu0 0.0
    %685 = vmatpush1.msra.mxu0 0.0
    %686 = vmatprep.mubr.f32.mxu0 0.0
    %v687 = vand.u32 %v149, 4294901760
    %688 = vmatmul.mubr.f32.gmra.mrb[0].mxu0 %v687
    %v689 = vpop.f32.mrb[0].mxu0
    %v690 = vadd.f32 %v610, %v689
    %v691 = vpop.f32.mrb[0].mxu0
    %v692 = vadd.f32 %v612, %v691
    %693 = vdwg.mxu0
    %v694 = vld [vmem:[#allocation2] sm:$0xf]
    %695 = vmatprep.subr.mxu0 0.0
    %v696 = vand.u32 %v85, 4294901760
    %697 = vmatpush1.msra.mxu0 %v696
    %698 = vmatprep.subr.mxu0 0.0
    %v699 = vand.u32 %v86, 4294901760
    %700 = vmatpush1.msra.mxu0 %v699
    %701 = vmatprep.subr.mxu0 0.0
    %v702 = vand.u32 %v87, 4294901760
    %703 = vmatpush1.msra.mxu0 %v702
    %704 = vmatprep.subr.mxu0 0.0
    %v705 = vand.u32 %v88, 4294901760
    %706 = vmatpush1.msra.mxu0 %v705
    %707 = vmatprep.subr.mxu0 0.0
    %v708 = vand.u32 %v89, 4294901760
    %709 = vmatpush1.msra.mxu0 %v708
    %710 = vmatprep.subr.mxu0 0.0
    %v711 = vand.u32 %v90, 4294901760
    %712 = vmatpush1.msra.mxu0 %v711
    %713 = vmatprep.subr.mxu0 0.0
    %v714 = vand.u32 %v91, 4294901760
    %715 = vmatpush1.msra.mxu0 %v714
    %716 = vmatprep.subr.mxu0 0.0
    %v717 = vand.u32 %v92, 4294901760
    %718 = vmatpush1.msra.mxu0 %v717
    %719 = vmatprep.subr.mxu0 0.0
    %v720 = vand.u32 %v93, 4294901760
    %721 = vmatpush1.msra.mxu0 %v720
    %722 = vmatprep.subr.mxu0 0.0
    %v723 = vand.u32 %v94, 4294901760
    %724 = vmatpush1.msra.mxu0 %v723
    %725 = vmatprep.subr.mxu0 0.0
    %v726 = vand.u32 %v95, 4294901760
    %727 = vmatpush1.msra.mxu0 %v726
    %728 = vmatprep.subr.mxu0 0.0
    %v729 = vand.u32 %v96, 4294901760
    %730 = vmatpush1.msra.mxu0 %v729
    %731 = vmatprep.subr.mxu0 0.0
    %v732 = vand.u32 %v97, 4294901760
    %733 = vmatpush1.msra.mxu0 %v732
    %734 = vmatprep.subr.mxu0 0.0
    %v735 = vand.u32 %v98, 4294901760
    %736 = vmatpush1.msra.mxu0 %v735
    %737 = vmatprep.subr.mxu0 0.0
    %v738 = vand.u32 %v99, 4294901760
    %739 = vmatpush1.msra.mxu0 %v738
    %740 = vmatprep.subr.mxu0 0.0
    %v741 = vand.u32 %v100, 4294901760
    %742 = vmatpush1.msra.mxu0 %v741
    %743 = vmatprep.subr.mxu0 0.0
    %744 = vmatpush1.msra.mxu0 0.0
    %745 = vmatprep.subr.mxu0 0.0
    %746 = vmatpush1.msra.mxu0 0.0
    %747 = vmatprep.subr.mxu0 0.0
    %748 = vmatpush1.msra.mxu0 0.0
    %749 = vmatprep.subr.mxu0 0.0
    %750 = vmatpush1.msra.mxu0 0.0
    %751 = vmatprep.subr.mxu0 0.0
    %752 = vmatpush1.msra.mxu0 0.0
    %753 = vmatprep.subr.mxu0 0.0
    %754 = vmatpush1.msra.mxu0 0.0
    %755 = vmatprep.subr.mxu0 0.0
    %756 = vmatpush1.msra.mxu0 0.0
    %757 = vmatprep.subr.mxu0 0.0
    %758 = vmatpush1.msra.mxu0 0.0
    %759 = vmatprep.subr.mxu0 0.0
    %760 = vmatpush1.msra.mxu0 0.0
    %761 = vmatprep.subr.mxu0 0.0
    %762 = vmatpush1.msra.mxu0 0.0
    %763 = vmatprep.subr.mxu0 0.0
    %764 = vmatpush1.msra.mxu0 0.0
    %765 = vmatprep.subr.mxu0 0.0
    %766 = vmatpush1.msra.mxu0 0.0
    %767 = vmatprep.subr.mxu0 0.0
    %768 = vmatpush1.msra.mxu0 0.0
    %769 = vmatprep.subr.mxu0 0.0
    %770 = vmatpush1.msra.mxu0 0.0
    %771 = vmatprep.subr.mxu0 0.0
    %772 = vmatpush1.msra.mxu0 0.0
    %773 = vmatprep.subr.mxu0 0.0
    %774 = vmatpush1.msra.mxu0 0.0
    %775 = vmatprep.mubr.f32.mxu0 0.0
    %v776 = vand.u32 %v694, 4294901760
    %v777 = vsub.f32 %v694, %v776
    %v778 = vand.u32 %v777, 4294901760
    %v779 = vsub.f32 %v777, %v778
    %v780 = vand.u32 %v779, 4294901760
    %781 = vmatmul.mubr.f32.gmra.mrb[0].mxu0 %v780
    %v782 = vpop.f32.mrb[0].mxu0
    %v783 = vadd.f32 0.0, %v782
    %v784 = vpop.f32.mrb[0].mxu0
    %785 = vdwg.mxu0
    %786 = vmatprep.subr.mxu0 0.0
    %v787 = vand.u32 %v85, 4294901760
    %v788 = vsub.f32 %v85, %v787
    %v789 = vand.u32 %v788, 4294901760
    %v790 = vsub.f32 %v788, %v789
    %v791 = vand.u32 %v790, 4294901760
    %792 = vmatpush1.msra.mxu0 %v791
    %793 = vmatprep.subr.mxu0 0.0
    %v794 = vand.u32 %v86, 4294901760
    %v795 = vsub.f32 %v86, %v794
    %v796 = vand.u32 %v795, 4294901760
    %v797 = vsub.f32 %v795, %v796
    %v798 = vand.u32 %v797, 4294901760
    %799 = vmatpush1.msra.mxu0 %v798
    %800 = vmatprep.subr.mxu0 0.0
    %v801 = vand.u32 %v87, 4294901760
    %v802 = vsub.f32 %v87, %v801
    %v803 = vand.u32 %v802, 4294901760
    %v804 = vsub.f32 %v802, %v803
    %v805 = vand.u32 %v804, 4294901760
    %806 = vmatpush1.msra.mxu0 %v805
    %807 = vmatprep.subr.mxu0 0.0
    %v808 = vand.u32 %v88, 4294901760
    %v809 = vsub.f32 %v88, %v808
    %v810 = vand.u32 %v809, 4294901760
    %v811 = vsub.f32 %v809, %v810
    %v812 = vand.u32 %v811, 4294901760
    %813 = vmatpush1.msra.mxu0 %v812
    %814 = vmatprep.subr.mxu0 0.0
    %v815 = vand.u32 %v89, 4294901760
    %v816 = vsub.f32 %v89, %v815
    %v817 = vand.u32 %v816, 4294901760
    %v818 = vsub.f32 %v816, %v817
    %v819 = vand.u32 %v818, 4294901760
    %820 = vmatpush1.msra.mxu0 %v819
    %821 = vmatprep.subr.mxu0 0.0
    %v822 = vand.u32 %v90, 4294901760
    %v823 = vsub.f32 %v90, %v822
    %v824 = vand.u32 %v823, 4294901760
    %v825 = vsub.f32 %v823, %v824
    %v826 = vand.u32 %v825, 4294901760
    %827 = vmatpush1.msra.mxu0 %v826
    %828 = vmatprep.subr.mxu0 0.0
    %v829 = vand.u32 %v91, 4294901760
    %v830 = vsub.f32 %v91, %v829
    %v831 = vand.u32 %v830, 4294901760
    %v832 = vsub.f32 %v830, %v831
    %v833 = vand.u32 %v832, 4294901760
    %834 = vmatpush1.msra.mxu0 %v833
    %835 = vmatprep.subr.mxu0 0.0
    %v836 = vand.u32 %v92, 4294901760
    %v837 = vsub.f32 %v92, %v836
    %v838 = vand.u32 %v837, 4294901760
    %v839 = vsub.f32 %v837, %v838
    %v840 = vand.u32 %v839, 4294901760
    %841 = vmatpush1.msra.mxu0 %v840
    %842 = vmatprep.subr.mxu0 0.0
    %v843 = vand.u32 %v93, 4294901760
    %v844 = vsub.f32 %v93, %v843
    %v845 = vand.u32 %v844, 4294901760
    %v846 = vsub.f32 %v844, %v845
    %v847 = vand.u32 %v846, 4294901760
    %848 = vmatpush1.msra.mxu0 %v847
    %849 = vmatprep.subr.mxu0 0.0
    %v850 = vand.u32 %v94, 4294901760
    %v851 = vsub.f32 %v94, %v850
    %v852 = vand.u32 %v851, 4294901760
    %v853 = vsub.f32 %v851, %v852
    %v854 = vand.u32 %v853, 4294901760
    %855 = vmatpush1.msra.mxu0 %v854
    %856 = vmatprep.subr.mxu0 0.0
    %v857 = vand.u32 %v95, 4294901760
    %v858 = vsub.f32 %v95, %v857
    %v859 = vand.u32 %v858, 4294901760
    %v860 = vsub.f32 %v858, %v859
    %v861 = vand.u32 %v860, 4294901760
    %862 = vmatpush1.msra.mxu0 %v861
    %863 = vmatprep.subr.mxu0 0.0
    %v864 = vand.u32 %v96, 4294901760
    %v865 = vsub.f32 %v96, %v864
    %v866 = vand.u32 %v865, 4294901760
    %v867 = vsub.f32 %v865, %v866
    %v868 = vand.u32 %v867, 4294901760
    %869 = vmatpush1.msra.mxu0 %v868
    %870 = vmatprep.subr.mxu0 0.0
    %v871 = vand.u32 %v97, 4294901760
    %v872 = vsub.f32 %v97, %v871
    %v873 = vand.u32 %v872, 4294901760
    %v874 = vsub.f32 %v872, %v873
    %v875 = vand.u32 %v874, 4294901760
    %876 = vmatpush1.msra.mxu0 %v875
    %877 = vmatprep.subr.mxu0 0.0
    %v878 = vand.u32 %v98, 4294901760
    %v879 = vsub.f32 %v98, %v878
    %v880 = vand.u32 %v879, 4294901760
    %v881 = vsub.f32 %v879, %v880
    %v882 = vand.u32 %v881, 4294901760
    %883 = vmatpush1.msra.mxu0 %v882
    %884 = vmatprep.subr.mxu0 0.0
    %v885 = vand.u32 %v99, 4294901760
    %v886 = vsub.f32 %v99, %v885
    %v887 = vand.u32 %v886, 4294901760
    %v888 = vsub.f32 %v886, %v887
    %v889 = vand.u32 %v888, 4294901760
    %890 = vmatpush1.msra.mxu0 %v889
    %891 = vmatprep.subr.mxu0 0.0
    %v892 = vand.u32 %v100, 4294901760
    %v893 = vsub.f32 %v100, %v892
    %v894 = vand.u32 %v893, 4294901760
    %v895 = vsub.f32 %v893, %v894
    %v896 = vand.u32 %v895, 4294901760
    %897 = vmatpush1.msra.mxu0 %v896
    %898 = vmatprep.subr.mxu0 0.0
    %899 = vmatpush1.msra.mxu0 0.0
    %900 = vmatprep.subr.mxu0 0.0
    %901 = vmatpush1.msra.mxu0 0.0
    %902 = vmatprep.subr.mxu0 0.0
    %903 = vmatpush1.msra.mxu0 0.0
    %904 = vmatprep.subr.mxu0 0.0
    %905 = vmatpush1.msra.mxu0 0.0
    %906 = vmatprep.subr.mxu0 0.0
    %907 = vmatpush1.msra.mxu0 0.0
    %908 = vmatprep.subr.mxu0 0.0
    %909 = vmatpush1.msra.mxu0 0.0
    %910 = vmatprep.subr.mxu0 0.0
    %911 = vmatpush1.msra.mxu0 0.0
    %912 = vmatprep.subr.mxu0 0.0
    %913 = vmatpush1.msra.mxu0 0.0
    %914 = vmatprep.subr.mxu0 0.0
    %915 = vmatpush1.msra.mxu0 0.0
    %916 = vmatprep.subr.mxu0 0.0
    %917 = vmatpush1.msra.mxu0 0.0
    %918 = vmatprep.subr.mxu0 0.0
    %919 = vmatpush1.msra.mxu0 0.0
    %920 = vmatprep.subr.mxu0 0.0
    %921 = vmatpush1.msra.mxu0 0.0
    %922 = vmatprep.subr.mxu0 0.0
    %923 = vmatpush1.msra.mxu0 0.0
    %924 = vmatprep.subr.mxu0 0.0
    %925 = vmatpush1.msra.mxu0 0.0
    %926 = vmatprep.subr.mxu0 0.0
    %927 = vmatpush1.msra.mxu0 0.0
    %928 = vmatprep.subr.mxu0 0.0
    %929 = vmatpush1.msra.mxu0 0.0
    %930 = vmatprep.mubr.f32.mxu0 0.0
    %v931 = vand.u32 %v694, 4294901760
    %932 = vmatmul.mubr.f32.gmra.mrb[0].mxu0 %v931
    %v933 = vpop.f32.mrb[0].mxu0
    %v934 = vadd.f32 %v783, %v933
    %v935 = vpop.f32.mrb[0].mxu0
    %936 = vdwg.mxu0
    %937 = vmatprep.subr.mxu0 0.0
    %v938 = vand.u32 %v85, 4294901760
    %v939 = vsub.f32 %v85, %v938
    %940 = vmatpush1.msra.mxu0 %v939
    %941 = vmatprep.subr.mxu0 0.0
    %v942 = vand.u32 %v86, 4294901760
    %v943 = vsub.f32 %v86, %v942
    %944 = vmatpush1.msra.mxu0 %v943
    %945 = vmatprep.subr.mxu0 0.0
    %v946 = vand.u32 %v87, 4294901760
    %v947 = vsub.f32 %v87, %v946
    %948 = vmatpush1.msra.mxu0 %v947
    %949 = vmatprep.subr.mxu0 0.0
    %v950 = vand.u32 %v88, 4294901760
    %v951 = vsub.f32 %v88, %v950
    %952 = vmatpush1.msra.mxu0 %v951
    %953 = vmatprep.subr.mxu0 0.0
    %v954 = vand.u32 %v89, 4294901760
    %v955 = vsub.f32 %v89, %v954
    %956 = vmatpush1.msra.mxu0 %v955
    %957 = vmatprep.subr.mxu0 0.0
    %v958 = vand.u32 %v90, 4294901760
    %v959 = vsub.f32 %v90, %v958
    %960 = vmatpush1.msra.mxu0 %v959
    %961 = vmatprep.subr.mxu0 0.0
    %v962 = vand.u32 %v91, 4294901760
    %v963 = vsub.f32 %v91, %v962
    %964 = vmatpush1.msra.mxu0 %v963
    %965 = vmatprep.subr.mxu0 0.0
    %v966 = vand.u32 %v92, 4294901760
    %v967 = vsub.f32 %v92, %v966
    %968 = vmatpush1.msra.mxu0 %v967
    %969 = vmatprep.subr.mxu0 0.0
    %v970 = vand.u32 %v93, 4294901760
    %v971 = vsub.f32 %v93, %v970
    %972 = vmatpush1.msra.mxu0 %v971
    %973 = vmatprep.subr.mxu0 0.0
    %v974 = vand.u32 %v94, 4294901760
    %v975 = vsub.f32 %v94, %v974
    %976 = vmatpush1.msra.mxu0 %v975
    %977 = vmatprep.subr.mxu0 0.0
    %v978 = vand.u32 %v95, 4294901760
    %v979 = vsub.f32 %v95, %v978
    %980 = vmatpush1.msra.mxu0 %v979
    %981 = vmatprep.subr.mxu0 0.0
    %v982 = vand.u32 %v96, 4294901760
    %v983 = vsub.f32 %v96, %v982
    %984 = vmatpush1.msra.mxu0 %v983
    %985 = vmatprep.subr.mxu0 0.0
    %v986 = vand.u32 %v97, 4294901760
    %v987 = vsub.f32 %v97, %v986
    %988 = vmatpush1.msra.mxu0 %v987
    %989 = vmatprep.subr.mxu0 0.0
    %v990 = vand.u32 %v98, 4294901760
    %v991 = vsub.f32 %v98, %v990
    %992 = vmatpush1.msra.mxu0 %v991
    %993 = vmatprep.subr.mxu0 0.0
    %v994 = vand.u32 %v99, 4294901760
    %v995 = vsub.f32 %v99, %v994
    %996 = vmatpush1.msra.mxu0 %v995
    %997 = vmatprep.subr.mxu0 0.0
    %v998 = vand.u32 %v100, 4294901760
    %v999 = vsub.f32 %v100, %v998
    %1000 = vmatpush1.msra.mxu0 %v999
    %1001 = vmatprep.subr.mxu0 0.0
    %1002 = vmatpush1.msra.mxu0 0.0
    %1003 = vmatprep.subr.mxu0 0.0
    %1004 = vmatpush1.msra.mxu0 0.0
    %1005 = vmatprep.subr.mxu0 0.0
    %1006 = vmatpush1.msra.mxu0 0.0
    %1007 = vmatprep.subr.mxu0 0.0
    %1008 = vmatpush1.msra.mxu0 0.0
    %1009 = vmatprep.subr.mxu0 0.0
    %1010 = vmatpush1.msra.mxu0 0.0
    %1011 = vmatprep.subr.mxu0 0.0
    %1012 = vmatpush1.msra.mxu0 0.0
    %1013 = vmatprep.subr.mxu0 0.0
    %1014 = vmatpush1.msra.mxu0 0.0
    %1015 = vmatprep.subr.mxu0 0.0
    %1016 = vmatpush1.msra.mxu0 0.0
    %1017 = vmatprep.subr.mxu0 0.0
    %1018 = vmatpush1.msra.mxu0 0.0
    %1019 = vmatprep.subr.mxu0 0.0
    %1020 = vmatpush1.msra.mxu0 0.0
    %1021 = vmatprep.subr.mxu0 0.0
    %1022 = vmatpush1.msra.mxu0 0.0
    %1023 = vmatprep.subr.mxu0 0.0
    %1024 = vmatpush1.msra.mxu0 0.0
    %1025 = vmatprep.subr.mxu0 0.0
    %1026 = vmatpush1.msra.mxu0 0.0
    %1027 = vmatprep.subr.mxu0 0.0
    %1028 = vmatpush1.msra.mxu0 0.0
    %1029 = vmatprep.subr.mxu0 0.0
    %1030 = vmatpush1.msra.mxu0 0.0
    %1031 = vmatprep.subr.mxu0 0.0
    %1032 = vmatpush1.msra.mxu0 0.0
    %1033 = vmatprep.mubr.f32.mxu0 0.0
    %v1034 = vand.u32 %v694, 4294901760
    %v1035 = vsub.f32 %v694, %v1034
    %1036 = vmatmul.mubr.f32.gmra.mrb[0].mxu0 %v1035
    %v1037 = vpop.f32.mrb[0].mxu0
    %v1038 = vadd.f32 %v934, %v1037
    %v1039 = vpop.f32.mrb[0].mxu0
    %1040 = vdwg.mxu0
    %1041 = vmatprep.subr.mxu0 0.0
    %v1042 = vand.u32 %v85, 4294901760
    %1043 = vmatpush1.msra.mxu0 %v1042
    %1044 = vmatprep.subr.mxu0 0.0
    %v1045 = vand.u32 %v86, 4294901760
    %1046 = vmatpush1.msra.mxu0 %v1045
    %1047 = vmatprep.subr.mxu0 0.0
    %v1048 = vand.u32 %v87, 4294901760
    %1049 = vmatpush1.msra.mxu0 %v1048
    %1050 = vmatprep.subr.mxu0 0.0
    %v1051 = vand.u32 %v88, 4294901760
    %1052 = vmatpush1.msra.mxu0 %v1051
    %1053 = vmatprep.subr.mxu0 0.0
    %v1054 = vand.u32 %v89, 4294901760
    %1055 = vmatpush1.msra.mxu0 %v1054
    %1056 = vmatprep.subr.mxu0 0.0
    %v1057 = vand.u32 %v90, 4294901760
    %1058 = vmatpush1.msra.mxu0 %v1057
    %1059 = vmatprep.subr.mxu0 0.0
    %v1060 = vand.u32 %v91, 4294901760
    %1061 = vmatpush1.msra.mxu0 %v1060
    %1062 = vmatprep.subr.mxu0 0.0
    %v1063 = vand.u32 %v92, 4294901760
    %1064 = vmatpush1.msra.mxu0 %v1063
    %1065 = vmatprep.subr.mxu0 0.0
    %v1066 = vand.u32 %v93, 4294901760
    %1067 = vmatpush1.msra.mxu0 %v1066
    %1068 = vmatprep.subr.mxu0 0.0
    %v1069 = vand.u32 %v94, 4294901760
    %1070 = vmatpush1.msra.mxu0 %v1069
    %1071 = vmatprep.subr.mxu0 0.0
    %v1072 = vand.u32 %v95, 4294901760
    %1073 = vmatpush1.msra.mxu0 %v1072
    %1074 = vmatprep.subr.mxu0 0.0
    %v1075 = vand.u32 %v96, 4294901760
    %1076 = vmatpush1.msra.mxu0 %v1075
    %1077 = vmatprep.subr.mxu0 0.0
    %v1078 = vand.u32 %v97, 4294901760
    %1079 = vmatpush1.msra.mxu0 %v1078
    %1080 = vmatprep.subr.mxu0 0.0
    %v1081 = vand.u32 %v98, 4294901760
    %1082 = vmatpush1.msra.mxu0 %v1081
    %1083 = vmatprep.subr.mxu0 0.0
    %v1084 = vand.u32 %v99, 4294901760
    %1085 = vmatpush1.msra.mxu0 %v1084
    %1086 = vmatprep.subr.mxu0 0.0
    %v1087 = vand.u32 %v100, 4294901760
    %1088 = vmatpush1.msra.mxu0 %v1087
    %1089 = vmatprep.subr.mxu0 0.0
    %1090 = vmatpush1.msra.mxu0 0.0
    %1091 = vmatprep.subr.mxu0 0.0
    %1092 = vmatpush1.msra.mxu0 0.0
    %1093 = vmatprep.subr.mxu0 0.0
    %1094 = vmatpush1.msra.mxu0 0.0
    %1095 = vmatprep.subr.mxu0 0.0
    %1096 = vmatpush1.msra.mxu0 0.0
    %1097 = vmatprep.subr.mxu0 0.0
    %1098 = vmatpush1.msra.mxu0 0.0
    %1099 = vmatprep.subr.mxu0 0.0
    %1100 = vmatpush1.msra.mxu0 0.0
    %1101 = vmatprep.subr.mxu0 0.0
    %1102 = vmatpush1.msra.mxu0 0.0
    %1103 = vmatprep.subr.mxu0 0.0
    %1104 = vmatpush1.msra.mxu0 0.0
    %1105 = vmatprep.subr.mxu0 0.0
    %1106 = vmatpush1.msra.mxu0 0.0
    %1107 = vmatprep.subr.mxu0 0.0
    %1108 = vmatpush1.msra.mxu0 0.0
    %1109 = vmatprep.subr.mxu0 0.0
    %1110 = vmatpush1.msra.mxu0 0.0
    %1111 = vmatprep.subr.mxu0 0.0
    %1112 = vmatpush1.msra.mxu0 0.0
    %1113 = vmatprep.subr.mxu0 0.0
    %1114 = vmatpush1.msra.mxu0 0.0
    %1115 = vmatprep.subr.mxu0 0.0
    %1116 = vmatpush1.msra.mxu0 0.0
    %1117 = vmatprep.subr.mxu0 0.0
    %1118 = vmatpush1.msra.mxu0 0.0
    %1119 = vmatprep.subr.mxu0 0.0
    %1120 = vmatpush1.msra.mxu0 0.0
    %1121 = vmatprep.mubr.f32.mxu0 0.0
    %v1122 = vand.u32 %v694, 4294901760
    %v1123 = vsub.f32 %v694, %v1122
    %v1124 = vand.u32 %v1123, 4294901760
    %1125 = vmatmul.mubr.f32.gmra.mrb[0].mxu0 %v1124
    %v1126 = vpop.f32.mrb[0].mxu0
    %v1127 = vadd.f32 %v1038, %v1126
    %v1128 = vpop.f32.mrb[0].mxu0
    %1129 = vdwg.mxu0
    %1130 = vmatprep.subr.mxu0 0.0
    %v1131 = vand.u32 %v85, 4294901760
    %v1132 = vsub.f32 %v85, %v1131
    %v1133 = vand.u32 %v1132, 4294901760
    %1134 = vmatpush1.msra.mxu0 %v1133
    %1135 = vmatprep.subr.mxu0 0.0
    %v1136 = vand.u32 %v86, 4294901760
    %v1137 = vsub.f32 %v86, %v1136
    %v1138 = vand.u32 %v1137, 4294901760
    %1139 = vmatpush1.msra.mxu0 %v1138
    %1140 = vmatprep.subr.mxu0 0.0
    %v1141 = vand.u32 %v87, 4294901760
    %v1142 = vsub.f32 %v87, %v1141
    %v1143 = vand.u32 %v1142, 4294901760
    %1144 = vmatpush1.msra.mxu0 %v1143
    %1145 = vmatprep.subr.mxu0 0.0
    %v1146 = vand.u32 %v88, 4294901760
    %v1147 = vsub.f32 %v88, %v1146
    %v1148 = vand.u32 %v1147, 4294901760
    %1149 = vmatpush1.msra.mxu0 %v1148
    %1150 = vmatprep.subr.mxu0 0.0
    %v1151 = vand.u32 %v89, 4294901760
    %v1152 = vsub.f32 %v89, %v1151
    %v1153 = vand.u32 %v1152, 4294901760
    %1154 = vmatpush1.msra.mxu0 %v1153
    %1155 = vmatprep.subr.mxu0 0.0
    %v1156 = vand.u32 %v90, 4294901760
    %v1157 = vsub.f32 %v90, %v1156
    %v1158 = vand.u32 %v1157, 4294901760
    %1159 = vmatpush1.msra.mxu0 %v1158
    %1160 = vmatprep.subr.mxu0 0.0
    %v1161 = vand.u32 %v91, 4294901760
    %v1162 = vsub.f32 %v91, %v1161
    %v1163 = vand.u32 %v1162, 4294901760
    %1164 = vmatpush1.msra.mxu0 %v1163
    %1165 = vmatprep.subr.mxu0 0.0
    %v1166 = vand.u32 %v92, 4294901760
    %v1167 = vsub.f32 %v92, %v1166
    %v1168 = vand.u32 %v1167, 4294901760
    %1169 = vmatpush1.msra.mxu0 %v1168
    %1170 = vmatprep.subr.mxu0 0.0
    %v1171 = vand.u32 %v93, 4294901760
    %v1172 = vsub.f32 %v93, %v1171
    %v1173 = vand.u32 %v1172, 4294901760
    %1174 = vmatpush1.msra.mxu0 %v1173
    %1175 = vmatprep.subr.mxu0 0.0
    %v1176 = vand.u32 %v94, 4294901760
    %v1177 = vsub.f32 %v94, %v1176
    %v1178 = vand.u32 %v1177, 4294901760
    %1179 = vmatpush1.msra.mxu0 %v1178
    %1180 = vmatprep.subr.mxu0 0.0
    %v1181 = vand.u32 %v95, 4294901760
    %v1182 = vsub.f32 %v95, %v1181
    %v1183 = vand.u32 %v1182, 4294901760
    %1184 = vmatpush1.msra.mxu0 %v1183
    %1185 = vmatprep.subr.mxu0 0.0
    %v1186 = vand.u32 %v96, 4294901760
    %v1187 = vsub.f32 %v96, %v1186
    %v1188 = vand.u32 %v1187, 4294901760
    %1189 = vmatpush1.msra.mxu0 %v1188
    %1190 = vmatprep.subr.mxu0 0.0
    %v1191 = vand.u32 %v97, 4294901760
    %v1192 = vsub.f32 %v97, %v1191
    %v1193 = vand.u32 %v1192, 4294901760
    %1194 = vmatpush1.msra.mxu0 %v1193
    %1195 = vmatprep.subr.mxu0 0.0
    %v1196 = vand.u32 %v98, 4294901760
    %v1197 = vsub.f32 %v98, %v1196
    %v1198 = vand.u32 %v1197, 4294901760
    %1199 = vmatpush1.msra.mxu0 %v1198
    %1200 = vmatprep.subr.mxu0 0.0
    %v1201 = vand.u32 %v99, 4294901760
    %v1202 = vsub.f32 %v99, %v1201
    %v1203 = vand.u32 %v1202, 4294901760
    %1204 = vmatpush1.msra.mxu0 %v1203
    %1205 = vmatprep.subr.mxu0 0.0
    %v1206 = vand.u32 %v100, 4294901760
    %v1207 = vsub.f32 %v100, %v1206
    %v1208 = vand.u32 %v1207, 4294901760
    %1209 = vmatpush1.msra.mxu0 %v1208
    %1210 = vmatprep.subr.mxu0 0.0
    %1211 = vmatpush1.msra.mxu0 0.0
    %1212 = vmatprep.subr.mxu0 0.0
    %1213 = vmatpush1.msra.mxu0 0.0
    %1214 = vmatprep.subr.mxu0 0.0
    %1215 = vmatpush1.msra.mxu0 0.0
    %1216 = vmatprep.subr.mxu0 0.0
    %1217 = vmatpush1.msra.mxu0 0.0
    %1218 = vmatprep.subr.mxu0 0.0
    %1219 = vmatpush1.msra.mxu0 0.0
    %1220 = vmatprep.subr.mxu0 0.0
    %1221 = vmatpush1.msra.mxu0 0.0
    %1222 = vmatprep.subr.mxu0 0.0
    %1223 = vmatpush1.msra.mxu0 0.0
    %1224 = vmatprep.subr.mxu0 0.0
    %1225 = vmatpush1.msra.mxu0 0.0
    %1226 = vmatprep.subr.mxu0 0.0
    %1227 = vmatpush1.msra.mxu0 0.0
    %1228 = vmatprep.subr.mxu0 0.0
    %1229 = vmatpush1.msra.mxu0 0.0
    %1230 = vmatprep.subr.mxu0 0.0
    %1231 = vmatpush1.msra.mxu0 0.0
    %1232 = vmatprep.subr.mxu0 0.0
    %1233 = vmatpush1.msra.mxu0 0.0
    %1234 = vmatprep.subr.mxu0 0.0
    %1235 = vmatpush1.msra.mxu0 0.0
    %1236 = vmatprep.subr.mxu0 0.0
    %1237 = vmatpush1.msra.mxu0 0.0
    %1238 = vmatprep.subr.mxu0 0.0
    %1239 = vmatpush1.msra.mxu0 0.0
    %1240 = vmatprep.subr.mxu0 0.0
    %1241 = vmatpush1.msra.mxu0 0.0
    %1242 = vmatprep.mubr.f32.mxu0 0.0
    %v1243 = vand.u32 %v694, 4294901760
    %1244 = vmatmul.mubr.f32.gmra.mrb[0].mxu0 %v1243
    %v1245 = vpop.f32.mrb[0].mxu0
    %v1246 = vadd.f32 %v1127, %v1245
    %v1247 = vpop.f32.mrb[0].mxu0
    %1248 = vdwg.mxu0
    %1249 = vmatprep.subr.mxu0 0.0
    %v1250 = vand.u32 %v85, 4294901760
    %1251 = vmatpush1.msra.mxu0 %v1250
    %1252 = vmatprep.subr.mxu0 0.0
    %v1253 = vand.u32 %v86, 4294901760
    %1254 = vmatpush1.msra.mxu0 %v1253
    %1255 = vmatprep.subr.mxu0 0.0
    %v1256 = vand.u32 %v87, 4294901760
    %1257 = vmatpush1.msra.mxu0 %v1256
    %1258 = vmatprep.subr.mxu0 0.0
    %v1259 = vand.u32 %v88, 4294901760
    %1260 = vmatpush1.msra.mxu0 %v1259
    %1261 = vmatprep.subr.mxu0 0.0
    %v1262 = vand.u32 %v89, 4294901760
    %1263 = vmatpush1.msra.mxu0 %v1262
    %1264 = vmatprep.subr.mxu0 0.0
    %v1265 = vand.u32 %v90, 4294901760
    %1266 = vmatpush1.msra.mxu0 %v1265
    %1267 = vmatprep.subr.mxu0 0.0
    %v1268 = vand.u32 %v91, 4294901760
    %1269 = vmatpush1.msra.mxu0 %v1268
    %1270 = vmatprep.subr.mxu0 0.0
    %v1271 = vand.u32 %v92, 4294901760
    %1272 = vmatpush1.msra.mxu0 %v1271
    %1273 = vmatprep.subr.mxu0 0.0
    %v1274 = vand.u32 %v93, 4294901760
    %1275 = vmatpush1.msra.mxu0 %v1274
    %1276 = vmatprep.subr.mxu0 0.0
    %v1277 = vand.u32 %v94, 4294901760
    %1278 = vmatpush1.msra.mxu0 %v1277
    %1279 = vmatprep.subr.mxu0 0.0
    %v1280 = vand.u32 %v95, 4294901760
    %1281 = vmatpush1.msra.mxu0 %v1280
    %1282 = vmatprep.subr.mxu0 0.0
    %v1283 = vand.u32 %v96, 4294901760
    %1284 = vmatpush1.msra.mxu0 %v1283
    %1285 = vmatprep.subr.mxu0 0.0
    %v1286 = vand.u32 %v97, 4294901760
    %1287 = vmatpush1.msra.mxu0 %v1286
    %1288 = vmatprep.subr.mxu0 0.0
    %v1289 = vand.u32 %v98, 4294901760
    %1290 = vmatpush1.msra.mxu0 %v1289
    %1291 = vmatprep.subr.mxu0 0.0
    %v1292 = vand.u32 %v99, 4294901760
    %1293 = vmatpush1.msra.mxu0 %v1292
    %1294 = vmatprep.subr.mxu0 0.0
    %v1295 = vand.u32 %v100, 4294901760
    %1296 = vmatpush1.msra.mxu0 %v1295
    %1297 = vmatprep.subr.mxu0 0.0
    %1298 = vmatpush1.msra.mxu0 0.0
    %1299 = vmatprep.subr.mxu0 0.0
    %1300 = vmatpush1.msra.mxu0 0.0
    %1301 = vmatprep.subr.mxu0 0.0
    %1302 = vmatpush1.msra.mxu0 0.0
    %1303 = vmatprep.subr.mxu0 0.0
    %1304 = vmatpush1.msra.mxu0 0.0
    %1305 = vmatprep.subr.mxu0 0.0
    %1306 = vmatpush1.msra.mxu0 0.0
    %1307 = vmatprep.subr.mxu0 0.0
    %1308 = vmatpush1.msra.mxu0 0.0
    %1309 = vmatprep.subr.mxu0 0.0
    %1310 = vmatpush1.msra.mxu0 0.0
    %1311 = vmatprep.subr.mxu0 0.0
    %1312 = vmatpush1.msra.mxu0 0.0
    %1313 = vmatprep.subr.mxu0 0.0
    %1314 = vmatpush1.msra.mxu0 0.0
    %1315 = vmatprep.subr.mxu0 0.0
    %1316 = vmatpush1.msra.mxu0 0.0
    %1317 = vmatprep.subr.mxu0 0.0
    %1318 = vmatpush1.msra.mxu0 0.0
    %1319 = vmatprep.subr.mxu0 0.0
    %1320 = vmatpush1.msra.mxu0 0.0
    %1321 = vmatprep.subr.mxu0 0.0
    %1322 = vmatpush1.msra.mxu0 0.0
    %1323 = vmatprep.subr.mxu0 0.0
    %1324 = vmatpush1.msra.mxu0 0.0
    %1325 = vmatprep.subr.mxu0 0.0
    %1326 = vmatpush1.msra.mxu0 0.0
    %1327 = vmatprep.subr.mxu0 0.0
    %1328 = vmatpush1.msra.mxu0 0.0
    %1329 = vmatprep.mubr.f32.mxu0 0.0
    %v1330 = vand.u32 %v694, 4294901760
    %1331 = vmatmul.mubr.f32.gmra.mrb[0].mxu0 %v1330
    %v1332 = vpop.f32.mrb[0].mxu0
    %v1333 = vadd.f32 %v1246, %v1332
    %v1334 = vpop.f32.mrb[0].mxu0
    %1335 = vdwg.mxu0
    %v1336 = vsub.f32 %v694, %v1333
    %v1337 = vmul.f32 %v1336, %v1336
    %1338 = vmatprep.subr.mxu0 0.0
    %v1339 = vand.u32 %v85, 4294901760
    %1340 = vmatpush1.msra.mxu0 %v1339
    %1341 = vmatprep.subr.mxu0 0.0
    %v1342 = vand.u32 %v86, 4294901760
    %1343 = vmatpush1.msra.mxu0 %v1342
    %1344 = vmatprep.subr.mxu0 0.0
    %v1345 = vand.u32 %v87, 4294901760
    %1346 = vmatpush1.msra.mxu0 %v1345
    %1347 = vmatprep.subr.mxu0 0.0
    %v1348 = vand.u32 %v88, 4294901760
    %1349 = vmatpush1.msra.mxu0 %v1348
    %1350 = vmatprep.subr.mxu0 0.0
    %v1351 = vand.u32 %v89, 4294901760
    %1352 = vmatpush1.msra.mxu0 %v1351
    %1353 = vmatprep.subr.mxu0 0.0
    %v1354 = vand.u32 %v90, 4294901760
    %1355 = vmatpush1.msra.mxu0 %v1354
    %1356 = vmatprep.subr.mxu0 0.0
    %v1357 = vand.u32 %v91, 4294901760
    %1358 = vmatpush1.msra.mxu0 %v1357
    %1359 = vmatprep.subr.mxu0 0.0
    %v1360 = vand.u32 %v92, 4294901760
    %1361 = vmatpush1.msra.mxu0 %v1360
    %1362 = vmatprep.subr.mxu0 0.0
    %v1363 = vand.u32 %v93, 4294901760
    %1364 = vmatpush1.msra.mxu0 %v1363
    %1365 = vmatprep.subr.mxu0 0.0
    %v1366 = vand.u32 %v94, 4294901760
    %1367 = vmatpush1.msra.mxu0 %v1366
    %1368 = vmatprep.subr.mxu0 0.0
    %v1369 = vand.u32 %v95, 4294901760
    %1370 = vmatpush1.msra.mxu0 %v1369
    %1371 = vmatprep.subr.mxu0 0.0
    %v1372 = vand.u32 %v96, 4294901760
    %1373 = vmatpush1.msra.mxu0 %v1372
    %1374 = vmatprep.subr.mxu0 0.0
    %v1375 = vand.u32 %v97, 4294901760
    %1376 = vmatpush1.msra.mxu0 %v1375
    %1377 = vmatprep.subr.mxu0 0.0
    %v1378 = vand.u32 %v98, 4294901760
    %1379 = vmatpush1.msra.mxu0 %v1378
    %1380 = vmatprep.subr.mxu0 0.0
    %v1381 = vand.u32 %v99, 4294901760
    %1382 = vmatpush1.msra.mxu0 %v1381
    %1383 = vmatprep.subr.mxu0 0.0
    %v1384 = vand.u32 %v100, 4294901760
    %1385 = vmatpush1.msra.mxu0 %v1384
    %1386 = vmatprep.subr.mxu0 0.0
    %1387 = vmatpush1.msra.mxu0 0.0
    %1388 = vmatprep.subr.mxu0 0.0
    %1389 = vmatpush1.msra.mxu0 0.0
    %1390 = vmatprep.subr.mxu0 0.0
    %1391 = vmatpush1.msra.mxu0 0.0
    %1392 = vmatprep.subr.mxu0 0.0
    %1393 = vmatpush1.msra.mxu0 0.0
    %1394 = vmatprep.subr.mxu0 0.0
    %1395 = vmatpush1.msra.mxu0 0.0
    %1396 = vmatprep.subr.mxu0 0.0
    %1397 = vmatpush1.msra.mxu0 0.0
    %1398 = vmatprep.subr.mxu0 0.0
    %1399 = vmatpush1.msra.mxu0 0.0
    %1400 = vmatprep.subr.mxu0 0.0
    %1401 = vmatpush1.msra.mxu0 0.0
    %1402 = vmatprep.subr.mxu0 0.0
    %1403 = vmatpush1.msra.mxu0 0.0
    %1404 = vmatprep.subr.mxu0 0.0
    %1405 = vmatpush1.msra.mxu0 0.0
    %1406 = vmatprep.subr.mxu0 0.0
    %1407 = vmatpush1.msra.mxu0 0.0
    %1408 = vmatprep.subr.mxu0 0.0
    %1409 = vmatpush1.msra.mxu0 0.0
    %1410 = vmatprep.subr.mxu0 0.0
    %1411 = vmatpush1.msra.mxu0 0.0
    %1412 = vmatprep.subr.mxu0 0.0
    %1413 = vmatpush1.msra.mxu0 0.0
    %1414 = vmatprep.subr.mxu0 0.0
    %1415 = vmatpush1.msra.mxu0 0.0
    %1416 = vmatprep.subr.mxu0 0.0
    %1417 = vmatpush1.msra.mxu0 0.0
    %1418 = vmatprep.mubr.f32.mxu0 0.0
    %v1419 = vand.u32 %v1337, 4294901760
    %v1420 = vsub.f32 %v1337, %v1419
    %v1421 = vand.u32 %v1420, 4294901760
    %v1422 = vsub.f32 %v1420, %v1421
    %v1423 = vand.u32 %v1422, 4294901760
    %1424 = vmatmul.mubr.f32.gmra.mrb[0].mxu0 %v1423
    %v1425 = vpop.f32.mrb[0].mxu0
    %v1426 = vadd.f32 1e-05, %v1425
    %v1427 = vpop.f32.mrb[0].mxu0
    %1428 = vdwg.mxu0
    %1429 = vmatprep.subr.mxu0 0.0
    %v1430 = vand.u32 %v85, 4294901760
    %v1431 = vsub.f32 %v85, %v1430
    %v1432 = vand.u32 %v1431, 4294901760
    %v1433 = vsub.f32 %v1431, %v1432
    %v1434 = vand.u32 %v1433, 4294901760
    %1435 = vmatpush1.msra.mxu0 %v1434
    %1436 = vmatprep.subr.mxu0 0.0
    %v1437 = vand.u32 %v86, 4294901760
    %v1438 = vsub.f32 %v86, %v1437
    %v1439 = vand.u32 %v1438, 4294901760
    %v1440 = vsub.f32 %v1438, %v1439
    %v1441 = vand.u32 %v1440, 4294901760
    %1442 = vmatpush1.msra.mxu0 %v1441
    %1443 = vmatprep.subr.mxu0 0.0
    %v1444 = vand.u32 %v87, 4294901760
    %v1445 = vsub.f32 %v87, %v1444
    %v1446 = vand.u32 %v1445, 4294901760
    %v1447 = vsub.f32 %v1445, %v1446
    %v1448 = vand.u32 %v1447, 4294901760
    %1449 = vmatpush1.msra.mxu0 %v1448
    %1450 = vmatprep.subr.mxu0 0.0
    %v1451 = vand.u32 %v88, 4294901760
    %v1452 = vsub.f32 %v88, %v1451
    %v1453 = vand.u32 %v1452, 4294901760
    %v1454 = vsub.f32 %v1452, %v1453
    %v1455 = vand.u32 %v1454, 4294901760
    %1456 = vmatpush1.msra.mxu0 %v1455
    %1457 = vmatprep.subr.mxu0 0.0
    %v1458 = vand.u32 %v89, 4294901760
    %v1459 = vsub.f32 %v89, %v1458
    %v1460 = vand.u32 %v1459, 4294901760
    %v1461 = vsub.f32 %v1459, %v1460
    %v1462 = vand.u32 %v1461, 4294901760
    %1463 = vmatpush1.msra.mxu0 %v1462
    %1464 = vmatprep.subr.mxu0 0.0
    %v1465 = vand.u32 %v90, 4294901760
    %v1466 = vsub.f32 %v90, %v1465
    %v1467 = vand.u32 %v1466, 4294901760
    %v1468 = vsub.f32 %v1466, %v1467
    %v1469 = vand.u32 %v1468, 4294901760
    %1470 = vmatpush1.msra.mxu0 %v1469
    %1471 = vmatprep.subr.mxu0 0.0
    %v1472 = vand.u32 %v91, 4294901760
    %v1473 = vsub.f32 %v91, %v1472
    %v1474 = vand.u32 %v1473, 4294901760
    %v1475 = vsub.f32 %v1473, %v1474
    %v1476 = vand.u32 %v1475, 4294901760
    %1477 = vmatpush1.msra.mxu0 %v1476
    %1478 = vmatprep.subr.mxu0 0.0
    %v1479 = vand.u32 %v92, 4294901760
    %v1480 = vsub.f32 %v92, %v1479
    %v1481 = vand.u32 %v1480, 4294901760
    %v1482 = vsub.f32 %v1480, %v1481
    %v1483 = vand.u32 %v1482, 4294901760
    %1484 = vmatpush1.msra.mxu0 %v1483
    %1485 = vmatprep.subr.mxu0 0.0
    %v1486 = vand.u32 %v93, 4294901760
    %v1487 = vsub.f32 %v93, %v1486
    %v1488 = vand.u32 %v1487, 4294901760
    %v1489 = vsub.f32 %v1487, %v1488
    %v1490 = vand.u32 %v1489, 4294901760
    %1491 = vmatpush1.msra.mxu0 %v1490
    %1492 = vmatprep.subr.mxu0 0.0
    %v1493 = vand.u32 %v94, 4294901760
    %v1494 = vsub.f32 %v94, %v1493
    %v1495 = vand.u32 %v1494, 4294901760
    %v1496 = vsub.f32 %v1494, %v1495
    %v1497 = vand.u32 %v1496, 4294901760
    %1498 = vmatpush1.msra.mxu0 %v1497
    %1499 = vmatprep.subr.mxu0 0.0
    %v1500 = vand.u32 %v95, 4294901760
    %v1501 = vsub.f32 %v95, %v1500
    %v1502 = vand.u32 %v1501, 4294901760
    %v1503 = vsub.f32 %v1501, %v1502
    %v1504 = vand.u32 %v1503, 4294901760
    %1505 = vmatpush1.msra.mxu0 %v1504
    %1506 = vmatprep.subr.mxu0 0.0
    %v1507 = vand.u32 %v96, 4294901760
    %v1508 = vsub.f32 %v96, %v1507
    %v1509 = vand.u32 %v1508, 4294901760
    %v1510 = vsub.f32 %v1508, %v1509
    %v1511 = vand.u32 %v1510, 4294901760
    %1512 = vmatpush1.msra.mxu0 %v1511
    %1513 = vmatprep.subr.mxu0 0.0
    %v1514 = vand.u32 %v97, 4294901760
    %v1515 = vsub.f32 %v97, %v1514
    %v1516 = vand.u32 %v1515, 4294901760
    %v1517 = vsub.f32 %v1515, %v1516
    %v1518 = vand.u32 %v1517, 4294901760
    %1519 = vmatpush1.msra.mxu0 %v1518
    %1520 = vmatprep.subr.mxu0 0.0
    %v1521 = vand.u32 %v98, 4294901760
    %v1522 = vsub.f32 %v98, %v1521
    %v1523 = vand.u32 %v1522, 4294901760
    %v1524 = vsub.f32 %v1522, %v1523
    %v1525 = vand.u32 %v1524, 4294901760
    %1526 = vmatpush1.msra.mxu0 %v1525
    %1527 = vmatprep.subr.mxu0 0.0
    %v1528 = vand.u32 %v99, 4294901760
    %v1529 = vsub.f32 %v99, %v1528
    %v1530 = vand.u32 %v1529, 4294901760
    %v1531 = vsub.f32 %v1529, %v1530
    %v1532 = vand.u32 %v1531, 4294901760
    %1533 = vmatpush1.msra.mxu0 %v1532
    %1534 = vmatprep.subr.mxu0 0.0
    %v1535 = vand.u32 %v100, 4294901760
    %v1536 = vsub.f32 %v100, %v1535
    %v1537 = vand.u32 %v1536, 4294901760
    %v1538 = vsub.f32 %v1536, %v1537
    %v1539 = vand.u32 %v1538, 4294901760
    %1540 = vmatpush1.msra.mxu0 %v1539
    %1541 = vmatprep.subr.mxu0 0.0
    %1542 = vmatpush1.msra.mxu0 0.0
    %1543 = vmatprep.subr.mxu0 0.0
    %1544 = vmatpush1.msra.mxu0 0.0
    %1545 = vmatprep.subr.mxu0 0.0
    %1546 = vmatpush1.msra.mxu0 0.0
    %1547 = vmatprep.subr.mxu0 0.0
    %1548 = vmatpush1.msra.mxu0 0.0
    %1549 = vmatprep.subr.mxu0 0.0
    %1550 = vmatpush1.msra.mxu0 0.0
    %1551 = vmatprep.subr.mxu0 0.0
    %1552 = vmatpush1.msra.mxu0 0.0
    %1553 = vmatprep.subr.mxu0 0.0
    %1554 = vmatpush1.msra.mxu0 0.0
    %1555 = vmatprep.subr.mxu0 0.0
    %1556 = vmatpush1.msra.mxu0 0.0
    %1557 = vmatprep.subr.mxu0 0.0
    %1558 = vmatpush1.msra.mxu0 0.0
    %1559 = vmatprep.subr.mxu0 0.0
    %1560 = vmatpush1.msra.mxu0 0.0
    %1561 = vmatprep.subr.mxu0 0.0
    %1562 = vmatpush1.msra.mxu0 0.0
    %1563 = vmatprep.subr.mxu0 0.0
    %1564 = vmatpush1.msra.mxu0 0.0
    %1565 = vmatprep.subr.mxu0 0.0
    %1566 = vmatpush1.msra.mxu0 0.0
    %1567 = vmatprep.subr.mxu0 0.0
    %1568 = vmatpush1.msra.mxu0 0.0
    %1569 = vmatprep.subr.mxu0 0.0
    %1570 = vmatpush1.msra.mxu0 0.0
    %1571 = vmatprep.subr.mxu0 0.0
    %1572 = vmatpush1.msra.mxu0 0.0
    %1573 = vmatprep.mubr.f32.mxu0 0.0
    %v1574 = vand.u32 %v1337, 4294901760
    %1575 = vmatmul.mubr.f32.gmra.mrb[0].mxu0 %v1574
    %v1576 = vpop.f32.mrb[0].mxu0
    %v1577 = vadd.f32 %v1426, %v1576
    %v1578 = vpop.f32.mrb[0].mxu0
    %1579 = vdwg.mxu0
    %1580 = vmatprep.subr.mxu0 0.0
    %v1581 = vand.u32 %v85, 4294901760
    %v1582 = vsub.f32 %v85, %v1581
    %1583 = vmatpush1.msra.mxu0 %v1582
    %1584 = vmatprep.subr.mxu0 0.0
    %v1585 = vand.u32 %v86, 4294901760
    %v1586 = vsub.f32 %v86, %v1585
    %1587 = vmatpush1.msra.mxu0 %v1586
    %1588 = vmatprep.subr.mxu0 0.0
    %v1589 = vand.u32 %v87, 4294901760
    %v1590 = vsub.f32 %v87, %v1589
    %1591 = vmatpush1.msra.mxu0 %v1590
    %1592 = vmatprep.subr.mxu0 0.0
    %v1593 = vand.u32 %v88, 4294901760
    %v1594 = vsub.f32 %v88, %v1593
    %1595 = vmatpush1.msra.mxu0 %v1594
    %1596 = vmatprep.subr.mxu0 0.0
    %v1597 = vand.u32 %v89, 4294901760
    %v1598 = vsub.f32 %v89, %v1597
    %1599 = vmatpush1.msra.mxu0 %v1598
    %1600 = vmatprep.subr.mxu0 0.0
    %v1601 = vand.u32 %v90, 4294901760
    %v1602 = vsub.f32 %v90, %v1601
    %1603 = vmatpush1.msra.mxu0 %v1602
    %1604 = vmatprep.subr.mxu0 0.0
    %v1605 = vand.u32 %v91, 4294901760
    %v1606 = vsub.f32 %v91, %v1605
    %1607 = vmatpush1.msra.mxu0 %v1606
    %1608 = vmatprep.subr.mxu0 0.0
    %v1609 = vand.u32 %v92, 4294901760
    %v1610 = vsub.f32 %v92, %v1609
    %1611 = vmatpush1.msra.mxu0 %v1610
    %1612 = vmatprep.subr.mxu0 0.0
    %v1613 = vand.u32 %v93, 4294901760
    %v1614 = vsub.f32 %v93, %v1613
    %1615 = vmatpush1.msra.mxu0 %v1614
    %1616 = vmatprep.subr.mxu0 0.0
    %v1617 = vand.u32 %v94, 4294901760
    %v1618 = vsub.f32 %v94, %v1617
    %1619 = vmatpush1.msra.mxu0 %v1618
    %1620 = vmatprep.subr.mxu0 0.0
    %v1621 = vand.u32 %v95, 4294901760
    %v1622 = vsub.f32 %v95, %v1621
    %1623 = vmatpush1.msra.mxu0 %v1622
    %1624 = vmatprep.subr.mxu0 0.0
    %v1625 = vand.u32 %v96, 4294901760
    %v1626 = vsub.f32 %v96, %v1625
    %1627 = vmatpush1.msra.mxu0 %v1626
    %1628 = vmatprep.subr.mxu0 0.0
    %v1629 = vand.u32 %v97, 4294901760
    %v1630 = vsub.f32 %v97, %v1629
    %1631 = vmatpush1.msra.mxu0 %v1630
    %1632 = vmatprep.subr.mxu0 0.0
    %v1633 = vand.u32 %v98, 4294901760
    %v1634 = vsub.f32 %v98, %v1633
    %1635 = vmatpush1.msra.mxu0 %v1634
    %1636 = vmatprep.subr.mxu0 0.0
    %v1637 = vand.u32 %v99, 4294901760
    %v1638 = vsub.f32 %v99, %v1637
    %1639 = vmatpush1.msra.mxu0 %v1638
    %1640 = vmatprep.subr.mxu0 0.0
    %v1641 = vand.u32 %v100, 4294901760
    %v1642 = vsub.f32 %v100, %v1641
    %1643 = vmatpush1.msra.mxu0 %v1642
    %1644 = vmatprep.subr.mxu0 0.0
    %1645 = vmatpush1.msra.mxu0 0.0
    %1646 = vmatprep.subr.mxu0 0.0
    %1647 = vmatpush1.msra.mxu0 0.0
    %1648 = vmatprep.subr.mxu0 0.0
    %1649 = vmatpush1.msra.mxu0 0.0
    %1650 = vmatprep.subr.mxu0 0.0
    %1651 = vmatpush1.msra.mxu0 0.0
    %1652 = vmatprep.subr.mxu0 0.0
    %1653 = vmatpush1.msra.mxu0 0.0
    %1654 = vmatprep.subr.mxu0 0.0
    %1655 = vmatpush1.msra.mxu0 0.0
    %1656 = vmatprep.subr.mxu0 0.0
    %1657 = vmatpush1.msra.mxu0 0.0
    %1658 = vmatprep.subr.mxu0 0.0
    %1659 = vmatpush1.msra.mxu0 0.0
    %1660 = vmatprep.subr.mxu0 0.0
    %1661 = vmatpush1.msra.mxu0 0.0
    %1662 = vmatprep.subr.mxu0 0.0
    %1663 = vmatpush1.msra.mxu0 0.0
    %1664 = vmatprep.subr.mxu0 0.0
    %1665 = vmatpush1.msra.mxu0 0.0
    %1666 = vmatprep.subr.mxu0 0.0
    %1667 = vmatpush1.msra.mxu0 0.0
    %1668 = vmatprep.subr.mxu0 0.0
    %1669 = vmatpush1.msra.mxu0 0.0
    %1670 = vmatprep.subr.mxu0 0.0
    %1671 = vmatpush1.msra.mxu0 0.0
    %1672 = vmatprep.subr.mxu0 0.0
    %1673 = vmatpush1.msra.mxu0 0.0
    %1674 = vmatprep.subr.mxu0 0.0
    %1675 = vmatpush1.msra.mxu0 0.0
    %1676 = vmatprep.mubr.f32.mxu0 0.0
    %v1677 = vand.u32 %v1337, 4294901760
    %v1678 = vsub.f32 %v1337, %v1677
    %1679 = vmatmul.mubr.f32.gmra.mrb[0].mxu0 %v1678
    %v1680 = vpop.f32.mrb[0].mxu0
    %v1681 = vadd.f32 %v1577, %v1680
    %v1682 = vpop.f32.mrb[0].mxu0
    %1683 = vdwg.mxu0
    %1684 = vmatprep.subr.mxu0 0.0
    %v1685 = vand.u32 %v85, 4294901760
    %1686 = vmatpush1.msra.mxu0 %v1685
    %1687 = vmatprep.subr.mxu0 0.0
    %v1688 = vand.u32 %v86, 4294901760
    %1689 = vmatpush1.msra.mxu0 %v1688
    %1690 = vmatprep.subr.mxu0 0.0
    %v1691 = vand.u32 %v87, 4294901760
    %1692 = vmatpush1.msra.mxu0 %v1691
    %1693 = vmatprep.subr.mxu0 0.0
    %v1694 = vand.u32 %v88, 4294901760
    %1695 = vmatpush1.msra.mxu0 %v1694
    %1696 = vmatprep.subr.mxu0 0.0
    %v1697 = vand.u32 %v89, 4294901760
    %1698 = vmatpush1.msra.mxu0 %v1697
    %1699 = vmatprep.subr.mxu0 0.0
    %v1700 = vand.u32 %v90, 4294901760
    %1701 = vmatpush1.msra.mxu0 %v1700
    %1702 = vmatprep.subr.mxu0 0.0
    %v1703 = vand.u32 %v91, 4294901760
    %1704 = vmatpush1.msra.mxu0 %v1703
    %1705 = vmatprep.subr.mxu0 0.0
    %v1706 = vand.u32 %v92, 4294901760
    %1707 = vmatpush1.msra.mxu0 %v1706
    %1708 = vmatprep.subr.mxu0 0.0
    %v1709 = vand.u32 %v93, 4294901760
    %1710 = vmatpush1.msra.mxu0 %v1709
    %1711 = vmatprep.subr.mxu0 0.0
    %v1712 = vand.u32 %v94, 4294901760
    %1713 = vmatpush1.msra.mxu0 %v1712
    %1714 = vmatprep.subr.mxu0 0.0
    %v1715 = vand.u32 %v95, 4294901760
    %1716 = vmatpush1.msra.mxu0 %v1715
    %1717 = vmatprep.subr.mxu0 0.0
    %v1718 = vand.u32 %v96, 4294901760
    %1719 = vmatpush1.msra.mxu0 %v1718
    %1720 = vmatprep.subr.mxu0 0.0
    %v1721 = vand.u32 %v97, 4294901760
    %1722 = vmatpush1.msra.mxu0 %v1721
    %1723 = vmatprep.subr.mxu0 0.0
    %v1724 = vand.u32 %v98, 4294901760
    %1725 = vmatpush1.msra.mxu0 %v1724
    %1726 = vmatprep.subr.mxu0 0.0
    %v1727 = vand.u32 %v99, 4294901760
    %1728 = vmatpush1.msra.mxu0 %v1727
    %1729 = vmatprep.subr.mxu0 0.0
    %v1730 = vand.u32 %v100, 4294901760
    %1731 = vmatpush1.msra.mxu0 %v1730
    %1732 = vmatprep.subr.mxu0 0.0
    %1733 = vmatpush1.msra.mxu0 0.0
    %1734 = vmatprep.subr.mxu0 0.0
    %1735 = vmatpush1.msra.mxu0 0.0
    %1736 = vmatprep.subr.mxu0 0.0
    %1737 = vmatpush1.msra.mxu0 0.0
    %1738 = vmatprep.subr.mxu0 0.0
    %1739 = vmatpush1.msra.mxu0 0.0
    %1740 = vmatprep.subr.mxu0 0.0
    %1741 = vmatpush1.msra.mxu0 0.0
    %1742 = vmatprep.subr.mxu0 0.0
    %1743 = vmatpush1.msra.mxu0 0.0
    %1744 = vmatprep.subr.mxu0 0.0
    %1745 = vmatpush1.msra.mxu0 0.0
    %1746 = vmatprep.subr.mxu0 0.0
    %1747 = vmatpush1.msra.mxu0 0.0
    %1748 = vmatprep.subr.mxu0 0.0
    %1749 = vmatpush1.msra.mxu0 0.0
    %1750 = vmatprep.subr.mxu0 0.0
    %1751 = vmatpush1.msra.mxu0 0.0
    %1752 = vmatprep.subr.mxu0 0.0
    %1753 = vmatpush1.msra.mxu0 0.0
    %1754 = vmatprep.subr.mxu0 0.0
    %1755 = vmatpush1.msra.mxu0 0.0
    %1756 = vmatprep.subr.mxu0 0.0
    %1757 = vmatpush1.msra.mxu0 0.0
    %1758 = vmatprep.subr.mxu0 0.0
    %1759 = vmatpush1.msra.mxu0 0.0
    %1760 = vmatprep.subr.mxu0 0.0
    %1761 = vmatpush1.msra.mxu0 0.0
    %1762 = vmatprep.subr.mxu0 0.0
    %1763 = vmatpush1.msra.mxu0 0.0
    %1764 = vmatprep.mubr.f32.mxu0 0.0
    %v1765 = vand.u32 %v1337, 4294901760
    %v1766 = vsub.f32 %v1337, %v1765
    %v1767 = vand.u32 %v1766, 4294901760
    %1768 = vmatmul.mubr.f32.gmra.mrb[0].mxu0 %v1767
    %v1769 = vpop.f32.mrb[0].mxu0
    %v1770 = vadd.f32 %v1681, %v1769
    %v1771 = vpop.f32.mrb[0].mxu0
    %1772 = vdwg.mxu0
    %1773 = vmatprep.subr.mxu0 0.0
    %v1774 = vand.u32 %v85, 4294901760
    %v1775 = vsub.f32 %v85, %v1774
    %v1776 = vand.u32 %v1775, 4294901760
    %1777 = vmatpush1.msra.mxu0 %v1776
    %1778 = vmatprep.subr.mxu0 0.0
    %v1779 = vand.u32 %v86, 4294901760
    %v1780 = vsub.f32 %v86, %v1779
    %v1781 = vand.u32 %v1780, 4294901760
    %1782 = vmatpush1.msra.mxu0 %v1781
    %1783 = vmatprep.subr.mxu0 0.0
    %v1784 = vand.u32 %v87, 4294901760
    %v1785 = vsub.f32 %v87, %v1784
    %v1786 = vand.u32 %v1785, 4294901760
    %1787 = vmatpush1.msra.mxu0 %v1786
    %1788 = vmatprep.subr.mxu0 0.0
    %v1789 = vand.u32 %v88, 4294901760
    %v1790 = vsub.f32 %v88, %v1789
    %v1791 = vand.u32 %v1790, 4294901760
    %1792 = vmatpush1.msra.mxu0 %v1791
    %1793 = vmatprep.subr.mxu0 0.0
    %v1794 = vand.u32 %v89, 4294901760
    %v1795 = vsub.f32 %v89, %v1794
    %v1796 = vand.u32 %v1795, 4294901760
    %1797 = vmatpush1.msra.mxu0 %v1796
    %1798 = vmatprep.subr.mxu0 0.0
    %v1799 = vand.u32 %v90, 4294901760
    %v1800 = vsub.f32 %v90, %v1799
    %v1801 = vand.u32 %v1800, 4294901760
    %1802 = vmatpush1.msra.mxu0 %v1801
    %1803 = vmatprep.subr.mxu0 0.0
    %v1804 = vand.u32 %v91, 4294901760
    %v1805 = vsub.f32 %v91, %v1804
    %v1806 = vand.u32 %v1805, 4294901760
    %1807 = vmatpush1.msra.mxu0 %v1806
    %1808 = vmatprep.subr.mxu0 0.0
    %v1809 = vand.u32 %v92, 4294901760
    %v1810 = vsub.f32 %v92, %v1809
    %v1811 = vand.u32 %v1810, 4294901760
    %1812 = vmatpush1.msra.mxu0 %v1811
    %1813 = vmatprep.subr.mxu0 0.0
    %v1814 = vand.u32 %v93, 4294901760
    %v1815 = vsub.f32 %v93, %v1814
    %v1816 = vand.u32 %v1815, 4294901760
    %1817 = vmatpush1.msra.mxu0 %v1816
    %1818 = vmatprep.subr.mxu0 0.0
    %v1819 = vand.u32 %v94, 4294901760
    %v1820 = vsub.f32 %v94, %v1819
    %v1821 = vand.u32 %v1820, 4294901760
    %1822 = vmatpush1.msra.mxu0 %v1821
    %1823 = vmatprep.subr.mxu0 0.0
    %v1824 = vand.u32 %v95, 4294901760
    %v1825 = vsub.f32 %v95, %v1824
    %v1826 = vand.u32 %v1825, 4294901760
    %1827 = vmatpush1.msra.mxu0 %v1826
    %1828 = vmatprep.subr.mxu0 0.0
    %v1829 = vand.u32 %v96, 4294901760
    %v1830 = vsub.f32 %v96, %v1829
    %v1831 = vand.u32 %v1830, 4294901760
    %1832 = vmatpush1.msra.mxu0 %v1831
    %1833 = vmatprep.subr.mxu0 0.0
    %v1834 = vand.u32 %v97, 4294901760
    %v1835 = vsub.f32 %v97, %v1834
    %v1836 = vand.u32 %v1835, 4294901760
    %1837 = vmatpush1.msra.mxu0 %v1836
    %1838 = vmatprep.subr.mxu0 0.0
    %v1839 = vand.u32 %v98, 4294901760
    %v1840 = vsub.f32 %v98, %v1839
    %v1841 = vand.u32 %v1840, 4294901760
    %1842 = vmatpush1.msra.mxu0 %v1841
    %1843 = vmatprep.subr.mxu0 0.0
    %v1844 = vand.u32 %v99, 4294901760
    %v1845 = vsub.f32 %v99, %v1844
    %v1846 = vand.u32 %v1845, 4294901760
    %1847 = vmatpush1.msra.mxu0 %v1846
    %1848 = vmatprep.subr.mxu0 0.0
    %v1849 = vand.u32 %v100, 4294901760
    %v1850 = vsub.f32 %v100, %v1849
    %v1851 = vand.u32 %v1850, 4294901760
    %1852 = vmatpush1.msra.mxu0 %v1851
    %1853 = vmatprep.subr.mxu0 0.0
    %1854 = vmatpush1.msra.mxu0 0.0
    %1855 = vmatprep.subr.mxu0 0.0
    %1856 = vmatpush1.msra.mxu0 0.0
    %1857 = vmatprep.subr.mxu0 0.0
    %1858 = vmatpush1.msra.mxu0 0.0
    %1859 = vmatprep.subr.mxu0 0.0
    %1860 = vmatpush1.msra.mxu0 0.0
    %1861 = vmatprep.subr.mxu0 0.0
    %1862 = vmatpush1.msra.mxu0 0.0
    %1863 = vmatprep.subr.mxu0 0.0
    %1864 = vmatpush1.msra.mxu0 0.0
    %1865 = vmatprep.subr.mxu0 0.0
    %1866 = vmatpush1.msra.mxu0 0.0
    %1867 = vmatprep.subr.mxu0 0.0
    %1868 = vmatpush1.msra.mxu0 0.0
    %1869 = vmatprep.subr.mxu0 0.0
    %1870 = vmatpush1.msra.mxu0 0.0
    %1871 = vmatprep.subr.mxu0 0.0
    %1872 = vmatpush1.msra.mxu0 0.0
    %1873 = vmatprep.subr.mxu0 0.0
    %1874 = vmatpush1.msra.mxu0 0.0
    %1875 = vmatprep.subr.mxu0 0.0
    %1876 = vmatpush1.msra.mxu0 0.0
    %1877 = vmatprep.subr.mxu0 0.0
    %1878 = vmatpush1.msra.mxu0 0.0
    %1879 = vmatprep.subr.mxu0 0.0
    %1880 = vmatpush1.msra.mxu0 0.0
    %1881 = vmatprep.subr.mxu0 0.0
    %1882 = vmatpush1.msra.mxu0 0.0
    %1883 = vmatprep.subr.mxu0 0.0
    %1884 = vmatpush1.msra.mxu0 0.0
    %1885 = vmatprep.mubr.f32.mxu0 0.0
    %v1886 = vand.u32 %v1337, 4294901760
    %1887 = vmatmul.mubr.f32.gmra.mrb[0].mxu0 %v1886
    %v1888 = vpop.f32.mrb[0].mxu0
    %v1889 = vadd.f32 %v1770, %v1888
    %v1890 = vpop.f32.mrb[0].mxu0
    %1891 = vdwg.mxu0
    %1892 = vmatprep.subr.mxu0 0.0
    %v1893 = vand.u32 %v85, 4294901760
    %1894 = vmatpush1.msra.mxu0 %v1893
    %1895 = vmatprep.subr.mxu0 0.0
    %v1896 = vand.u32 %v86, 4294901760
    %1897 = vmatpush1.msra.mxu0 %v1896
    %1898 = vmatprep.subr.mxu0 0.0
    %v1899 = vand.u32 %v87, 4294901760
    %1900 = vmatpush1.msra.mxu0 %v1899
    %1901 = vmatprep.subr.mxu0 0.0
    %v1902 = vand.u32 %v88, 4294901760
    %1903 = vmatpush1.msra.mxu0 %v1902
    %1904 = vmatprep.subr.mxu0 0.0
    %v1905 = vand.u32 %v89, 4294901760
    %1906 = vmatpush1.msra.mxu0 %v1905
    %1907 = vmatprep.subr.mxu0 0.0
    %v1908 = vand.u32 %v90, 4294901760
    %1909 = vmatpush1.msra.mxu0 %v1908
    %1910 = vmatprep.subr.mxu0 0.0
    %v1911 = vand.u32 %v91, 4294901760
    %1912 = vmatpush1.msra.mxu0 %v1911
    %1913 = vmatprep.subr.mxu0 0.0
    %v1914 = vand.u32 %v92, 4294901760
    %1915 = vmatpush1.msra.mxu0 %v1914
    %1916 = vmatprep.subr.mxu0 0.0
    %v1917 = vand.u32 %v93, 4294901760
    %1918 = vmatpush1.msra.mxu0 %v1917
    %1919 = vmatprep.subr.mxu0 0.0
    %v1920 = vand.u32 %v94, 4294901760
    %1921 = vmatpush1.msra.mxu0 %v1920
    %1922 = vmatprep.subr.mxu0 0.0
    %v1923 = vand.u32 %v95, 4294901760
    %1924 = vmatpush1.msra.mxu0 %v1923
    %1925 = vmatprep.subr.mxu0 0.0
    %v1926 = vand.u32 %v96, 4294901760
    %1927 = vmatpush1.msra.mxu0 %v1926
    %1928 = vmatprep.subr.mxu0 0.0
    %v1929 = vand.u32 %v97, 4294901760
    %1930 = vmatpush1.msra.mxu0 %v1929
    %1931 = vmatprep.subr.mxu0 0.0
    %v1932 = vand.u32 %v98, 4294901760
    %1933 = vmatpush1.msra.mxu0 %v1932
    %1934 = vmatprep.subr.mxu0 0.0
    %v1935 = vand.u32 %v99, 4294901760
    %1936 = vmatpush1.msra.mxu0 %v1935
    %1937 = vmatprep.subr.mxu0 0.0
    %v1938 = vand.u32 %v100, 4294901760
    %1939 = vmatpush1.msra.mxu0 %v1938
    %1940 = vmatprep.subr.mxu0 0.0
    %1941 = vmatpush1.msra.mxu0 0.0
    %1942 = vmatprep.subr.mxu0 0.0
    %1943 = vmatpush1.msra.mxu0 0.0
    %1944 = vmatprep.subr.mxu0 0.0
    %1945 = vmatpush1.msra.mxu0 0.0
    %1946 = vmatprep.subr.mxu0 0.0
    %1947 = vmatpush1.msra.mxu0 0.0
    %1948 = vmatprep.subr.mxu0 0.0
    %1949 = vmatpush1.msra.mxu0 0.0
    %1950 = vmatprep.subr.mxu0 0.0
    %1951 = vmatpush1.msra.mxu0 0.0
    %1952 = vmatprep.subr.mxu0 0.0
    %1953 = vmatpush1.msra.mxu0 0.0
    %1954 = vmatprep.subr.mxu0 0.0
    %1955 = vmatpush1.msra.mxu0 0.0
    %1956 = vmatprep.subr.mxu0 0.0
    %1957 = vmatpush1.msra.mxu0 0.0
    %1958 = vmatprep.subr.mxu0 0.0
    %1959 = vmatpush1.msra.mxu0 0.0
    %1960 = vmatprep.subr.mxu0 0.0
    %1961 = vmatpush1.msra.mxu0 0.0
    %1962 = vmatprep.subr.mxu0 0.0
    %1963 = vmatpush1.msra.mxu0 0.0
    %1964 = vmatprep.subr.mxu0 0.0
    %1965 = vmatpush1.msra.mxu0 0.0
    %1966 = vmatprep.subr.mxu0 0.0
    %1967 = vmatpush1.msra.mxu0 0.0
    %1968 = vmatprep.subr.mxu0 0.0
    %1969 = vmatpush1.msra.mxu0 0.0
    %1970 = vmatprep.subr.mxu0 0.0
    %1971 = vmatpush1.msra.mxu0 0.0
    %1972 = vmatprep.mubr.f32.mxu0 0.0
    %v1973 = vand.u32 %v1337, 4294901760
    %1974 = vmatmul.mubr.f32.gmra.mrb[0].mxu0 %v1973
    %v1975 = vpop.f32.mrb[0].mxu0
    %v1976 = vadd.f32 %v1889, %v1975
    %v1977 = vpop.f32.mrb[0].mxu0
    %1978 = vdwg.mxu0
    %v1979 = vrsqrt.pop %v1976
    %v1980 = vmul.f32 %v1336, %v1979
    %v1981 = vlaneseq
    %v1982 = vshrl.u32 %v1981, 7
    %v1983 = vsub.s32 0, %v1982
    %v1984 = vrot.slane %v101, %v1983
    %v1985 = vmul.f32 %v1980, %v1984
    %v1986 = vlaneseq
    %v1987 = vshrl.u32 %v1986, 7
    %v1988 = vsub.s32 0, %v1987
    %v1989 = vrot.slane %v102, %v1988
    %v1990 = vadd.f32 %v1985, %v1989
    %v1991 = vadd.f32 %v690, 1.0
    %v1992 = vlaneseq
    %v1993 = vshrl.u32 %v1992, 7
    %v1994 = vsub.s32 0, %v1993
    %v1995 = vrot.slane %v1991, %v1994
    %v1996 = vmul.f32 %v1990, %v1995
    %v1997 = vlaneseq
    %v1998 = vshrl.u32 %v1997, 7
    %v1999 = vsub.s32 0, %v1998
    %v2000 = vrot.slane %v692, %v1999
    %v2001 = vadd.f32 %v1996, %v2000
    %v2002 = vxor.u32 %v2001, 2147483648
    %v2003 = vmul.f32 %v2002, 1.442695
    %v2004 = vpow.pop %v2003
    %v2005 = vadd.f32 %v2004, 1.0
    %v2006 = vrcp.pop %v2005
    %v2007 = vmul.f32 1.0, %v2006
    %v2008 = vmul.f32 %v2001, %v2007
    %v2009 = vlaneseq
    %v2010 = vshrl.u32 %v2009, 7
    %v2011 = vsub.s32 0, %v2010
    %v2012 = vrot.slane %v103, %v2011
    %2013 = vmatprep.subr.mxu0 0.0
    %v2014 = vand.u32 %v69, 4294901760
    %2015 = vmatpush1.msra.mxu0 %v2014
    %2016 = vmatprep.subr.mxu0 0.0
    %v2017 = vand.u32 %v70, 4294901760
    %2018 = vmatpush1.msra.mxu0 %v2017
    %2019 = vmatprep.subr.mxu0 0.0
    %v2020 = vand.u32 %v71, 4294901760
    %2021 = vmatpush1.msra.mxu0 %v2020
    %2022 = vmatprep.subr.mxu0 0.0
    %v2023 = vand.u32 %v72, 4294901760
    %2024 = vmatpush1.msra.mxu0 %v2023
    %2025 = vmatprep.subr.mxu0 0.0
    %v2026 = vand.u32 %v73, 4294901760
    %2027 = vmatpush1.msra.mxu0 %v2026
    %2028 = vmatprep.subr.mxu0 0.0
    %v2029 = vand.u32 %v74, 4294901760
    %2030 = vmatpush1.msra.mxu0 %v2029
    %2031 = vmatprep.subr.mxu0 0.0
    %v2032 = vand.u32 %v75, 4294901760
    %2033 = vmatpush1.msra.mxu0 %v2032
    %2034 = vmatprep.subr.mxu0 0.0
    %v2035 = vand.u32 %v76, 4294901760
    %2036 = vmatpush1.msra.mxu0 %v2035
    %2037 = vmatprep.subr.mxu0 0.0
    %v2038 = vand.u32 %v77, 4294901760
    %2039 = vmatpush1.msra.mxu0 %v2038
    %2040 = vmatprep.subr.mxu0 0.0
    %v2041 = vand.u32 %v78, 4294901760
    %2042 = vmatpush1.msra.mxu0 %v2041
    %2043 = vmatprep.subr.mxu0 0.0
    %v2044 = vand.u32 %v79, 4294901760
    %2045 = vmatpush1.msra.mxu0 %v2044
    %2046 = vmatprep.subr.mxu0 0.0
    %v2047 = vand.u32 %v80, 4294901760
    %2048 = vmatpush1.msra.mxu0 %v2047
    %2049 = vmatprep.subr.mxu0 0.0
    %v2050 = vand.u32 %v81, 4294901760
    %2051 = vmatpush1.msra.mxu0 %v2050
    %2052 = vmatprep.subr.mxu0 0.0
    %v2053 = vand.u32 %v82, 4294901760
    %2054 = vmatpush1.msra.mxu0 %v2053
    %2055 = vmatprep.subr.mxu0 0.0
    %v2056 = vand.u32 %v83, 4294901760
    %2057 = vmatpush1.msra.mxu0 %v2056
    %2058 = vmatprep.subr.mxu0 0.0
    %v2059 = vand.u32 %v84, 4294901760
    %2060 = vmatpush1.msra.mxu0 %v2059
    %2061 = vmatprep.subr.mxu0 0.0
    %2062 = vmatpush1.msra.mxu0 0.0
    %2063 = vmatprep.subr.mxu0 0.0
    %2064 = vmatpush1.msra.mxu0 0.0
    %2065 = vmatprep.subr.mxu0 0.0
    %2066 = vmatpush1.msra.mxu0 0.0
    %2067 = vmatprep.subr.mxu0 0.0
    %2068 = vmatpush1.msra.mxu0 0.0
    %2069 = vmatprep.subr.mxu0 0.0
    %2070 = vmatpush1.msra.mxu0 0.0
    %2071 = vmatprep.subr.mxu0 0.0
    %2072 = vmatpush1.msra.mxu0 0.0
    %2073 = vmatprep.subr.mxu0 0.0
    %2074 = vmatpush1.msra.mxu0 0.0
    %2075 = vmatprep.subr.mxu0 0.0
    %2076 = vmatpush1.msra.mxu0 0.0
    %2077 = vmatprep.subr.mxu0 0.0
    %2078 = vmatpush1.msra.mxu0 0.0
    %2079 = vmatprep.subr.mxu0 0.0
    %2080 = vmatpush1.msra.mxu0 0.0
    %2081 = vmatprep.subr.mxu0 0.0
    %2082 = vmatpush1.msra.mxu0 0.0
    %2083 = vmatprep.subr.mxu0 0.0
    %2084 = vmatpush1.msra.mxu0 0.0
    %2085 = vmatprep.subr.mxu0 0.0
    %2086 = vmatpush1.msra.mxu0 0.0
    %2087 = vmatprep.subr.mxu0 0.0
    %2088 = vmatpush1.msra.mxu0 0.0
    %2089 = vmatprep.subr.mxu0 0.0
    %2090 = vmatpush1.msra.mxu0 0.0
    %2091 = vmatprep.subr.mxu0 0.0
    %2092 = vmatpush1.msra.mxu0 0.0
    %2093 = vmatprep.mubr.f32.mxu0 0.0
    %v2094 = vand.u32 %v2008, 4294901760
    %v2095 = vsub.f32 %v2008, %v2094
    %v2096 = vand.u32 %v2095, 4294901760
    %v2097 = vsub.f32 %v2095, %v2096
    %v2098 = vand.u32 %v2097, 4294901760
    %2099 = vmatmul.mubr.f32.gmra.mrb[0].mxu0 %v2098
    %v2100 = vpop.f32.mrb[0].mxu0
    %v2101 = vadd.f32 %v2012, %v2100
    %v2102 = vpop.f32.mrb[0].mxu0
    %2103 = vdwg.mxu0
    %2104 = vmatprep.subr.mxu0 0.0
    %v2105 = vand.u32 %v69, 4294901760
    %v2106 = vsub.f32 %v69, %v2105
    %v2107 = vand.u32 %v2106, 4294901760
    %v2108 = vsub.f32 %v2106, %v2107
    %v2109 = vand.u32 %v2108, 4294901760
    %2110 = vmatpush1.msra.mxu0 %v2109
    %2111 = vmatprep.subr.mxu0 0.0
    %v2112 = vand.u32 %v70, 4294901760
    %v2113 = vsub.f32 %v70, %v2112
    %v2114 = vand.u32 %v2113, 4294901760
    %v2115 = vsub.f32 %v2113, %v2114
    %v2116 = vand.u32 %v2115, 4294901760
    %2117 = vmatpush1.msra.mxu0 %v2116
    %2118 = vmatprep.subr.mxu0 0.0
    %v2119 = vand.u32 %v71, 4294901760
    %v2120 = vsub.f32 %v71, %v2119
    %v2121 = vand.u32 %v2120, 4294901760
    %v2122 = vsub.f32 %v2120, %v2121
    %v2123 = vand.u32 %v2122, 4294901760
    %2124 = vmatpush1.msra.mxu0 %v2123
    %2125 = vmatprep.subr.mxu0 0.0
    %v2126 = vand.u32 %v72, 4294901760
    %v2127 = vsub.f32 %v72, %v2126
    %v2128 = vand.u32 %v2127, 4294901760
    %v2129 = vsub.f32 %v2127, %v2128
    %v2130 = vand.u32 %v2129, 4294901760
    %2131 = vmatpush1.msra.mxu0 %v2130
    %2132 = vmatprep.subr.mxu0 0.0
    %v2133 = vand.u32 %v73, 4294901760
    %v2134 = vsub.f32 %v73, %v2133
    %v2135 = vand.u32 %v2134, 4294901760
    %v2136 = vsub.f32 %v2134, %v2135
    %v2137 = vand.u32 %v2136, 4294901760
    %2138 = vmatpush1.msra.mxu0 %v2137
    %2139 = vmatprep.subr.mxu0 0.0
    %v2140 = vand.u32 %v74, 4294901760
    %v2141 = vsub.f32 %v74, %v2140
    %v2142 = vand.u32 %v2141, 4294901760
    %v2143 = vsub.f32 %v2141, %v2142
    %v2144 = vand.u32 %v2143, 4294901760
    %2145 = vmatpush1.msra.mxu0 %v2144
    %2146 = vmatprep.subr.mxu0 0.0
    %v2147 = vand.u32 %v75, 4294901760
    %v2148 = vsub.f32 %v75, %v2147
    %v2149 = vand.u32 %v2148, 4294901760
    %v2150 = vsub.f32 %v2148, %v2149
    %v2151 = vand.u32 %v2150, 4294901760
    %2152 = vmatpush1.msra.mxu0 %v2151
    %2153 = vmatprep.subr.mxu0 0.0
    %v2154 = vand.u32 %v76, 4294901760
    %v2155 = vsub.f32 %v76, %v2154
    %v2156 = vand.u32 %v2155, 4294901760
    %v2157 = vsub.f32 %v2155, %v2156
    %v2158 = vand.u32 %v2157, 4294901760
    %2159 = vmatpush1.msra.mxu0 %v2158
    %2160 = vmatprep.subr.mxu0 0.0
    %v2161 = vand.u32 %v77, 4294901760
    %v2162 = vsub.f32 %v77, %v2161
    %v2163 = vand.u32 %v2162, 4294901760
    %v2164 = vsub.f32 %v2162, %v2163
    %v2165 = vand.u32 %v2164, 4294901760
    %2166 = vmatpush1.msra.mxu0 %v2165
    %2167 = vmatprep.subr.mxu0 0.0
    %v2168 = vand.u32 %v78, 4294901760
    %v2169 = vsub.f32 %v78, %v2168
    %v2170 = vand.u32 %v2169, 4294901760
    %v2171 = vsub.f32 %v2169, %v2170
    %v2172 = vand.u32 %v2171, 4294901760
    %2173 = vmatpush1.msra.mxu0 %v2172
    %2174 = vmatprep.subr.mxu0 0.0
    %v2175 = vand.u32 %v79, 4294901760
    %v2176 = vsub.f32 %v79, %v2175
    %v2177 = vand.u32 %v2176, 4294901760
    %v2178 = vsub.f32 %v2176, %v2177
    %v2179 = vand.u32 %v2178, 4294901760
    %2180 = vmatpush1.msra.mxu0 %v2179
    %2181 = vmatprep.subr.mxu0 0.0
    %v2182 = vand.u32 %v80, 4294901760
    %v2183 = vsub.f32 %v80, %v2182
    %v2184 = vand.u32 %v2183, 4294901760
    %v2185 = vsub.f32 %v2183, %v2184
    %v2186 = vand.u32 %v2185, 4294901760
    %2187 = vmatpush1.msra.mxu0 %v2186
    %2188 = vmatprep.subr.mxu0 0.0
    %v2189 = vand.u32 %v81, 4294901760
    %v2190 = vsub.f32 %v81, %v2189
    %v2191 = vand.u32 %v2190, 4294901760
    %v2192 = vsub.f32 %v2190, %v2191
    %v2193 = vand.u32 %v2192, 4294901760
    %2194 = vmatpush1.msra.mxu0 %v2193
    %2195 = vmatprep.subr.mxu0 0.0
    %v2196 = vand.u32 %v82, 4294901760
    %v2197 = vsub.f32 %v82, %v2196
    %v2198 = vand.u32 %v2197, 4294901760
    %v2199 = vsub.f32 %v2197, %v2198
    %v2200 = vand.u32 %v2199, 4294901760
    %2201 = vmatpush1.msra.mxu0 %v2200
    %2202 = vmatprep.subr.mxu0 0.0
    %v2203 = vand.u32 %v83, 4294901760
    %v2204 = vsub.f32 %v83, %v2203
    %v2205 = vand.u32 %v2204, 4294901760
    %v2206 = vsub.f32 %v2204, %v2205
    %v2207 = vand.u32 %v2206, 4294901760
    %2208 = vmatpush1.msra.mxu0 %v2207
    %2209 = vmatprep.subr.mxu0 0.0
    %v2210 = vand.u32 %v84, 4294901760
    %v2211 = vsub.f32 %v84, %v2210
    %v2212 = vand.u32 %v2211, 4294901760
    %v2213 = vsub.f32 %v2211, %v2212
    %v2214 = vand.u32 %v2213, 4294901760
    %2215 = vmatpush1.msra.mxu0 %v2214
    %2216 = vmatprep.subr.mxu0 0.0
    %2217 = vmatpush1.msra.mxu0 0.0
    %2218 = vmatprep.subr.mxu0 0.0
    %2219 = vmatpush1.msra.mxu0 0.0
    %2220 = vmatprep.subr.mxu0 0.0
    %2221 = vmatpush1.msra.mxu0 0.0
    %2222 = vmatprep.subr.mxu0 0.0
    %2223 = vmatpush1.msra.mxu0 0.0
    %2224 = vmatprep.subr.mxu0 0.0
    %2225 = vmatpush1.msra.mxu0 0.0
    %2226 = vmatprep.subr.mxu0 0.0
    %2227 = vmatpush1.msra.mxu0 0.0
    %2228 = vmatprep.subr.mxu0 0.0
    %2229 = vmatpush1.msra.mxu0 0.0
    %2230 = vmatprep.subr.mxu0 0.0
    %2231 = vmatpush1.msra.mxu0 0.0
    %2232 = vmatprep.subr.mxu0 0.0
    %2233 = vmatpush1.msra.mxu0 0.0
    %2234 = vmatprep.subr.mxu0 0.0
    %2235 = vmatpush1.msra.mxu0 0.0
    %2236 = vmatprep.subr.mxu0 0.0
    %2237 = vmatpush1.msra.mxu0 0.0
    %2238 = vmatprep.subr.mxu0 0.0
    %2239 = vmatpush1.msra.mxu0 0.0
    %2240 = vmatprep.subr.mxu0 0.0
    %2241 = vmatpush1.msra.mxu0 0.0
    %2242 = vmatprep.subr.mxu0 0.0
    %2243 = vmatpush1.msra.mxu0 0.0
    %2244 = vmatprep.subr.mxu0 0.0
    %2245 = vmatpush1.msra.mxu0 0.0
    %2246 = vmatprep.subr.mxu0 0.0
    %2247 = vmatpush1.msra.mxu0 0.0
    %2248 = vmatprep.mubr.f32.mxu0 0.0
    %v2249 = vand.u32 %v2008, 4294901760
    %2250 = vmatmul.mubr.f32.gmra.mrb[0].mxu0 %v2249
    %v2251 = vpop.f32.mrb[0].mxu0
    %v2252 = vadd.f32 %v2101, %v2251
    %v2253 = vpop.f32.mrb[0].mxu0
    %2254 = vdwg.mxu0
    %2255 = vmatprep.subr.mxu0 0.0
    %v2256 = vand.u32 %v69, 4294901760
    %v2257 = vsub.f32 %v69, %v2256
    %2258 = vmatpush1.msra.mxu0 %v2257
    %2259 = vmatprep.subr.mxu0 0.0
    %v2260 = vand.u32 %v70, 4294901760
    %v2261 = vsub.f32 %v70, %v2260
    %2262 = vmatpush1.msra.mxu0 %v2261
    %2263 = vmatprep.subr.mxu0 0.0
    %v2264 = vand.u32 %v71, 4294901760
    %v2265 = vsub.f32 %v71, %v2264
    %2266 = vmatpush1.msra.mxu0 %v2265
    %2267 = vmatprep.subr.mxu0 0.0
    %v2268 = vand.u32 %v72, 4294901760
    %v2269 = vsub.f32 %v72, %v2268
    %2270 = vmatpush1.msra.mxu0 %v2269
    %2271 = vmatprep.subr.mxu0 0.0
    %v2272 = vand.u32 %v73, 4294901760
    %v2273 = vsub.f32 %v73, %v2272
    %2274 = vmatpush1.msra.mxu0 %v2273
    %2275 = vmatprep.subr.mxu0 0.0
    %v2276 = vand.u32 %v74, 4294901760
    %v2277 = vsub.f32 %v74, %v2276
    %2278 = vmatpush1.msra.mxu0 %v2277
    %2279 = vmatprep.subr.mxu0 0.0
    %v2280 = vand.u32 %v75, 4294901760
    %v2281 = vsub.f32 %v75, %v2280
    %2282 = vmatpush1.msra.mxu0 %v2281
    %2283 = vmatprep.subr.mxu0 0.0
    %v2284 = vand.u32 %v76, 4294901760
    %v2285 = vsub.f32 %v76, %v2284
    %2286 = vmatpush1.msra.mxu0 %v2285
    %2287 = vmatprep.subr.mxu0 0.0
    %v2288 = vand.u32 %v77, 4294901760
    %v2289 = vsub.f32 %v77, %v2288
    %2290 = vmatpush1.msra.mxu0 %v2289
    %2291 = vmatprep.subr.mxu0 0.0
    %v2292 = vand.u32 %v78, 4294901760
    %v2293 = vsub.f32 %v78, %v2292
    %2294 = vmatpush1.msra.mxu0 %v2293
    %2295 = vmatprep.subr.mxu0 0.0
    %v2296 = vand.u32 %v79, 4294901760
    %v2297 = vsub.f32 %v79, %v2296
    %2298 = vmatpush1.msra.mxu0 %v2297
    %2299 = vmatprep.subr.mxu0 0.0
    %v2300 = vand.u32 %v80, 4294901760
    %v2301 = vsub.f32 %v80, %v2300
    %2302 = vmatpush1.msra.mxu0 %v2301
    %2303 = vmatprep.subr.mxu0 0.0
    %v2304 = vand.u32 %v81, 4294901760
    %v2305 = vsub.f32 %v81, %v2304
    %2306 = vmatpush1.msra.mxu0 %v2305
    %2307 = vmatprep.subr.mxu0 0.0
    %v2308 = vand.u32 %v82, 4294901760
    %v2309 = vsub.f32 %v82, %v2308
    %2310 = vmatpush1.msra.mxu0 %v2309
    %2311 = vmatprep.subr.mxu0 0.0
    %v2312 = vand.u32 %v83, 4294901760
    %v2313 = vsub.f32 %v83, %v2312
    %2314 = vmatpush1.msra.mxu0 %v2313
    %2315 = vmatprep.subr.mxu0 0.0
    %v2316 = vand.u32 %v84, 4294901760
    %v2317 = vsub.f32 %v84, %v2316
    %2318 = vmatpush1.msra.mxu0 %v2317
    %2319 = vmatprep.subr.mxu0 0.0
    %2320 = vmatpush1.msra.mxu0 0.0
    %2321 = vmatprep.subr.mxu0 0.0
    %2322 = vmatpush1.msra.mxu0 0.0
    %2323 = vmatprep.subr.mxu0 0.0
    %2324 = vmatpush1.msra.mxu0 0.0
    %2325 = vmatprep.subr.mxu0 0.0
    %2326 = vmatpush1.msra.mxu0 0.0
    %2327 = vmatprep.subr.mxu0 0.0
    %2328 = vmatpush1.msra.mxu0 0.0
    %2329 = vmatprep.subr.mxu0 0.0
    %2330 = vmatpush1.msra.mxu0 0.0
    %2331 = vmatprep.subr.mxu0 0.0
    %2332 = vmatpush1.msra.mxu0 0.0
    %2333 = vmatprep.subr.mxu0 0.0
    %2334 = vmatpush1.msra.mxu0 0.0
    %2335 = vmatprep.subr.mxu0 0.0
    %2336 = vmatpush1.msra.mxu0 0.0
    %2337 = vmatprep.subr.mxu0 0.0
    %2338 = vmatpush1.msra.mxu0 0.0
    %2339 = vmatprep.subr.mxu0 0.0
    %2340 = vmatpush1.msra.mxu0 0.0
    %2341 = vmatprep.subr.mxu0 0.0
    %2342 = vmatpush1.msra.mxu0 0.0
    %2343 = vmatprep.subr.mxu0 0.0
    %2344 = vmatpush1.msra.mxu0 0.0
    %2345 = vmatprep.subr.mxu0 0.0
    %2346 = vmatpush1.msra.mxu0 0.0
    %2347 = vmatprep.subr.mxu0 0.0
    %2348 = vmatpush1.msra.mxu0 0.0
    %2349 = vmatprep.subr.mxu0 0.0
    %2350 = vmatpush1.msra.mxu0 0.0
    %2351 = vmatprep.mubr.f32.mxu0 0.0
    %v2352 = vand.u32 %v2008, 4294901760
    %v2353 = vsub.f32 %v2008, %v2352
    %2354 = vmatmul.mubr.f32.gmra.mrb[0].mxu0 %v2353
    %v2355 = vpop.f32.mrb[0].mxu0
    %v2356 = vadd.f32 %v2252, %v2355
    %v2357 = vpop.f32.mrb[0].mxu0
    %2358 = vdwg.mxu0
    %2359 = vmatprep.subr.mxu0 0.0
    %v2360 = vand.u32 %v69, 4294901760
    %2361 = vmatpush1.msra.mxu0 %v2360
    %2362 = vmatprep.subr.mxu0 0.0
    %v2363 = vand.u32 %v70, 4294901760
    %2364 = vmatpush1.msra.mxu0 %v2363
    %2365 = vmatprep.subr.mxu0 0.0
    %v2366 = vand.u32 %v71, 4294901760
    %2367 = vmatpush1.msra.mxu0 %v2366
    %2368 = vmatprep.subr.mxu0 0.0
    %v2369 = vand.u32 %v72, 4294901760
    %2370 = vmatpush1.msra.mxu0 %v2369
    %2371 = vmatprep.subr.mxu0 0.0
    %v2372 = vand.u32 %v73, 4294901760
    %2373 = vmatpush1.msra.mxu0 %v2372
    %2374 = vmatprep.subr.mxu0 0.0
    %v2375 = vand.u32 %v74, 4294901760
    %2376 = vmatpush1.msra.mxu0 %v2375
    %2377 = vmatprep.subr.mxu0 0.0
    %v2378 = vand.u32 %v75, 4294901760
    %2379 = vmatpush1.msra.mxu0 %v2378
    %2380 = vmatprep.subr.mxu0 0.0
    %v2381 = vand.u32 %v76, 4294901760
    %2382 = vmatpush1.msra.mxu0 %v2381
    %2383 = vmatprep.subr.mxu0 0.0
    %v2384 = vand.u32 %v77, 4294901760
    %2385 = vmatpush1.msra.mxu0 %v2384
    %2386 = vmatprep.subr.mxu0 0.0
    %v2387 = vand.u32 %v78, 4294901760
    %2388 = vmatpush1.msra.mxu0 %v2387
    %2389 = vmatprep.subr.mxu0 0.0
    %v2390 = vand.u32 %v79, 4294901760
    %2391 = vmatpush1.msra.mxu0 %v2390
    %2392 = vmatprep.subr.mxu0 0.0
    %v2393 = vand.u32 %v80, 4294901760
    %2394 = vmatpush1.msra.mxu0 %v2393
    %2395 = vmatprep.subr.mxu0 0.0
    %v2396 = vand.u32 %v81, 4294901760
    %2397 = vmatpush1.msra.mxu0 %v2396
    %2398 = vmatprep.subr.mxu0 0.0
    %v2399 = vand.u32 %v82, 4294901760
    %2400 = vmatpush1.msra.mxu0 %v2399
    %2401 = vmatprep.subr.mxu0 0.0
    %v2402 = vand.u32 %v83, 4294901760
    %2403 = vmatpush1.msra.mxu0 %v2402
    %2404 = vmatprep.subr.mxu0 0.0
    %v2405 = vand.u32 %v84, 4294901760
    %2406 = vmatpush1.msra.mxu0 %v2405
    %2407 = vmatprep.subr.mxu0 0.0
    %2408 = vmatpush1.msra.mxu0 0.0
    %2409 = vmatprep.subr.mxu0 0.0
    %2410 = vmatpush1.msra.mxu0 0.0
    %2411 = vmatprep.subr.mxu0 0.0
    %2412 = vmatpush1.msra.mxu0 0.0
    %2413 = vmatprep.subr.mxu0 0.0
    %2414 = vmatpush1.msra.mxu0 0.0
    %2415 = vmatprep.subr.mxu0 0.0
    %2416 = vmatpush1.msra.mxu0 0.0
    %2417 = vmatprep.subr.mxu0 0.0
    %2418 = vmatpush1.msra.mxu0 0.0
    %2419 = vmatprep.subr.mxu0 0.0
    %2420 = vmatpush1.msra.mxu0 0.0
    %2421 = vmatprep.subr.mxu0 0.0
    %2422 = vmatpush1.msra.mxu0 0.0
    %2423 = vmatprep.subr.mxu0 0.0
    %2424 = vmatpush1.msra.mxu0 0.0
    %2425 = vmatprep.subr.mxu0 0.0
    %2426 = vmatpush1.msra.mxu0 0.0
    %2427 = vmatprep.subr.mxu0 0.0
    %2428 = vmatpush1.msra.mxu0 0.0
    %2429 = vmatprep.subr.mxu0 0.0
    %2430 = vmatpush1.msra.mxu0 0.0
    %2431 = vmatprep.subr.mxu0 0.0
    %2432 = vmatpush1.msra.mxu0 0.0
    %2433 = vmatprep.subr.mxu0 0.0
    %2434 = vmatpush1.msra.mxu0 0.0
    %2435 = vmatprep.subr.mxu0 0.0
    %2436 = vmatpush1.msra.mxu0 0.0
    %2437 = vmatprep.subr.mxu0 0.0
    %2438 = vmatpush1.msra.mxu0 0.0
    %2439 = vmatprep.mubr.f32.mxu0 0.0
    %v2440 = vand.u32 %v2008, 4294901760
    %v2441 = vsub.f32 %v2008, %v2440
    %v2442 = vand.u32 %v2441, 4294901760
    %2443 = vmatmul.mubr.f32.gmra.mrb[0].mxu0 %v2442
    %v2444 = vpop.f32.mrb[0].mxu0
    %v2445 = vadd.f32 %v2356, %v2444
    %v2446 = vpop.f32.mrb[0].mxu0
    %2447 = vdwg.mxu0
    %2448 = vmatprep.subr.mxu0 0.0
    %v2449 = vand.u32 %v69, 4294901760
    %v2450 = vsub.f32 %v69, %v2449
    %v2451 = vand.u32 %v2450, 4294901760
    %2452 = vmatpush1.msra.mxu0 %v2451
    %2453 = vmatprep.subr.mxu0 0.0
    %v2454 = vand.u32 %v70, 4294901760
    %v2455 = vsub.f32 %v70, %v2454
    %v2456 = vand.u32 %v2455, 4294901760
    %2457 = vmatpush1.msra.mxu0 %v2456
    %2458 = vmatprep.subr.mxu0 0.0
    %v2459 = vand.u32 %v71, 4294901760
    %v2460 = vsub.f32 %v71, %v2459
    %v2461 = vand.u32 %v2460, 4294901760
    %2462 = vmatpush1.msra.mxu0 %v2461
    %2463 = vmatprep.subr.mxu0 0.0
    %v2464 = vand.u32 %v72, 4294901760
    %v2465 = vsub.f32 %v72, %v2464
    %v2466 = vand.u32 %v2465, 4294901760
    %2467 = vmatpush1.msra.mxu0 %v2466
    %2468 = vmatprep.subr.mxu0 0.0
    %v2469 = vand.u32 %v73, 4294901760
    %v2470 = vsub.f32 %v73, %v2469
    %v2471 = vand.u32 %v2470, 4294901760
    %2472 = vmatpush1.msra.mxu0 %v2471
    %2473 = vmatprep.subr.mxu0 0.0
    %v2474 = vand.u32 %v74, 4294901760
    %v2475 = vsub.f32 %v74, %v2474
    %v2476 = vand.u32 %v2475, 4294901760
    %2477 = vmatpush1.msra.mxu0 %v2476
    %2478 = vmatprep.subr.mxu0 0.0
    %v2479 = vand.u32 %v75, 4294901760
    %v2480 = vsub.f32 %v75, %v2479
    %v2481 = vand.u32 %v2480, 4294901760
    %2482 = vmatpush1.msra.mxu0 %v2481
    %2483 = vmatprep.subr.mxu0 0.0
    %v2484 = vand.u32 %v76, 4294901760
    %v2485 = vsub.f32 %v76, %v2484
    %v2486 = vand.u32 %v2485, 4294901760
    %2487 = vmatpush1.msra.mxu0 %v2486
    %2488 = vmatprep.subr.mxu0 0.0
    %v2489 = vand.u32 %v77, 4294901760
    %v2490 = vsub.f32 %v77, %v2489
    %v2491 = vand.u32 %v2490, 4294901760
    %2492 = vmatpush1.msra.mxu0 %v2491
    %2493 = vmatprep.subr.mxu0 0.0
    %v2494 = vand.u32 %v78, 4294901760
    %v2495 = vsub.f32 %v78, %v2494
    %v2496 = vand.u32 %v2495, 4294901760
    %2497 = vmatpush1.msra.mxu0 %v2496
    %2498 = vmatprep.subr.mxu0 0.0
    %v2499 = vand.u32 %v79, 4294901760
    %v2500 = vsub.f32 %v79, %v2499
    %v2501 = vand.u32 %v2500, 4294901760
    %2502 = vmatpush1.msra.mxu0 %v2501
    %2503 = vmatprep.subr.mxu0 0.0
    %v2504 = vand.u32 %v80, 4294901760
    %v2505 = vsub.f32 %v80, %v2504
    %v2506 = vand.u32 %v2505, 4294901760
    %2507 = vmatpush1.msra.mxu0 %v2506
    %2508 = vmatprep.subr.mxu0 0.0
    %v2509 = vand.u32 %v81, 4294901760
    %v2510 = vsub.f32 %v81, %v2509
    %v2511 = vand.u32 %v2510, 4294901760
    %2512 = vmatpush1.msra.mxu0 %v2511
    %2513 = vmatprep.subr.mxu0 0.0
    %v2514 = vand.u32 %v82, 4294901760
    %v2515 = vsub.f32 %v82, %v2514
    %v2516 = vand.u32 %v2515, 4294901760
    %2517 = vmatpush1.msra.mxu0 %v2516
    %2518 = vmatprep.subr.mxu0 0.0
    %v2519 = vand.u32 %v83, 4294901760
    %v2520 = vsub.f32 %v83, %v2519
    %v2521 = vand.u32 %v2520, 4294901760
    %2522 = vmatpush1.msra.mxu0 %v2521
    %2523 = vmatprep.subr.mxu0 0.0
    %v2524 = vand.u32 %v84, 4294901760
    %v2525 = vsub.f32 %v84, %v2524
    %v2526 = vand.u32 %v2525, 4294901760
    %2527 = vmatpush1.msra.mxu0 %v2526
    %2528 = vmatprep.subr.mxu0 0.0
    %2529 = vmatpush1.msra.mxu0 0.0
    %2530 = vmatprep.subr.mxu0 0.0
    %2531 = vmatpush1.msra.mxu0 0.0
    %2532 = vmatprep.subr.mxu0 0.0
    %2533 = vmatpush1.msra.mxu0 0.0
    %2534 = vmatprep.subr.mxu0 0.0
    %2535 = vmatpush1.msra.mxu0 0.0
    %2536 = vmatprep.subr.mxu0 0.0
    %2537 = vmatpush1.msra.mxu0 0.0
    %2538 = vmatprep.subr.mxu0 0.0
    %2539 = vmatpush1.msra.mxu0 0.0
    %2540 = vmatprep.subr.mxu0 0.0
    %2541 = vmatpush1.msra.mxu0 0.0
    %2542 = vmatprep.subr.mxu0 0.0
    %2543 = vmatpush1.msra.mxu0 0.0
    %2544 = vmatprep.subr.mxu0 0.0
    %2545 = vmatpush1.msra.mxu0 0.0
    %2546 = vmatprep.subr.mxu0 0.0
    %2547 = vmatpush1.msra.mxu0 0.0
    %2548 = vmatprep.subr.mxu0 0.0
    %2549 = vmatpush1.msra.mxu0 0.0
    %2550 = vmatprep.subr.mxu0 0.0
    %2551 = vmatpush1.msra.mxu0 0.0
    %2552 = vmatprep.subr.mxu0 0.0
    %2553 = vmatpush1.msra.mxu0 0.0
    %2554 = vmatprep.subr.mxu0 0.0
    %2555 = vmatpush1.msra.mxu0 0.0
    %2556 = vmatprep.subr.mxu0 0.0
    %2557 = vmatpush1.msra.mxu0 0.0
    %2558 = vmatprep.subr.mxu0 0.0
    %2559 = vmatpush1.msra.mxu0 0.0
    %2560 = vmatprep.mubr.f32.mxu0 0.0
    %v2561 = vand.u32 %v2008, 4294901760
    %2562 = vmatmul.mubr.f32.gmra.mrb[0].mxu0 %v2561
    %v2563 = vpop.f32.mrb[0].mxu0
    %v2564 = vadd.f32 %v2445, %v2563
    %v2565 = vpop.f32.mrb[0].mxu0
    %2566 = vdwg.mxu0
    %2567 = vmatprep.subr.mxu0 0.0
    %v2568 = vand.u32 %v69, 4294901760
    %2569 = vmatpush1.msra.mxu0 %v2568
    %2570 = vmatprep.subr.mxu0 0.0
    %v2571 = vand.u32 %v70, 4294901760
    %2572 = vmatpush1.msra.mxu0 %v2571
    %2573 = vmatprep.subr.mxu0 0.0
    %v2574 = vand.u32 %v71, 4294901760
    %2575 = vmatpush1.msra.mxu0 %v2574
    %2576 = vmatprep.subr.mxu0 0.0
    %v2577 = vand.u32 %v72, 4294901760
    %2578 = vmatpush1.msra.mxu0 %v2577
    %2579 = vmatprep.subr.mxu0 0.0
    %v2580 = vand.u32 %v73, 4294901760
    %2581 = vmatpush1.msra.mxu0 %v2580
    %2582 = vmatprep.subr.mxu0 0.0
    %v2583 = vand.u32 %v74, 4294901760
    %2584 = vmatpush1.msra.mxu0 %v2583
    %2585 = vmatprep.subr.mxu0 0.0
    %v2586 = vand.u32 %v75, 4294901760
    %2587 = vmatpush1.msra.mxu0 %v2586
    %2588 = vmatprep.subr.mxu0 0.0
    %v2589 = vand.u32 %v76, 4294901760
    %2590 = vmatpush1.msra.mxu0 %v2589
    %2591 = vmatprep.subr.mxu0 0.0
    %v2592 = vand.u32 %v77, 4294901760
    %2593 = vmatpush1.msra.mxu0 %v2592
    %2594 = vmatprep.subr.mxu0 0.0
    %v2595 = vand.u32 %v78, 4294901760
    %2596 = vmatpush1.msra.mxu0 %v2595
    %2597 = vmatprep.subr.mxu0 0.0
    %v2598 = vand.u32 %v79, 4294901760
    %2599 = vmatpush1.msra.mxu0 %v2598
    %2600 = vmatprep.subr.mxu0 0.0
    %v2601 = vand.u32 %v80, 4294901760
    %2602 = vmatpush1.msra.mxu0 %v2601
    %2603 = vmatprep.subr.mxu0 0.0
    %v2604 = vand.u32 %v81, 4294901760
    %2605 = vmatpush1.msra.mxu0 %v2604
    %2606 = vmatprep.subr.mxu0 0.0
    %v2607 = vand.u32 %v82, 4294901760
    %2608 = vmatpush1.msra.mxu0 %v2607
    %2609 = vmatprep.subr.mxu0 0.0
    %v2610 = vand.u32 %v83, 4294901760
    %2611 = vmatpush1.msra.mxu0 %v2610
    %2612 = vmatprep.subr.mxu0 0.0
    %v2613 = vand.u32 %v84, 4294901760
    %2614 = vmatpush1.msra.mxu0 %v2613
    %2615 = vmatprep.subr.mxu0 0.0
    %2616 = vmatpush1.msra.mxu0 0.0
    %2617 = vmatprep.subr.mxu0 0.0
    %2618 = vmatpush1.msra.mxu0 0.0
    %2619 = vmatprep.subr.mxu0 0.0
    %2620 = vmatpush1.msra.mxu0 0.0
    %2621 = vmatprep.subr.mxu0 0.0
    %2622 = vmatpush1.msra.mxu0 0.0
    %2623 = vmatprep.subr.mxu0 0.0
    %2624 = vmatpush1.msra.mxu0 0.0
    %2625 = vmatprep.subr.mxu0 0.0
    %2626 = vmatpush1.msra.mxu0 0.0
    %2627 = vmatprep.subr.mxu0 0.0
    %2628 = vmatpush1.msra.mxu0 0.0
    %2629 = vmatprep.subr.mxu0 0.0
    %2630 = vmatpush1.msra.mxu0 0.0
    %2631 = vmatprep.subr.mxu0 0.0
    %2632 = vmatpush1.msra.mxu0 0.0
    %2633 = vmatprep.subr.mxu0 0.0
    %2634 = vmatpush1.msra.mxu0 0.0
    %2635 = vmatprep.subr.mxu0 0.0
    %2636 = vmatpush1.msra.mxu0 0.0
    %2637 = vmatprep.subr.mxu0 0.0
    %2638 = vmatpush1.msra.mxu0 0.0
    %2639 = vmatprep.subr.mxu0 0.0
    %2640 = vmatpush1.msra.mxu0 0.0
    %2641 = vmatprep.subr.mxu0 0.0
    %2642 = vmatpush1.msra.mxu0 0.0
    %2643 = vmatprep.subr.mxu0 0.0
    %2644 = vmatpush1.msra.mxu0 0.0
    %2645 = vmatprep.subr.mxu0 0.0
    %2646 = vmatpush1.msra.mxu0 0.0
    %2647 = vmatprep.mubr.f32.mxu0 0.0
    %v2648 = vand.u32 %v2008, 4294901760
    %2649 = vmatmul.mubr.f32.gmra.mrb[0].mxu0 %v2648
    %v2650 = vpop.f32.mrb[0].mxu0
    %v2651 = vadd.f32 %v2564, %v2650
    %v2652 = vpop.f32.mrb[0].mxu0
    %2653 = vdwg.mxu0
    %2654 = vst [vmem:[#allocation8] sm:$0xf] %v2651
    %s2655 = scalar_lea.vmem [#allocation2], 4
    %v2656 = vld [vmem:[%s2655] sm:$0xf]
    %2657 = vmatprep.subr.mxu0 0.0
    %v2658 = vand.u32 %v85, 4294901760
    %2659 = vmatpush1.msra.mxu0 %v2658
    %2660 = vmatprep.subr.mxu0 0.0
    %v2661 = vand.u32 %v86, 4294901760
    %2662 = vmatpush1.msra.mxu0 %v2661
    %2663 = vmatprep.subr.mxu0 0.0
    %v2664 = vand.u32 %v87, 4294901760
    %2665 = vmatpush1.msra.mxu0 %v2664
    %2666 = vmatprep.subr.mxu0 0.0
    %v2667 = vand.u32 %v88, 4294901760
    %2668 = vmatpush1.msra.mxu0 %v2667
    %2669 = vmatprep.subr.mxu0 0.0
    %v2670 = vand.u32 %v89, 4294901760
    %2671 = vmatpush1.msra.mxu0 %v2670
    %2672 = vmatprep.subr.mxu0 0.0
    %v2673 = vand.u32 %v90, 4294901760
    %2674 = vmatpush1.msra.mxu0 %v2673
    %2675 = vmatprep.subr.mxu0 0.0
    %v2676 = vand.u32 %v91, 4294901760
    %2677 = vmatpush1.msra.mxu0 %v2676
    %2678 = vmatprep.subr.mxu0 0.0
    %v2679 = vand.u32 %v92, 4294901760
    %2680 = vmatpush1.msra.mxu0 %v2679
    %2681 = vmatprep.subr.mxu0 0.0
    %v2682 = vand.u32 %v93, 4294901760
    %2683 = vmatpush1.msra.mxu0 %v2682
    %2684 = vmatprep.subr.mxu0 0.0
    %v2685 = vand.u32 %v94, 4294901760
    %2686 = vmatpush1.msra.mxu0 %v2685
    %2687 = vmatprep.subr.mxu0 0.0
    %v2688 = vand.u32 %v95, 4294901760
    %2689 = vmatpush1.msra.mxu0 %v2688
    %2690 = vmatprep.subr.mxu0 0.0
    %v2691 = vand.u32 %v96, 4294901760
    %2692 = vmatpush1.msra.mxu0 %v2691
    %2693 = vmatprep.subr.mxu0 0.0
    %v2694 = vand.u32 %v97, 4294901760
    %2695 = vmatpush1.msra.mxu0 %v2694
    %2696 = vmatprep.subr.mxu0 0.0
    %v2697 = vand.u32 %v98, 4294901760
    %2698 = vmatpush1.msra.mxu0 %v2697
    %2699 = vmatprep.subr.mxu0 0.0
    %v2700 = vand.u32 %v99, 4294901760
    %2701 = vmatpush1.msra.mxu0 %v2700
    %2702 = vmatprep.subr.mxu0 0.0
    %v2703 = vand.u32 %v100, 4294901760
    %2704 = vmatpush1.msra.mxu0 %v2703
    %2705 = vmatprep.subr.mxu0 0.0
    %2706 = vmatpush1.msra.mxu0 0.0
    %2707 = vmatprep.subr.mxu0 0.0
    %2708 = vmatpush1.msra.mxu0 0.0
    %2709 = vmatprep.subr.mxu0 0.0
    %2710 = vmatpush1.msra.mxu0 0.0
    %2711 = vmatprep.subr.mxu0 0.0
    %2712 = vmatpush1.msra.mxu0 0.0
    %2713 = vmatprep.subr.mxu0 0.0
    %2714 = vmatpush1.msra.mxu0 0.0
    %2715 = vmatprep.subr.mxu0 0.0
    %2716 = vmatpush1.msra.mxu0 0.0
    %2717 = vmatprep.subr.mxu0 0.0
    %2718 = vmatpush1.msra.mxu0 0.0
    %2719 = vmatprep.subr.mxu0 0.0
    %2720 = vmatpush1.msra.mxu0 0.0
    %2721 = vmatprep.subr.mxu0 0.0
    %2722 = vmatpush1.msra.mxu0 0.0
    %2723 = vmatprep.subr.mxu0 0.0
    %2724 = vmatpush1.msra.mxu0 0.0
    %2725 = vmatprep.subr.mxu0 0.0
    %2726 = vmatpush1.msra.mxu0 0.0
    %2727 = vmatprep.subr.mxu0 0.0
    %2728 = vmatpush1.msra.mxu0 0.0
    %2729 = vmatprep.subr.mxu0 0.0
    %2730 = vmatpush1.msra.mxu0 0.0
    %2731 = vmatprep.subr.mxu0 0.0
    %2732 = vmatpush1.msra.mxu0 0.0
    %2733 = vmatprep.subr.mxu0 0.0
    %2734 = vmatpush1.msra.mxu0 0.0
    %2735 = vmatprep.subr.mxu0 0.0
    %2736 = vmatpush1.msra.mxu0 0.0
    %2737 = vmatprep.mubr.f32.mxu0 0.0
    %v2738 = vand.u32 %v2656, 4294901760
    %v2739 = vsub.f32 %v2656, %v2738
    %v2740 = vand.u32 %v2739, 4294901760
    %v2741 = vsub.f32 %v2739, %v2740
    %v2742 = vand.u32 %v2741, 4294901760
    %2743 = vmatmul.mubr.f32.gmra.mrb[0].mxu0 %v2742
    %v2744 = vpop.f32.mrb[0].mxu0
    %v2745 = vadd.f32 0.0, %v2744
    %v2746 = vpop.f32.mrb[0].mxu0
    %2747 = vdwg.mxu0
    %2748 = vmatprep.subr.mxu0 0.0
    %v2749 = vand.u32 %v85, 4294901760
    %v2750 = vsub.f32 %v85, %v2749
    %v2751 = vand.u32 %v2750, 4294901760
    %v2752 = vsub.f32 %v2750, %v2751
    %v2753 = vand.u32 %v2752, 4294901760
    %2754 = vmatpush1.msra.mxu0 %v2753
    %2755 = vmatprep.subr.mxu0 0.0
    %v2756 = vand.u32 %v86, 4294901760
    %v2757 = vsub.f32 %v86, %v2756
    %v2758 = vand.u32 %v2757, 4294901760
    %v2759 = vsub.f32 %v2757, %v2758
    %v2760 = vand.u32 %v2759, 4294901760
    %2761 = vmatpush1.msra.mxu0 %v2760
    %2762 = vmatprep.subr.mxu0 0.0
    %v2763 = vand.u32 %v87, 4294901760
    %v2764 = vsub.f32 %v87, %v2763
    %v2765 = vand.u32 %v2764, 4294901760
    %v2766 = vsub.f32 %v2764, %v2765
    %v2767 = vand.u32 %v2766, 4294901760
    %2768 = vmatpush1.msra.mxu0 %v2767
    %2769 = vmatprep.subr.mxu0 0.0
    %v2770 = vand.u32 %v88, 4294901760
    %v2771 = vsub.f32 %v88, %v2770
    %v2772 = vand.u32 %v2771, 4294901760
    %v2773 = vsub.f32 %v2771, %v2772
    %v2774 = vand.u32 %v2773, 4294901760
    %2775 = vmatpush1.msra.mxu0 %v2774
    %2776 = vmatprep.subr.mxu0 0.0
    %v2777 = vand.u32 %v89, 4294901760
    %v2778 = vsub.f32 %v89, %v2777
    %v2779 = vand.u32 %v2778, 4294901760
    %v2780 = vsub.f32 %v2778, %v2779
    %v2781 = vand.u32 %v2780, 4294901760
    %2782 = vmatpush1.msra.mxu0 %v2781
    %2783 = vmatprep.subr.mxu0 0.0
    %v2784 = vand.u32 %v90, 4294901760
    %v2785 = vsub.f32 %v90, %v2784
    %v2786 = vand.u32 %v2785, 4294901760
    %v2787 = vsub.f32 %v2785, %v2786
    %v2788 = vand.u32 %v2787, 4294901760
    %2789 = vmatpush1.msra.mxu0 %v2788
    %2790 = vmatprep.subr.mxu0 0.0
    %v2791 = vand.u32 %v91, 4294901760
    %v2792 = vsub.f32 %v91, %v2791
    %v2793 = vand.u32 %v2792, 4294901760
    %v2794 = vsub.f32 %v2792, %v2793
    %v2795 = vand.u32 %v2794, 4294901760
    %2796 = vmatpush1.msra.mxu0 %v2795
    %2797 = vmatprep.subr.mxu0 0.0
    %v2798 = vand.u32 %v92, 4294901760
    %v2799 = vsub.f32 %v92, %v2798
    %v2800 = vand.u32 %v2799, 4294901760
    %v2801 = vsub.f32 %v2799, %v2800
    %v2802 = vand.u32 %v2801, 4294901760
    %2803 = vmatpush1.msra.mxu0 %v2802
    %2804 = vmatprep.subr.mxu0 0.0
    %v2805 = vand.u32 %v93, 4294901760
    %v2806 = vsub.f32 %v93, %v2805
    %v2807 = vand.u32 %v2806, 4294901760
    %v2808 = vsub.f32 %v2806, %v2807
    %v2809 = vand.u32 %v2808, 4294901760
    %2810 = vmatpush1.msra.mxu0 %v2809
    %2811 = vmatprep.subr.mxu0 0.0
    %v2812 = vand.u32 %v94, 4294901760
    %v2813 = vsub.f32 %v94, %v2812
    %v2814 = vand.u32 %v2813, 4294901760
    %v2815 = vsub.f32 %v2813, %v2814
    %v2816 = vand.u32 %v2815, 4294901760
    %2817 = vmatpush1.msra.mxu0 %v2816
    %2818 = vmatprep.subr.mxu0 0.0
    %v2819 = vand.u32 %v95, 4294901760
    %v2820 = vsub.f32 %v95, %v2819
    %v2821 = vand.u32 %v2820, 4294901760
    %v2822 = vsub.f32 %v2820, %v2821
    %v2823 = vand.u32 %v2822, 4294901760
    %2824 = vmatpush1.msra.mxu0 %v2823
    %2825 = vmatprep.subr.mxu0 0.0
    %v2826 = vand.u32 %v96, 4294901760
    %v2827 = vsub.f32 %v96, %v2826
    %v2828 = vand.u32 %v2827, 4294901760
    %v2829 = vsub.f32 %v2827, %v2828
    %v2830 = vand.u32 %v2829, 4294901760
    %2831 = vmatpush1.msra.mxu0 %v2830
    %2832 = vmatprep.subr.mxu0 0.0
    %v2833 = vand.u32 %v97, 4294901760
    %v2834 = vsub.f32 %v97, %v2833
    %v2835 = vand.u32 %v2834, 4294901760
    %v2836 = vsub.f32 %v2834, %v2835
    %v2837 = vand.u32 %v2836, 4294901760
    %2838 = vmatpush1.msra.mxu0 %v2837
    %2839 = vmatprep.subr.mxu0 0.0
    %v2840 = vand.u32 %v98, 4294901760
    %v2841 = vsub.f32 %v98, %v2840
    %v2842 = vand.u32 %v2841, 4294901760
    %v2843 = vsub.f32 %v2841, %v2842
    %v2844 = vand.u32 %v2843, 4294901760
    %2845 = vmatpush1.msra.mxu0 %v2844
    %2846 = vmatprep.subr.mxu0 0.0
    %v2847 = vand.u32 %v99, 4294901760
    %v2848 = vsub.f32 %v99, %v2847
    %v2849 = vand.u32 %v2848, 4294901760
    %v2850 = vsub.f32 %v2848, %v2849
    %v2851 = vand.u32 %v2850, 4294901760
    %2852 = vmatpush1.msra.mxu0 %v2851
    %2853 = vmatprep.subr.mxu0 0.0
    %v2854 = vand.u32 %v100, 4294901760
    %v2855 = vsub.f32 %v100, %v2854
    %v2856 = vand.u32 %v2855, 4294901760
    %v2857 = vsub.f32 %v2855, %v2856
    %v2858 = vand.u32 %v2857, 4294901760
    %2859 = vmatpush1.msra.mxu0 %v2858
    %2860 = vmatprep.subr.mxu0 0.0
    %2861 = vmatpush1.msra.mxu0 0.0
    %2862 = vmatprep.subr.mxu0 0.0
    %2863 = vmatpush1.msra.mxu0 0.0
    %2864 = vmatprep.subr.mxu0 0.0
    %2865 = vmatpush1.msra.mxu0 0.0
    %2866 = vmatprep.subr.mxu0 0.0
    %2867 = vmatpush1.msra.mxu0 0.0
    %2868 = vmatprep.subr.mxu0 0.0
    %2869 = vmatpush1.msra.mxu0 0.0
    %2870 = vmatprep.subr.mxu0 0.0
    %2871 = vmatpush1.msra.mxu0 0.0
    %2872 = vmatprep.subr.mxu0 0.0
    %2873 = vmatpush1.msra.mxu0 0.0
    %2874 = vmatprep.subr.mxu0 0.0
    %2875 = vmatpush1.msra.mxu0 0.0
    %2876 = vmatprep.subr.mxu0 0.0
    %2877 = vmatpush1.msra.mxu0 0.0
    %2878 = vmatprep.subr.mxu0 0.0
    %2879 = vmatpush1.msra.mxu0 0.0
    %2880 = vmatprep.subr.mxu0 0.0
    %2881 = vmatpush1.msra.mxu0 0.0
    %2882 = vmatprep.subr.mxu0 0.0
    %2883 = vmatpush1.msra.mxu0 0.0
    %2884 = vmatprep.subr.mxu0 0.0
    %2885 = vmatpush1.msra.mxu0 0.0
    %2886 = vmatprep.subr.mxu0 0.0
    %2887 = vmatpush1.msra.mxu0 0.0
    %2888 = vmatprep.subr.mxu0 0.0
    %2889 = vmatpush1.msra.mxu0 0.0
    %2890 = vmatprep.subr.mxu0 0.0
    %2891 = vmatpush1.msra.mxu0 0.0
    %2892 = vmatprep.mubr.f32.mxu0 0.0
    %v2893 = vand.u32 %v2656, 4294901760
    %2894 = vmatmul.mubr.f32.gmra.mrb[0].mxu0 %v2893
    %v2895 = vpop.f32.mrb[0].mxu0
    %v2896 = vadd.f32 %v2745, %v2895
    %v2897 = vpop.f32.mrb[0].mxu0
    %2898 = vdwg.mxu0
    %2899 = vmatprep.subr.mxu0 0.0
    %v2900 = vand.u32 %v85, 4294901760
    %v2901 = vsub.f32 %v85, %v2900
    %2902 = vmatpush1.msra.mxu0 %v2901
    %2903 = vmatprep.subr.mxu0 0.0
    %v2904 = vand.u32 %v86, 4294901760
    %v2905 = vsub.f32 %v86, %v2904
    %2906 = vmatpush1.msra.mxu0 %v2905
    %2907 = vmatprep.subr.mxu0 0.0
    %v2908 = vand.u32 %v87, 4294901760
    %v2909 = vsub.f32 %v87, %v2908
    %2910 = vmatpush1.msra.mxu0 %v2909
    %2911 = vmatprep.subr.mxu0 0.0
    %v2912 = vand.u32 %v88, 4294901760
    %v2913 = vsub.f32 %v88, %v2912
    %2914 = vmatpush1.msra.mxu0 %v2913
    %2915 = vmatprep.subr.mxu0 0.0
    %v2916 = vand.u32 %v89, 4294901760
    %v2917 = vsub.f32 %v89, %v2916
    %2918 = vmatpush1.msra.mxu0 %v2917
    %2919 = vmatprep.subr.mxu0 0.0
    %v2920 = vand.u32 %v90, 4294901760
    %v2921 = vsub.f32 %v90, %v2920
    %2922 = vmatpush1.msra.mxu0 %v2921
    %2923 = vmatprep.subr.mxu0 0.0
    %v2924 = vand.u32 %v91, 4294901760
    %v2925 = vsub.f32 %v91, %v2924
    %2926 = vmatpush1.msra.mxu0 %v2925
    %2927 = vmatprep.subr.mxu0 0.0
    %v2928 = vand.u32 %v92, 4294901760
    %v2929 = vsub.f32 %v92, %v2928
    %2930 = vmatpush1.msra.mxu0 %v2929
    %2931 = vmatprep.subr.mxu0 0.0
    %v2932 = vand.u32 %v93, 4294901760
    %v2933 = vsub.f32 %v93, %v2932
    %2934 = vmatpush1.msra.mxu0 %v2933
    %2935 = vmatprep.subr.mxu0 0.0
    %v2936 = vand.u32 %v94, 4294901760
    %v2937 = vsub.f32 %v94, %v2936
    %2938 = vmatpush1.msra.mxu0 %v2937
    %2939 = vmatprep.subr.mxu0 0.0
    %v2940 = vand.u32 %v95, 4294901760
    %v2941 = vsub.f32 %v95, %v2940
    %2942 = vmatpush1.msra.mxu0 %v2941
    %2943 = vmatprep.subr.mxu0 0.0
    %v2944 = vand.u32 %v96, 4294901760
    %v2945 = vsub.f32 %v96, %v2944
    %2946 = vmatpush1.msra.mxu0 %v2945
    %2947 = vmatprep.subr.mxu0 0.0
    %v2948 = vand.u32 %v97, 4294901760
    %v2949 = vsub.f32 %v97, %v2948
    %2950 = vmatpush1.msra.mxu0 %v2949
    %2951 = vmatprep.subr.mxu0 0.0
    %v2952 = vand.u32 %v98, 4294901760
    %v2953 = vsub.f32 %v98, %v2952
    %2954 = vmatpush1.msra.mxu0 %v2953
    %2955 = vmatprep.subr.mxu0 0.0
    %v2956 = vand.u32 %v99, 4294901760
    %v2957 = vsub.f32 %v99, %v2956
    %2958 = vmatpush1.msra.mxu0 %v2957
    %2959 = vmatprep.subr.mxu0 0.0
    %v2960 = vand.u32 %v100, 4294901760
    %v2961 = vsub.f32 %v100, %v2960
    %2962 = vmatpush1.msra.mxu0 %v2961
    %2963 = vmatprep.subr.mxu0 0.0
    %2964 = vmatpush1.msra.mxu0 0.0
    %2965 = vmatprep.subr.mxu0 0.0
    %2966 = vmatpush1.msra.mxu0 0.0
    %2967 = vmatprep.subr.mxu0 0.0
    %2968 = vmatpush1.msra.mxu0 0.0
    %2969 = vmatprep.subr.mxu0 0.0
    %2970 = vmatpush1.msra.mxu0 0.0
    %2971 = vmatprep.subr.mxu0 0.0
    %2972 = vmatpush1.msra.mxu0 0.0
    %2973 = vmatprep.subr.mxu0 0.0
    %2974 = vmatpush1.msra.mxu0 0.0
    %2975 = vmatprep.subr.mxu0 0.0
    %2976 = vmatpush1.msra.mxu0 0.0
    %2977 = vmatprep.subr.mxu0 0.0
    %2978 = vmatpush1.msra.mxu0 0.0
    %2979 = vmatprep.subr.mxu0 0.0
    %2980 = vmatpush1.msra.mxu0 0.0
    %2981 = vmatprep.subr.mxu0 0.0
    %2982 = vmatpush1.msra.mxu0 0.0
    %2983 = vmatprep.subr.mxu0 0.0
    %2984 = vmatpush1.msra.mxu0 0.0
    %2985 = vmatprep.subr.mxu0 0.0
    %2986 = vmatpush1.msra.mxu0 0.0
    %2987 = vmatprep.subr.mxu0 0.0
    %2988 = vmatpush1.msra.mxu0 0.0
    %2989 = vmatprep.subr.mxu0 0.0
    %2990 = vmatpush1.msra.mxu0 0.0
    %2991 = vmatprep.subr.mxu0 0.0
    %2992 = vmatpush1.msra.mxu0 0.0
    %2993 = vmatprep.subr.mxu0 0.0
    %2994 = vmatpush1.msra.mxu0 0.0
    %2995 = vmatprep.mubr.f32.mxu0 0.0
    %v2996 = vand.u32 %v2656, 4294901760
    %v2997 = vsub.f32 %v2656, %v2996
    %2998 = vmatmul.mubr.f32.gmra.mrb[0].mxu0 %v2997
    %v2999 = vpop.f32.mrb[0].mxu0
    %v3000 = vadd.f32 %v2896, %v2999
    %v3001 = vpop.f32.mrb[0].mxu0
    %3002 = vdwg.mxu0
    %3003 = vmatprep.subr.mxu0 0.0
    %v3004 = vand.u32 %v85, 4294901760
    %3005 = vmatpush1.msra.mxu0 %v3004
    %3006 = vmatprep.subr.mxu0 0.0
    %v3007 = vand.u32 %v86, 4294901760
    %3008 = vmatpush1.msra.mxu0 %v3007
    %3009 = vmatprep.subr.mxu0 0.0
    %v3010 = vand.u32 %v87, 4294901760
    %3011 = vmatpush1.msra.mxu0 %v3010
    %3012 = vmatprep.subr.mxu0 0.0
    %v3013 = vand.u32 %v88, 4294901760
    %3014 = vmatpush1.msra.mxu0 %v3013
    %3015 = vmatprep.subr.mxu0 0.0
    %v3016 = vand.u32 %v89, 4294901760
    %3017 = vmatpush1.msra.mxu0 %v3016
    %3018 = vmatprep.subr.mxu0 0.0
    %v3019 = vand.u32 %v90, 4294901760
    %3020 = vmatpush1.msra.mxu0 %v3019
    %3021 = vmatprep.subr.mxu0 0.0
    %v3022 = vand.u32 %v91, 4294901760
    %3023 = vmatpush1.msra.mxu0 %v3022
    %3024 = vmatprep.subr.mxu0 0.0
    %v3025 = vand.u32 %v92, 4294901760
    %3026 = vmatpush1.msra.mxu0 %v3025
    %3027 = vmatprep.subr.mxu0 0.0
    %v3028 = vand.u32 %v93, 4294901760
    %3029 = vmatpush1.msra.mxu0 %v3028
    %3030 = vmatprep.subr.mxu0 0.0
    %v3031 = vand.u32 %v94, 4294901760
    %3032 = vmatpush1.msra.mxu0 %v3031
    %3033 = vmatprep.subr.mxu0 0.0
    %v3034 = vand.u32 %v95, 4294901760
    %3035 = vmatpush1.msra.mxu0 %v3034
    %3036 = vmatprep.subr.mxu0 0.0
    %v3037 = vand.u32 %v96, 4294901760
    %3038 = vmatpush1.msra.mxu0 %v3037
    %3039 = vmatprep.subr.mxu0 0.0
    %v3040 = vand.u32 %v97, 4294901760
    %3041 = vmatpush1.msra.mxu0 %v3040
    %3042 = vmatprep.subr.mxu0 0.0
    %v3043 = vand.u32 %v98, 4294901760
    %3044 = vmatpush1.msra.mxu0 %v3043
    %3045 = vmatprep.subr.mxu0 0.0
    %v3046 = vand.u32 %v99, 4294901760
    %3047 = vmatpush1.msra.mxu0 %v3046
    %3048 = vmatprep.subr.mxu0 0.0
    %v3049 = vand.u32 %v100, 4294901760
    %3050 = vmatpush1.msra.mxu0 %v3049
    %3051 = vmatprep.subr.mxu0 0.0
    %3052 = vmatpush1.msra.mxu0 0.0
    %3053 = vmatprep.subr.mxu0 0.0
    %3054 = vmatpush1.msra.mxu0 0.0
    %3055 = vmatprep.subr.mxu0 0.0
    %3056 = vmatpush1.msra.mxu0 0.0
    %3057 = vmatprep.subr.mxu0 0.0
    %3058 = vmatpush1.msra.mxu0 0.0
    %3059 = vmatprep.subr.mxu0 0.0
    %3060 = vmatpush1.msra.mxu0 0.0
    %3061 = vmatprep.subr.mxu0 0.0
    %3062 = vmatpush1.msra.mxu0 0.0
    %3063 = vmatprep.subr.mxu0 0.0
    %3064 = vmatpush1.msra.mxu0 0.0
    %3065 = vmatprep.subr.mxu0 0.0
    %3066 = vmatpush1.msra.mxu0 0.0
    %3067 = vmatprep.subr.mxu0 0.0
    %3068 = vmatpush1.msra.mxu0 0.0
    %3069 = vmatprep.subr.mxu0 0.0
    %3070 = vmatpush1.msra.mxu0 0.0
    %3071 = vmatprep.subr.mxu0 0.0
    %3072 = vmatpush1.msra.mxu0 0.0
    %3073 = vmatprep.subr.mxu0 0.0
    %3074 = vmatpush1.msra.mxu0 0.0
    %3075 = vmatprep.subr.mxu0 0.0
    %3076 = vmatpush1.msra.mxu0 0.0
    %3077 = vmatprep.subr.mxu0 0.0
    %3078 = vmatpush1.msra.mxu0 0.0
    %3079 = vmatprep.subr.mxu0 0.0
    %3080 = vmatpush1.msra.mxu0 0.0
    %3081 = vmatprep.subr.mxu0 0.0
    %3082 = vmatpush1.msra.mxu0 0.0
    %3083 = vmatprep.mubr.f32.mxu0 0.0
    %v3084 = vand.u32 %v2656, 4294901760
    %v3085 = vsub.f32 %v2656, %v3084
    %v3086 = vand.u32 %v3085, 4294901760
    %3087 = vmatmul.mubr.f32.gmra.mrb[0].mxu0 %v3086
    %v3088 = vpop.f32.mrb[0].mxu0
    %v3089 = vadd.f32 %v3000, %v3088
    %v3090 = vpop.f32.mrb[0].mxu0
    %3091 = vdwg.mxu0
    %3092 = vmatprep.subr.mxu0 0.0
    %v3093 = vand.u32 %v85, 4294901760
    %v3094 = vsub.f32 %v85, %v3093
    %v3095 = vand.u32 %v3094, 4294901760
    %3096 = vmatpush1.msra.mxu0 %v3095
    %3097 = vmatprep.subr.mxu0 0.0
    %v3098 = vand.u32 %v86, 4294901760
    %v3099 = vsub.f32 %v86, %v3098
    %v3100 = vand.u32 %v3099, 4294901760
    %3101 = vmatpush1.msra.mxu0 %v3100
    %3102 = vmatprep.subr.mxu0 0.0
    %v3103 = vand.u32 %v87, 4294901760
    %v3104 = vsub.f32 %v87, %v3103
    %v3105 = vand.u32 %v3104, 4294901760
    %3106 = vmatpush1.msra.mxu0 %v3105
    %3107 = vmatprep.subr.mxu0 0.0
    %v3108 = vand.u32 %v88, 4294901760
    %v3109 = vsub.f32 %v88, %v3108
    %v3110 = vand.u32 %v3109, 4294901760
    %3111 = vmatpush1.msra.mxu0 %v3110
    %3112 = vmatprep.subr.mxu0 0.0
    %v3113 = vand.u32 %v89, 4294901760
    %v3114 = vsub.f32 %v89, %v3113
    %v3115 = vand.u32 %v3114, 4294901760
    %3116 = vmatpush1.msra.mxu0 %v3115
    %3117 = vmatprep.subr.mxu0 0.0
    %v3118 = vand.u32 %v90, 4294901760
    %v3119 = vsub.f32 %v90, %v3118
    %v3120 = vand.u32 %v3119, 4294901760
    %3121 = vmatpush1.msra.mxu0 %v3120
    %3122 = vmatprep.subr.mxu0 0.0
    %v3123 = vand.u32 %v91, 4294901760
    %v3124 = vsub.f32 %v91, %v3123
    %v3125 = vand.u32 %v3124, 4294901760
    %3126 = vmatpush1.msra.mxu0 %v3125
    %3127 = vmatprep.subr.mxu0 0.0
    %v3128 = vand.u32 %v92, 4294901760
    %v3129 = vsub.f32 %v92, %v3128
    %v3130 = vand.u32 %v3129, 4294901760
    %3131 = vmatpush1.msra.mxu0 %v3130
    %3132 = vmatprep.subr.mxu0 0.0
    %v3133 = vand.u32 %v93, 4294901760
    %v3134 = vsub.f32 %v93, %v3133
    %v3135 = vand.u32 %v3134, 4294901760
    %3136 = vmatpush1.msra.mxu0 %v3135
    %3137 = vmatprep.subr.mxu0 0.0
    %v3138 = vand.u32 %v94, 4294901760
    %v3139 = vsub.f32 %v94, %v3138
    %v3140 = vand.u32 %v3139, 4294901760
    %3141 = vmatpush1.msra.mxu0 %v3140
    %3142 = vmatprep.subr.mxu0 0.0
    %v3143 = vand.u32 %v95, 4294901760
    %v3144 = vsub.f32 %v95, %v3143
    %v3145 = vand.u32 %v3144, 4294901760
    %3146 = vmatpush1.msra.mxu0 %v3145
    %3147 = vmatprep.subr.mxu0 0.0
    %v3148 = vand.u32 %v96, 4294901760
    %v3149 = vsub.f32 %v96, %v3148
    %v3150 = vand.u32 %v3149, 4294901760
    %3151 = vmatpush1.msra.mxu0 %v3150
    %3152 = vmatprep.subr.mxu0 0.0
    %v3153 = vand.u32 %v97, 4294901760
    %v3154 = vsub.f32 %v97, %v3153
    %v3155 = vand.u32 %v3154, 4294901760
    %3156 = vmatpush1.msra.mxu0 %v3155
    %3157 = vmatprep.subr.mxu0 0.0
    %v3158 = vand.u32 %v98, 4294901760
    %v3159 = vsub.f32 %v98, %v3158
    %v3160 = vand.u32 %v3159, 4294901760
    %3161 = vmatpush1.msra.mxu0 %v3160
    %3162 = vmatprep.subr.mxu0 0.0
    %v3163 = vand.u32 %v99, 4294901760
    %v3164 = vsub.f32 %v99, %v3163
    %v3165 = vand.u32 %v3164, 4294901760
    %3166 = vmatpush1.msra.mxu0 %v3165
    %3167 = vmatprep.subr.mxu0 0.0
    %v3168 = vand.u32 %v100, 4294901760
    %v3169 = vsub.f32 %v100, %v3168
    %v3170 = vand.u32 %v3169, 4294901760
    %3171 = vmatpush1.msra.mxu0 %v3170
    %3172 = vmatprep.subr.mxu0 0.0
    %3173 = vmatpush1.msra.mxu0 0.0
    %3174 = vmatprep.subr.mxu0 0.0
    %3175 = vmatpush1.msra.mxu0 0.0
    %3176 = vmatprep.subr.mxu0 0.0
    %3177 = vmatpush1.msra.mxu0 0.0
    %3178 = vmatprep.subr.mxu0 0.0
    %3179 = vmatpush1.msra.mxu0 0.0
    %3180 = vmatprep.subr.mxu0 0.0
    %3181 = vmatpush1.msra.mxu0 0.0
    %3182 = vmatprep.subr.mxu0 0.0
    %3183 = vmatpush1.msra.mxu0 0.0
    %3184 = vmatprep.subr.mxu0 0.0
    %3185 = vmatpush1.msra.mxu0 0.0
    %3186 = vmatprep.subr.mxu0 0.0
    %3187 = vmatpush1.msra.mxu0 0.0
    %3188 = vmatprep.subr.mxu0 0.0
    %3189 = vmatpush1.msra.mxu0 0.0
    %3190 = vmatprep.subr.mxu0 0.0
    %3191 = vmatpush1.msra.mxu0 0.0
    %3192 = vmatprep.subr.mxu0 0.0
    %3193 = vmatpush1.msra.mxu0 0.0
    %3194 = vmatprep.subr.mxu0 0.0
    %3195 = vmatpush1.msra.mxu0 0.0
    %3196 = vmatprep.subr.mxu0 0.0
    %3197 = vmatpush1.msra.mxu0 0.0
    %3198 = vmatprep.subr.mxu0 0.0
    %3199 = vmatpush1.msra.mxu0 0.0
    %3200 = vmatprep.subr.mxu0 0.0
    %3201 = vmatpush1.msra.mxu0 0.0
    %3202 = vmatprep.subr.mxu0 0.0
    %3203 = vmatpush1.msra.mxu0 0.0
    %3204 = vmatprep.mubr.f32.mxu0 0.0
    %v3205 = vand.u32 %v2656, 4294901760
    %3206 = vmatmul.mubr.f32.gmra.mrb[0].mxu0 %v3205
    %v3207 = vpop.f32.mrb[0].mxu0
    %v3208 = vadd.f32 %v3089, %v3207
    %v3209 = vpop.f32.mrb[0].mxu0
    %3210 = vdwg.mxu0
    %3211 = vmatprep.subr.mxu0 0.0
    %v3212 = vand.u32 %v85, 4294901760
    %3213 = vmatpush1.msra.mxu0 %v3212
    %3214 = vmatprep.subr.mxu0 0.0
    %v3215 = vand.u32 %v86, 4294901760
    %3216 = vmatpush1.msra.mxu0 %v3215
    %3217 = vmatprep.subr.mxu0 0.0
    %v3218 = vand.u32 %v87, 4294901760
    %3219 = vmatpush1.msra.mxu0 %v3218
    %3220 = vmatprep.subr.mxu0 0.0
    %v3221 = vand.u32 %v88, 4294901760
    %3222 = vmatpush1.msra.mxu0 %v3221
    %3223 = vmatprep.subr.mxu0 0.0
    %v3224 = vand.u32 %v89, 4294901760
    %3225 = vmatpush1.msra.mxu0 %v3224
    %3226 = vmatprep.subr.mxu0 0.0
    %v3227 = vand.u32 %v90, 4294901760
    %3228 = vmatpush1.msra.mxu0 %v3227
    %3229 = vmatprep.subr.mxu0 0.0
    %v3230 = vand.u32 %v91, 4294901760
    %3231 = vmatpush1.msra.mxu0 %v3230
    %3232 = vmatprep.subr.mxu0 0.0
    %v3233 = vand.u32 %v92, 4294901760
    %3234 = vmatpush1.msra.mxu0 %v3233
    %3235 = vmatprep.subr.mxu0 0.0
    %v3236 = vand.u32 %v93, 4294901760
    %3237 = vmatpush1.msra.mxu0 %v3236
    %3238 = vmatprep.subr.mxu0 0.0
    %v3239 = vand.u32 %v94, 4294901760
    %3240 = vmatpush1.msra.mxu0 %v3239
    %3241 = vmatprep.subr.mxu0 0.0
    %v3242 = vand.u32 %v95, 4294901760
    %3243 = vmatpush1.msra.mxu0 %v3242
    %3244 = vmatprep.subr.mxu0 0.0
    %v3245 = vand.u32 %v96, 4294901760
    %3246 = vmatpush1.msra.mxu0 %v3245
    %3247 = vmatprep.subr.mxu0 0.0
    %v3248 = vand.u32 %v97, 4294901760
    %3249 = vmatpush1.msra.mxu0 %v3248
    %3250 = vmatprep.subr.mxu0 0.0
    %v3251 = vand.u32 %v98, 4294901760
    %3252 = vmatpush1.msra.mxu0 %v3251
    %3253 = vmatprep.subr.mxu0 0.0
    %v3254 = vand.u32 %v99, 4294901760
    %3255 = vmatpush1.msra.mxu0 %v3254
    %3256 = vmatprep.subr.mxu0 0.0
    %v3257 = vand.u32 %v100, 4294901760
    %3258 = vmatpush1.msra.mxu0 %v3257
    %3259 = vmatprep.subr.mxu0 0.0
    %3260 = vmatpush1.msra.mxu0 0.0
    %3261 = vmatprep.subr.mxu0 0.0
    %3262 = vmatpush1.msra.mxu0 0.0
    %3263 = vmatprep.subr.mxu0 0.0
    %3264 = vmatpush1.msra.mxu0 0.0
    %3265 = vmatprep.subr.mxu0 0.0
    %3266 = vmatpush1.msra.mxu0 0.0
    %3267 = vmatprep.subr.mxu0 0.0
    %3268 = vmatpush1.msra.mxu0 0.0
    %3269 = vmatprep.subr.mxu0 0.0
    %3270 = vmatpush1.msra.mxu0 0.0
    %3271 = vmatprep.subr.mxu0 0.0
    %3272 = vmatpush1.msra.mxu0 0.0
    %3273 = vmatprep.subr.mxu0 0.0
    %3274 = vmatpush1.msra.mxu0 0.0
    %3275 = vmatprep.subr.mxu0 0.0
    %3276 = vmatpush1.msra.mxu0 0.0
    %3277 = vmatprep.subr.mxu0 0.0
    %3278 = vmatpush1.msra.mxu0 0.0
    %3279 = vmatprep.subr.mxu0 0.0
    %3280 = vmatpush1.msra.mxu0 0.0
    %3281 = vmatprep.subr.mxu0 0.0
    %3282 = vmatpush1.msra.mxu0 0.0
    %3283 = vmatprep.subr.mxu0 0.0
    %3284 = vmatpush1.msra.mxu0 0.0
    %3285 = vmatprep.subr.mxu0 0.0
    %3286 = vmatpush1.msra.mxu0 0.0
    %3287 = vmatprep.subr.mxu0 0.0
    %3288 = vmatpush1.msra.mxu0 0.0
    %3289 = vmatprep.subr.mxu0 0.0
    %3290 = vmatpush1.msra.mxu0 0.0
    %3291 = vmatprep.mubr.f32.mxu0 0.0
    %v3292 = vand.u32 %v2656, 4294901760
    %3293 = vmatmul.mubr.f32.gmra.mrb[0].mxu0 %v3292
    %v3294 = vpop.f32.mrb[0].mxu0
    %v3295 = vadd.f32 %v3208, %v3294
    %v3296 = vpop.f32.mrb[0].mxu0
    %3297 = vdwg.mxu0
    %v3298 = vsub.f32 %v2656, %v3295
    %v3299 = vmul.f32 %v3298, %v3298
    %3300 = vmatprep.subr.mxu0 0.0
    %v3301 = vand.u32 %v85, 4294901760
    %3302 = vmatpush1.msra.mxu0 %v3301
    %3303 = vmatprep.subr.mxu0 0.0
    %v3304 = vand.u32 %v86, 4294901760
    %3305 = vmatpush1.msra.mxu0 %v3304
    %3306 = vmatprep.subr.mxu0 0.0
    %v3307 = vand.u32 %v87, 4294901760
    %3308 = vmatpush1.msra.mxu0 %v3307
    %3309 = vmatprep.subr.mxu0 0.0
    %v3310 = vand.u32 %v88, 4294901760
    %3311 = vmatpush1.msra.mxu0 %v3310
    %3312 = vmatprep.subr.mxu0 0.0
    %v3313 = vand.u32 %v89, 4294901760
    %3314 = vmatpush1.msra.mxu0 %v3313
    %3315 = vmatprep.subr.mxu0 0.0
    %v3316 = vand.u32 %v90, 4294901760
    %3317 = vmatpush1.msra.mxu0 %v3316
    %3318 = vmatprep.subr.mxu0 0.0
    %v3319 = vand.u32 %v91, 4294901760
    %3320 = vmatpush1.msra.mxu0 %v3319
    %3321 = vmatprep.subr.mxu0 0.0
    %v3322 = vand.u32 %v92, 4294901760
    %3323 = vmatpush1.msra.mxu0 %v3322
    %3324 = vmatprep.subr.mxu0 0.0
    %v3325 = vand.u32 %v93, 4294901760
    %3326 = vmatpush1.msra.mxu0 %v3325
    %3327 = vmatprep.subr.mxu0 0.0
    %v3328 = vand.u32 %v94, 4294901760
    %3329 = vmatpush1.msra.mxu0 %v3328
    %3330 = vmatprep.subr.mxu0 0.0
    %v3331 = vand.u32 %v95, 4294901760
    %3332 = vmatpush1.msra.mxu0 %v3331
    %3333 = vmatprep.subr.mxu0 0.0
    %v3334 = vand.u32 %v96, 4294901760
    %3335 = vmatpush1.msra.mxu0 %v3334
    %3336 = vmatprep.subr.mxu0 0.0
    %v3337 = vand.u32 %v97, 4294901760
    %3338 = vmatpush1.msra.mxu0 %v3337
    %3339 = vmatprep.subr.mxu0 0.0
    %v3340 = vand.u32 %v98, 4294901760
    %3341 = vmatpush1.msra.mxu0 %v3340
    %3342 = vmatprep.subr.mxu0 0.0
    %v3343 = vand.u32 %v99, 4294901760
    %3344 = vmatpush1.msra.mxu0 %v3343
    %3345 = vmatprep.subr.mxu0 0.0
    %v3346 = vand.u32 %v100, 4294901760
    %3347 = vmatpush1.msra.mxu0 %v3346
    %3348 = vmatprep.subr.mxu0 0.0
    %3349 = vmatpush1.msra.mxu0 0.0
    %3350 = vmatprep.subr.mxu0 0.0
    %3351 = vmatpush1.msra.mxu0 0.0
    %3352 = vmatprep.subr.mxu0 0.0
    %3353 = vmatpush1.msra.mxu0 0.0
    %3354 = vmatprep.subr.mxu0 0.0
    %3355 = vmatpush1.msra.mxu0 0.0
    %3356 = vmatprep.subr.mxu0 0.0
    %3357 = vmatpush1.msra.mxu0 0.0
    %3358 = vmatprep.subr.mxu0 0.0
    %3359 = vmatpush1.msra.mxu0 0.0
    %3360 = vmatprep.subr.mxu0 0.0
    %3361 = vmatpush1.msra.mxu0 0.0
    %3362 = vmatprep.subr.mxu0 0.0
    %3363 = vmatpush1.msra.mxu0 0.0
    %3364 = vmatprep.subr.mxu0 0.0
    %3365 = vmatpush1.msra.mxu0 0.0
    %3366 = vmatprep.subr.mxu0 0.0
    %3367 = vmatpush1.msra.mxu0 0.0
    %3368 = vmatprep.subr.mxu0 0.0
    %3369 = vmatpush1.msra.mxu0 0.0
    %3370 = vmatprep.subr.mxu0 0.0
    %3371 = vmatpush1.msra.mxu0 0.0
    %3372 = vmatprep.subr.mxu0 0.0
    %3373 = vmatpush1.msra.mxu0 0.0
    %3374 = vmatprep.subr.mxu0 0.0
    %3375 = vmatpush1.msra.mxu0 0.0
    %3376 = vmatprep.subr.mxu0 0.0
    %3377 = vmatpush1.msra.mxu0 0.0
    %3378 = vmatprep.subr.mxu0 0.0
    %3379 = vmatpush1.msra.mxu0 0.0
    %3380 = vmatprep.mubr.f32.mxu0 0.0
    %v3381 = vand.u32 %v3299, 4294901760
    %v3382 = vsub.f32 %v3299, %v3381
    %v3383 = vand.u32 %v3382, 4294901760
    %v3384 = vsub.f32 %v3382, %v3383
    %v3385 = vand.u32 %v3384, 4294901760
    %3386 = vmatmul.mubr.f32.gmra.mrb[0].mxu0 %v3385
    %v3387 = vpop.f32.mrb[0].mxu0
    %v3388 = vadd.f32 1e-05, %v3387
    %v3389 = vpop.f32.mrb[0].mxu0
    %3390 = vdwg.mxu0
    %3391 = vmatprep.subr.mxu0 0.0
    %v3392 = vand.u32 %v85, 4294901760
    %v3393 = vsub.f32 %v85, %v3392
    %v3394 = vand.u32 %v3393, 4294901760
    %v3395 = vsub.f32 %v3393, %v3394
    %v3396 = vand.u32 %v3395, 4294901760
    %3397 = vmatpush1.msra.mxu0 %v3396
    %3398 = vmatprep.subr.mxu0 0.0
    %v3399 = vand.u32 %v86, 4294901760
    %v3400 = vsub.f32 %v86, %v3399
    %v3401 = vand.u32 %v3400, 4294901760
    %v3402 = vsub.f32 %v3400, %v3401
    %v3403 = vand.u32 %v3402, 4294901760
    %3404 = vmatpush1.msra.mxu0 %v3403
    %3405 = vmatprep.subr.mxu0 0.0
    %v3406 = vand.u32 %v87, 4294901760
    %v3407 = vsub.f32 %v87, %v3406
    %v3408 = vand.u32 %v3407, 4294901760
    %v3409 = vsub.f32 %v3407, %v3408
    %v3410 = vand.u32 %v3409, 4294901760
    %3411 = vmatpush1.msra.mxu0 %v3410
    %3412 = vmatprep.subr.mxu0 0.0
    %v3413 = vand.u32 %v88, 4294901760
    %v3414 = vsub.f32 %v88, %v3413
    %v3415 = vand.u32 %v3414, 4294901760
    %v3416 = vsub.f32 %v3414, %v3415
    %v3417 = vand.u32 %v3416, 4294901760
    %3418 = vmatpush1.msra.mxu0 %v3417
    %3419 = vmatprep.subr.mxu0 0.0
    %v3420 = vand.u32 %v89, 4294901760
    %v3421 = vsub.f32 %v89, %v3420
    %v3422 = vand.u32 %v3421, 4294901760
    %v3423 = vsub.f32 %v3421, %v3422
    %v3424 = vand.u32 %v3423, 4294901760
    %3425 = vmatpush1.msra.mxu0 %v3424
    %3426 = vmatprep.subr.mxu0 0.0
    %v3427 = vand.u32 %v90, 4294901760
    %v3428 = vsub.f32 %v90, %v3427
    %v3429 = vand.u32 %v3428, 4294901760
    %v3430 = vsub.f32 %v3428, %v3429
    %v3431 = vand.u32 %v3430, 4294901760
    %3432 = vmatpush1.msra.mxu0 %v3431
    %3433 = vmatprep.subr.mxu0 0.0
    %v3434 = vand.u32 %v91, 4294901760
    %v3435 = vsub.f32 %v91, %v3434
    %v3436 = vand.u32 %v3435, 4294901760
    %v3437 = vsub.f32 %v3435, %v3436
    %v3438 = vand.u32 %v3437, 4294901760
    %3439 = vmatpush1.msra.mxu0 %v3438
    %3440 = vmatprep.subr.mxu0 0.0
    %v3441 = vand.u32 %v92, 4294901760
    %v3442 = vsub.f32 %v92, %v3441
    %v3443 = vand.u32 %v3442, 4294901760
    %v3444 = vsub.f32 %v3442, %v3443
    %v3445 = vand.u32 %v3444, 4294901760
    %3446 = vmatpush1.msra.mxu0 %v3445
    %3447 = vmatprep.subr.mxu0 0.0
    %v3448 = vand.u32 %v93, 4294901760
    %v3449 = vsub.f32 %v93, %v3448
    %v3450 = vand.u32 %v3449, 4294901760
    %v3451 = vsub.f32 %v3449, %v3450
    %v3452 = vand.u32 %v3451, 4294901760
    %3453 = vmatpush1.msra.mxu0 %v3452
    %3454 = vmatprep.subr.mxu0 0.0
    %v3455 = vand.u32 %v94, 4294901760
    %v3456 = vsub.f32 %v94, %v3455
    %v3457 = vand.u32 %v3456, 4294901760
    %v3458 = vsub.f32 %v3456, %v3457
    %v3459 = vand.u32 %v3458, 4294901760
    %3460 = vmatpush1.msra.mxu0 %v3459
    %3461 = vmatprep.subr.mxu0 0.0
    %v3462 = vand.u32 %v95, 4294901760
    %v3463 = vsub.f32 %v95, %v3462
    %v3464 = vand.u32 %v3463, 4294901760
    %v3465 = vsub.f32 %v3463, %v3464
    %v3466 = vand.u32 %v3465, 4294901760
    %3467 = vmatpush1.msra.mxu0 %v3466
    %3468 = vmatprep.subr.mxu0 0.0
    %v3469 = vand.u32 %v96, 4294901760
    %v3470 = vsub.f32 %v96, %v3469
    %v3471 = vand.u32 %v3470, 4294901760
    %v3472 = vsub.f32 %v3470, %v3471
    %v3473 = vand.u32 %v3472, 4294901760
    %3474 = vmatpush1.msra.mxu0 %v3473
    %3475 = vmatprep.subr.mxu0 0.0
    %v3476 = vand.u32 %v97, 4294901760
    %v3477 = vsub.f32 %v97, %v3476
    %v3478 = vand.u32 %v3477, 4294901760
    %v3479 = vsub.f32 %v3477, %v3478
    %v3480 = vand.u32 %v3479, 4294901760
    %3481 = vmatpush1.msra.mxu0 %v3480
    %3482 = vmatprep.subr.mxu0 0.0
    %v3483 = vand.u32 %v98, 4294901760
    %v3484 = vsub.f32 %v98, %v3483
    %v3485 = vand.u32 %v3484, 4294901760
    %v3486 = vsub.f32 %v3484, %v3485
    %v3487 = vand.u32 %v3486, 4294901760
    %3488 = vmatpush1.msra.mxu0 %v3487
    %3489 = vmatprep.subr.mxu0 0.0
    %v3490 = vand.u32 %v99, 4294901760
    %v3491 = vsub.f32 %v99, %v3490
    %v3492 = vand.u32 %v3491, 4294901760
    %v3493 = vsub.f32 %v3491, %v3492
    %v3494 = vand.u32 %v3493, 4294901760
    %3495 = vmatpush1.msra.mxu0 %v3494
    %3496 = vmatprep.subr.mxu0 0.0
    %v3497 = vand.u32 %v100, 4294901760
    %v3498 = vsub.f32 %v100, %v3497
    %v3499 = vand.u32 %v3498, 4294901760
    %v3500 = vsub.f32 %v3498, %v3499
    %v3501 = vand.u32 %v3500, 4294901760
    %3502 = vmatpush1.msra.mxu0 %v3501
    %3503 = vmatprep.subr.mxu0 0.0
    %3504 = vmatpush1.msra.mxu0 0.0
    %3505 = vmatprep.subr.mxu0 0.0
    %3506 = vmatpush1.msra.mxu0 0.0
    %3507 = vmatprep.subr.mxu0 0.0
    %3508 = vmatpush1.msra.mxu0 0.0
    %3509 = vmatprep.subr.mxu0 0.0
    %3510 = vmatpush1.msra.mxu0 0.0
    %3511 = vmatprep.subr.mxu0 0.0
    %3512 = vmatpush1.msra.mxu0 0.0
    %3513 = vmatprep.subr.mxu0 0.0
    %3514 = vmatpush1.msra.mxu0 0.0
    %3515 = vmatprep.subr.mxu0 0.0
    %3516 = vmatpush1.msra.mxu0 0.0
    %3517 = vmatprep.subr.mxu0 0.0
    %3518 = vmatpush1.msra.mxu0 0.0
    %3519 = vmatprep.subr.mxu0 0.0
    %3520 = vmatpush1.msra.mxu0 0.0
    %3521 = vmatprep.subr.mxu0 0.0
    %3522 = vmatpush1.msra.mxu0 0.0
    %3523 = vmatprep.subr.mxu0 0.0
    %3524 = vmatpush1.msra.mxu0 0.0
    %3525 = vmatprep.subr.mxu0 0.0
    %3526 = vmatpush1.msra.mxu0 0.0
    %3527 = vmatprep.subr.mxu0 0.0
    %3528 = vmatpush1.msra.mxu0 0.0
    %3529 = vmatprep.subr.mxu0 0.0
    %3530 = vmatpush1.msra.mxu0 0.0
    %3531 = vmatprep.subr.mxu0 0.0
    %3532 = vmatpush1.msra.mxu0 0.0
    %3533 = vmatprep.subr.mxu0 0.0
    %3534 = vmatpush1.msra.mxu0 0.0
    %3535 = vmatprep.mubr.f32.mxu0 0.0
    %v3536 = vand.u32 %v3299, 4294901760
    %3537 = vmatmul.mubr.f32.gmra.mrb[0].mxu0 %v3536
    %v3538 = vpop.f32.mrb[0].mxu0
    %v3539 = vadd.f32 %v3388, %v3538
    %v3540 = vpop.f32.mrb[0].mxu0
    %3541 = vdwg.mxu0
    %3542 = vmatprep.subr.mxu0 0.0
    %v3543 = vand.u32 %v85, 4294901760
    %v3544 = vsub.f32 %v85, %v3543
    %3545 = vmatpush1.msra.mxu0 %v3544
    %3546 = vmatprep.subr.mxu0 0.0
    %v3547 = vand.u32 %v86, 4294901760
    %v3548 = vsub.f32 %v86, %v3547
    %3549 = vmatpush1.msra.mxu0 %v3548
    %3550 = vmatprep.subr.mxu0 0.0
    %v3551 = vand.u32 %v87, 4294901760
    %v3552 = vsub.f32 %v87, %v3551
    %3553 = vmatpush1.msra.mxu0 %v3552
    %3554 = vmatprep.subr.mxu0 0.0
    %v3555 = vand.u32 %v88, 4294901760
    %v3556 = vsub.f32 %v88, %v3555
    %3557 = vmatpush1.msra.mxu0 %v3556
    %3558 = vmatprep.subr.mxu0 0.0
    %v3559 = vand.u32 %v89, 4294901760
    %v3560 = vsub.f32 %v89, %v3559
    %3561 = vmatpush1.msra.mxu0 %v3560
    %3562 = vmatprep.subr.mxu0 0.0
    %v3563 = vand.u32 %v90, 4294901760
    %v3564 = vsub.f32 %v90, %v3563
    %3565 = vmatpush1.msra.mxu0 %v3564
    %3566 = vmatprep.subr.mxu0 0.0
    %v3567 = vand.u32 %v91, 4294901760
    %v3568 = vsub.f32 %v91, %v3567
    %3569 = vmatpush1.msra.mxu0 %v3568
    %3570 = vmatprep.subr.mxu0 0.0
    %v3571 = vand.u32 %v92, 4294901760
    %v3572 = vsub.f32 %v92, %v3571
    %3573 = vmatpush1.msra.mxu0 %v3572
    %3574 = vmatprep.subr.mxu0 0.0
    %v3575 = vand.u32 %v93, 4294901760
    %v3576 = vsub.f32 %v93, %v3575
    %3577 = vmatpush1.msra.mxu0 %v3576
    %3578 = vmatprep.subr.mxu0 0.0
    %v3579 = vand.u32 %v94, 4294901760
    %v3580 = vsub.f32 %v94, %v3579
    %3581 = vmatpush1.msra.mxu0 %v3580
    %3582 = vmatprep.subr.mxu0 0.0
    %v3583 = vand.u32 %v95, 4294901760
    %v3584 = vsub.f32 %v95, %v3583
    %3585 = vmatpush1.msra.mxu0 %v3584
    %3586 = vmatprep.subr.mxu0 0.0
    %v3587 = vand.u32 %v96, 4294901760
    %v3588 = vsub.f32 %v96, %v3587
    %3589 = vmatpush1.msra.mxu0 %v3588
    %3590 = vmatprep.subr.mxu0 0.0
    %v3591 = vand.u32 %v97, 4294901760
    %v3592 = vsub.f32 %v97, %v3591
    %3593 = vmatpush1.msra.mxu0 %v3592
    %3594 = vmatprep.subr.mxu0 0.0
    %v3595 = vand.u32 %v98, 4294901760
    %v3596 = vsub.f32 %v98, %v3595
    %3597 = vmatpush1.msra.mxu0 %v3596
    %3598 = vmatprep.subr.mxu0 0.0
    %v3599 = vand.u32 %v99, 4294901760
    %v3600 = vsub.f32 %v99, %v3599
    %3601 = vmatpush1.msra.mxu0 %v3600
    %3602 = vmatprep.subr.mxu0 0.0
    %v3603 = vand.u32 %v100, 4294901760
    %v3604 = vsub.f32 %v100, %v3603
    %3605 = vmatpush1.msra.mxu0 %v3604
    %3606 = vmatprep.subr.mxu0 0.0
    %3607 = vmatpush1.msra.mxu0 0.0
    %3608 = vmatprep.subr.mxu0 0.0
    %3609 = vmatpush1.msra.mxu0 0.0
    %3610 = vmatprep.subr.mxu0 0.0
    %3611 = vmatpush1.msra.mxu0 0.0
    %3612 = vmatprep.subr.mxu0 0.0
    %3613 = vmatpush1.msra.mxu0 0.0
    %3614 = vmatprep.subr.mxu0 0.0
    %3615 = vmatpush1.msra.mxu0 0.0
    %3616 = vmatprep.subr.mxu0 0.0
    %3617 = vmatpush1.msra.mxu0 0.0
    %3618 = vmatprep.subr.mxu0 0.0
    %3619 = vmatpush1.msra.mxu0 0.0
    %3620 = vmatprep.subr.mxu0 0.0
    %3621 = vmatpush1.msra.mxu0 0.0
    %3622 = vmatprep.subr.mxu0 0.0
    %3623 = vmatpush1.msra.mxu0 0.0
    %3624 = vmatprep.subr.mxu0 0.0
    %3625 = vmatpush1.msra.mxu0 0.0
    %3626 = vmatprep.subr.mxu0 0.0
    %3627 = vmatpush1.msra.mxu0 0.0
    %3628 = vmatprep.subr.mxu0 0.0
    %3629 = vmatpush1.msra.mxu0 0.0
    %3630 = vmatprep.subr.mxu0 0.0
    %3631 = vmatpush1.msra.mxu0 0.0
    %3632 = vmatprep.subr.mxu0 0.0
    %3633 = vmatpush1.msra.mxu0 0.0
    %3634 = vmatprep.subr.mxu0 0.0
    %3635 = vmatpush1.msra.mxu0 0.0
    %3636 = vmatprep.subr.mxu0 0.0
    %3637 = vmatpush1.msra.mxu0 0.0
    %3638 = vmatprep.mubr.f32.mxu0 0.0
    %v3639 = vand.u32 %v3299, 4294901760
    %v3640 = vsub.f32 %v3299, %v3639
    %3641 = vmatmul.mubr.f32.gmra.mrb[0].mxu0 %v3640
    %v3642 = vpop.f32.mrb[0].mxu0
    %v3643 = vadd.f32 %v3539, %v3642
    %v3644 = vpop.f32.mrb[0].mxu0
    %3645 = vdwg.mxu0
    %3646 = vmatprep.subr.mxu0 0.0
    %v3647 = vand.u32 %v85, 4294901760
    %3648 = vmatpush1.msra.mxu0 %v3647
    %3649 = vmatprep.subr.mxu0 0.0
    %v3650 = vand.u32 %v86, 4294901760
    %3651 = vmatpush1.msra.mxu0 %v3650
    %3652 = vmatprep.subr.mxu0 0.0
    %v3653 = vand.u32 %v87, 4294901760
    %3654 = vmatpush1.msra.mxu0 %v3653
    %3655 = vmatprep.subr.mxu0 0.0
    %v3656 = vand.u32 %v88, 4294901760
    %3657 = vmatpush1.msra.mxu0 %v3656
    %3658 = vmatprep.subr.mxu0 0.0
    %v3659 = vand.u32 %v89, 4294901760
    %3660 = vmatpush1.msra.mxu0 %v3659
    %3661 = vmatprep.subr.mxu0 0.0
    %v3662 = vand.u32 %v90, 4294901760
    %3663 = vmatpush1.msra.mxu0 %v3662
    %3664 = vmatprep.subr.mxu0 0.0
    %v3665 = vand.u32 %v91, 4294901760
    %3666 = vmatpush1.msra.mxu0 %v3665
    %3667 = vmatprep.subr.mxu0 0.0
    %v3668 = vand.u32 %v92, 4294901760
    %3669 = vmatpush1.msra.mxu0 %v3668
    %3670 = vmatprep.subr.mxu0 0.0
    %v3671 = vand.u32 %v93, 4294901760
    %3672 = vmatpush1.msra.mxu0 %v3671
    %3673 = vmatprep.subr.mxu0 0.0
    %v3674 = vand.u32 %v94, 4294901760
    %3675 = vmatpush1.msra.mxu0 %v3674
    %3676 = vmatprep.subr.mxu0 0.0
    %v3677 = vand.u32 %v95, 4294901760
    %3678 = vmatpush1.msra.mxu0 %v3677
    %3679 = vmatprep.subr.mxu0 0.0
    %v3680 = vand.u32 %v96, 4294901760
    %3681 = vmatpush1.msra.mxu0 %v3680
    %3682 = vmatprep.subr.mxu0 0.0
    %v3683 = vand.u32 %v97, 4294901760
    %3684 = vmatpush1.msra.mxu0 %v3683
    %3685 = vmatprep.subr.mxu0 0.0
    %v3686 = vand.u32 %v98, 4294901760
    %3687 = vmatpush1.msra.mxu0 %v3686
    %3688 = vmatprep.subr.mxu0 0.0
    %v3689 = vand.u32 %v99, 4294901760
    %3690 = vmatpush1.msra.mxu0 %v3689
    %3691 = vmatprep.subr.mxu0 0.0
    %v3692 = vand.u32 %v100, 4294901760
    %3693 = vmatpush1.msra.mxu0 %v3692
    %3694 = vmatprep.subr.mxu0 0.0
    %3695 = vmatpush1.msra.mxu0 0.0
    %3696 = vmatprep.subr.mxu0 0.0
    %3697 = vmatpush1.msra.mxu0 0.0
    %3698 = vmatprep.subr.mxu0 0.0
    %3699 = vmatpush1.msra.mxu0 0.0
    %3700 = vmatprep.subr.mxu0 0.0
    %3701 = vmatpush1.msra.mxu0 0.0
    %3702 = vmatprep.subr.mxu0 0.0
    %3703 = vmatpush1.msra.mxu0 0.0
    %3704 = vmatprep.subr.mxu0 0.0
    %3705 = vmatpush1.msra.mxu0 0.0
    %3706 = vmatprep.subr.mxu0 0.0
    %3707 = vmatpush1.msra.mxu0 0.0
    %3708 = vmatprep.subr.mxu0 0.0
    %3709 = vmatpush1.msra.mxu0 0.0
    %3710 = vmatprep.subr.mxu0 0.0
    %3711 = vmatpush1.msra.mxu0 0.0
    %3712 = vmatprep.subr.mxu0 0.0
    %3713 = vmatpush1.msra.mxu0 0.0
    %3714 = vmatprep.subr.mxu0 0.0
    %3715 = vmatpush1.msra.mxu0 0.0
    %3716 = vmatprep.subr.mxu0 0.0
    %3717 = vmatpush1.msra.mxu0 0.0
    %3718 = vmatprep.subr.mxu0 0.0
    %3719 = vmatpush1.msra.mxu0 0.0
    %3720 = vmatprep.subr.mxu0 0.0
    %3721 = vmatpush1.msra.mxu0 0.0
    %3722 = vmatprep.subr.mxu0 0.0
    %3723 = vmatpush1.msra.mxu0 0.0
    %3724 = vmatprep.subr.mxu0 0.0
    %3725 = vmatpush1.msra.mxu0 0.0
    %3726 = vmatprep.mubr.f32.mxu0 0.0
    %v3727 = vand.u32 %v3299, 4294901760
    %v3728 = vsub.f32 %v3299, %v3727
    %v3729 = vand.u32 %v3728, 4294901760
    %3730 = vmatmul.mubr.f32.gmra.mrb[0].mxu0 %v3729
    %v3731 = vpop.f32.mrb[0].mxu0
    %v3732 = vadd.f32 %v3643, %v3731
    %v3733 = vpop.f32.mrb[0].mxu0
    %3734 = vdwg.mxu0
    %3735 = vmatprep.subr.mxu0 0.0
    %v3736 = vand.u32 %v85, 4294901760
    %v3737 = vsub.f32 %v85, %v3736
    %v3738 = vand.u32 %v3737, 4294901760
    %3739 = vmatpush1.msra.mxu0 %v3738
    %3740 = vmatprep.subr.mxu0 0.0
    %v3741 = vand.u32 %v86, 4294901760
    %v3742 = vsub.f32 %v86, %v3741
    %v3743 = vand.u32 %v3742, 4294901760
    %3744 = vmatpush1.msra.mxu0 %v3743
    %3745 = vmatprep.subr.mxu0 0.0
    %v3746 = vand.u32 %v87, 4294901760
    %v3747 = vsub.f32 %v87, %v3746
    %v3748 = vand.u32 %v3747, 4294901760
    %3749 = vmatpush1.msra.mxu0 %v3748
    %3750 = vmatprep.subr.mxu0 0.0
    %v3751 = vand.u32 %v88, 4294901760
    %v3752 = vsub.f32 %v88, %v3751
    %v3753 = vand.u32 %v3752, 4294901760
    %3754 = vmatpush1.msra.mxu0 %v3753
    %3755 = vmatprep.subr.mxu0 0.0
    %v3756 = vand.u32 %v89, 4294901760
    %v3757 = vsub.f32 %v89, %v3756
    %v3758 = vand.u32 %v3757, 4294901760
    %3759 = vmatpush1.msra.mxu0 %v3758
    %3760 = vmatprep.subr.mxu0 0.0
    %v3761 = vand.u32 %v90, 4294901760
    %v3762 = vsub.f32 %v90, %v3761
    %v3763 = vand.u32 %v3762, 4294901760
    %3764 = vmatpush1.msra.mxu0 %v3763
    %3765 = vmatprep.subr.mxu0 0.0
    %v3766 = vand.u32 %v91, 4294901760
    %v3767 = vsub.f32 %v91, %v3766
    %v3768 = vand.u32 %v3767, 4294901760
    %3769 = vmatpush1.msra.mxu0 %v3768
    %3770 = vmatprep.subr.mxu0 0.0
    %v3771 = vand.u32 %v92, 4294901760
    %v3772 = vsub.f32 %v92, %v3771
    %v3773 = vand.u32 %v3772, 4294901760
    %3774 = vmatpush1.msra.mxu0 %v3773
    %3775 = vmatprep.subr.mxu0 0.0
    %v3776 = vand.u32 %v93, 4294901760
    %v3777 = vsub.f32 %v93, %v3776
    %v3778 = vand.u32 %v3777, 4294901760
    %3779 = vmatpush1.msra.mxu0 %v3778
    %3780 = vmatprep.subr.mxu0 0.0
    %v3781 = vand.u32 %v94, 4294901760
    %v3782 = vsub.f32 %v94, %v3781
    %v3783 = vand.u32 %v3782, 4294901760
    %3784 = vmatpush1.msra.mxu0 %v3783
    %3785 = vmatprep.subr.mxu0 0.0
    %v3786 = vand.u32 %v95, 4294901760
    %v3787 = vsub.f32 %v95, %v3786
    %v3788 = vand.u32 %v3787, 4294901760
    %3789 = vmatpush1.msra.mxu0 %v3788
    %3790 = vmatprep.subr.mxu0 0.0
    %v3791 = vand.u32 %v96, 4294901760
    %v3792 = vsub.f32 %v96, %v3791
    %v3793 = vand.u32 %v3792, 4294901760
    %3794 = vmatpush1.msra.mxu0 %v3793
    %3795 = vmatprep.subr.mxu0 0.0
    %v3796 = vand.u32 %v97, 4294901760
    %v3797 = vsub.f32 %v97, %v3796
    %v3798 = vand.u32 %v3797, 4294901760
    %3799 = vmatpush1.msra.mxu0 %v3798
    %3800 = vmatprep.subr.mxu0 0.0
    %v3801 = vand.u32 %v98, 4294901760
    %v3802 = vsub.f32 %v98, %v3801
    %v3803 = vand.u32 %v3802, 4294901760
    %3804 = vmatpush1.msra.mxu0 %v3803
    %3805 = vmatprep.subr.mxu0 0.0
    %v3806 = vand.u32 %v99, 4294901760
    %v3807 = vsub.f32 %v99, %v3806
    %v3808 = vand.u32 %v3807, 4294901760
    %3809 = vmatpush1.msra.mxu0 %v3808
    %3810 = vmatprep.subr.mxu0 0.0
    %v3811 = vand.u32 %v100, 4294901760
    %v3812 = vsub.f32 %v100, %v3811
    %v3813 = vand.u32 %v3812, 4294901760
    %3814 = vmatpush1.msra.mxu0 %v3813
    %3815 = vmatprep.subr.mxu0 0.0
    %3816 = vmatpush1.msra.mxu0 0.0
    %3817 = vmatprep.subr.mxu0 0.0
    %3818 = vmatpush1.msra.mxu0 0.0
    %3819 = vmatprep.subr.mxu0 0.0
    %3820 = vmatpush1.msra.mxu0 0.0
    %3821 = vmatprep.subr.mxu0 0.0
    %3822 = vmatpush1.msra.mxu0 0.0
    %3823 = vmatprep.subr.mxu0 0.0
    %3824 = vmatpush1.msra.mxu0 0.0
    %3825 = vmatprep.subr.mxu0 0.0
    %3826 = vmatpush1.msra.mxu0 0.0
    %3827 = vmatprep.subr.mxu0 0.0
    %3828 = vmatpush1.msra.mxu0 0.0
    %3829 = vmatprep.subr.mxu0 0.0
    %3830 = vmatpush1.msra.mxu0 0.0
    %3831 = vmatprep.subr.mxu0 0.0
    %3832 = vmatpush1.msra.mxu0 0.0
    %3833 = vmatprep.subr.mxu0 0.0
    %3834 = vmatpush1.msra.mxu0 0.0
    %3835 = vmatprep.subr.mxu0 0.0
    %3836 = vmatpush1.msra.mxu0 0.0
    %3837 = vmatprep.subr.mxu0 0.0
    %3838 = vmatpush1.msra.mxu0 0.0
    %3839 = vmatprep.subr.mxu0 0.0
    %3840 = vmatpush1.msra.mxu0 0.0
    %3841 = vmatprep.subr.mxu0 0.0
    %3842 = vmatpush1.msra.mxu0 0.0
    %3843 = vmatprep.subr.mxu0 0.0
    %3844 = vmatpush1.msra.mxu0 0.0
    %3845 = vmatprep.subr.mxu0 0.0
    %3846 = vmatpush1.msra.mxu0 0.0
    %3847 = vmatprep.mubr.f32.mxu0 0.0
    %v3848 = vand.u32 %v3299, 4294901760
    %3849 = vmatmul.mubr.f32.gmra.mrb[0].mxu0 %v3848
    %v3850 = vpop.f32.mrb[0].mxu0
    %v3851 = vadd.f32 %v3732, %v3850
    %v3852 = vpop.f32.mrb[0].mxu0
    %3853 = vdwg.mxu0
    %3854 = vmatprep.subr.mxu0 0.0
    %v3855 = vand.u32 %v85, 4294901760
    %3856 = vmatpush1.msra.mxu0 %v3855
    %3857 = vmatprep.subr.mxu0 0.0
    %v3858 = vand.u32 %v86, 4294901760
    %3859 = vmatpush1.msra.mxu0 %v3858
    %3860 = vmatprep.subr.mxu0 0.0
    %v3861 = vand.u32 %v87, 4294901760
    %3862 = vmatpush1.msra.mxu0 %v3861
    %3863 = vmatprep.subr.mxu0 0.0
    %v3864 = vand.u32 %v88, 4294901760
    %3865 = vmatpush1.msra.mxu0 %v3864
    %3866 = vmatprep.subr.mxu0 0.0
    %v3867 = vand.u32 %v89, 4294901760
    %3868 = vmatpush1.msra.mxu0 %v3867
    %3869 = vmatprep.subr.mxu0 0.0
    %v3870 = vand.u32 %v90, 4294901760
    %3871 = vmatpush1.msra.mxu0 %v3870
    %3872 = vmatprep.subr.mxu0 0.0
    %v3873 = vand.u32 %v91, 4294901760
    %3874 = vmatpush1.msra.mxu0 %v3873
    %3875 = vmatprep.subr.mxu0 0.0
    %v3876 = vand.u32 %v92, 4294901760
    %3877 = vmatpush1.msra.mxu0 %v3876
    %3878 = vmatprep.subr.mxu0 0.0
    %v3879 = vand.u32 %v93, 4294901760
    %3880 = vmatpush1.msra.mxu0 %v3879
    %3881 = vmatprep.subr.mxu0 0.0
    %v3882 = vand.u32 %v94, 4294901760
    %3883 = vmatpush1.msra.mxu0 %v3882
    %3884 = vmatprep.subr.mxu0 0.0
    %v3885 = vand.u32 %v95, 4294901760
    %3886 = vmatpush1.msra.mxu0 %v3885
    %3887 = vmatprep.subr.mxu0 0.0
    %v3888 = vand.u32 %v96, 4294901760
    %3889 = vmatpush1.msra.mxu0 %v3888
    %3890 = vmatprep.subr.mxu0 0.0
    %v3891 = vand.u32 %v97, 4294901760
    %3892 = vmatpush1.msra.mxu0 %v3891
    %3893 = vmatprep.subr.mxu0 0.0
    %v3894 = vand.u32 %v98, 4294901760
    %3895 = vmatpush1.msra.mxu0 %v3894
    %3896 = vmatprep.subr.mxu0 0.0
    %v3897 = vand.u32 %v99, 4294901760
    %3898 = vmatpush1.msra.mxu0 %v3897
    %3899 = vmatprep.subr.mxu0 0.0
    %v3900 = vand.u32 %v100, 4294901760
    %3901 = vmatpush1.msra.mxu0 %v3900
    %3902 = vmatprep.subr.mxu0 0.0
    %3903 = vmatpush1.msra.mxu0 0.0
    %3904 = vmatprep.subr.mxu0 0.0
    %3905 = vmatpush1.msra.mxu0 0.0
    %3906 = vmatprep.subr.mxu0 0.0
    %3907 = vmatpush1.msra.mxu0 0.0
    %3908 = vmatprep.subr.mxu0 0.0
    %3909 = vmatpush1.msra.mxu0 0.0
    %3910 = vmatprep.subr.mxu0 0.0
    %3911 = vmatpush1.msra.mxu0 0.0
    %3912 = vmatprep.subr.mxu0 0.0
    %3913 = vmatpush1.msra.mxu0 0.0
    %3914 = vmatprep.subr.mxu0 0.0
    %3915 = vmatpush1.msra.mxu0 0.0
    %3916 = vmatprep.subr.mxu0 0.0
    %3917 = vmatpush1.msra.mxu0 0.0
    %3918 = vmatprep.subr.mxu0 0.0
    %3919 = vmatpush1.msra.mxu0 0.0
    %3920 = vmatprep.subr.mxu0 0.0
    %3921 = vmatpush1.msra.mxu0 0.0
    %3922 = vmatprep.subr.mxu0 0.0
    %3923 = vmatpush1.msra.mxu0 0.0
    %3924 = vmatprep.subr.mxu0 0.0
    %3925 = vmatpush1.msra.mxu0 0.0
    %3926 = vmatprep.subr.mxu0 0.0
    %3927 = vmatpush1.msra.mxu0 0.0
    %3928 = vmatprep.subr.mxu0 0.0
    %3929 = vmatpush1.msra.mxu0 0.0
    %3930 = vmatprep.subr.mxu0 0.0
    %3931 = vmatpush1.msra.mxu0 0.0
    %3932 = vmatprep.subr.mxu0 0.0
    %3933 = vmatpush1.msra.mxu0 0.0
    %3934 = vmatprep.mubr.f32.mxu0 0.0
    %v3935 = vand.u32 %v3299, 4294901760
    %3936 = vmatmul.mubr.f32.gmra.mrb[0].mxu0 %v3935
    %v3937 = vpop.f32.mrb[0].mxu0
    %v3938 = vadd.f32 %v3851, %v3937
    %v3939 = vpop.f32.mrb[0].mxu0
    %3940 = vdwg.mxu0
    %v3941 = vrsqrt.pop %v3938
    %v3942 = vmul.f32 %v3298, %v3941
    %v3943 = vmul.f32 %v3942, %v1984
    %v3944 = vadd.f32 %v3943, %v1989
    %v3945 = vlaneseq
    %v3946 = vshrl.u32 %v3945, 7
    %v3947 = vsub.s32 1, %v3946
    %v3948 = vrot.slane %v1991, %v3947
    %v3949 = vmul.f32 %v3944, %v3948
    %v3950 = vlaneseq
    %v3951 = vshrl.u32 %v3950, 7
    %v3952 = vsub.s32 1, %v3951
    %v3953 = vrot.slane %v692, %v3952
    %v3954 = vadd.f32 %v3949, %v3953
    %v3955 = vxor.u32 %v3954, 2147483648
    %v3956 = vmul.f32 %v3955, 1.442695
    %v3957 = vpow.pop %v3956
    %v3958 = vadd.f32 %v3957, 1.0
    %v3959 = vrcp.pop %v3958
    %v3960 = vmul.f32 1.0, %v3959
    %v3961 = vmul.f32 %v3954, %v3960
    %3962 = vmatprep.subr.mxu0 0.0
    %v3963 = vand.u32 %v69, 4294901760
    %3964 = vmatpush1.msra.mxu0 %v3963
    %3965 = vmatprep.subr.mxu0 0.0
    %v3966 = vand.u32 %v70, 4294901760
    %3967 = vmatpush1.msra.mxu0 %v3966
    %3968 = vmatprep.subr.mxu0 0.0
    %v3969 = vand.u32 %v71, 4294901760
    %3970 = vmatpush1.msra.mxu0 %v3969
    %3971 = vmatprep.subr.mxu0 0.0
    %v3972 = vand.u32 %v72, 4294901760
    %3973 = vmatpush1.msra.mxu0 %v3972
    %3974 = vmatprep.subr.mxu0 0.0
    %v3975 = vand.u32 %v73, 4294901760
    %3976 = vmatpush1.msra.mxu0 %v3975
    %3977 = vmatprep.subr.mxu0 0.0
    %v3978 = vand.u32 %v74, 4294901760
    %3979 = vmatpush1.msra.mxu0 %v3978
    %3980 = vmatprep.subr.mxu0 0.0
    %v3981 = vand.u32 %v75, 4294901760
    %3982 = vmatpush1.msra.mxu0 %v3981
    %3983 = vmatprep.subr.mxu0 0.0
    %v3984 = vand.u32 %v76, 4294901760
    %3985 = vmatpush1.msra.mxu0 %v3984
    %3986 = vmatprep.subr.mxu0 0.0
    %v3987 = vand.u32 %v77, 4294901760
    %3988 = vmatpush1.msra.mxu0 %v3987
    %3989 = vmatprep.subr.mxu0 0.0
    %v3990 = vand.u32 %v78, 4294901760
    %3991 = vmatpush1.msra.mxu0 %v3990
    %3992 = vmatprep.subr.mxu0 0.0
    %v3993 = vand.u32 %v79, 4294901760
    %3994 = vmatpush1.msra.mxu0 %v3993
    %3995 = vmatprep.subr.mxu0 0.0
    %v3996 = vand.u32 %v80, 4294901760
    %3997 = vmatpush1.msra.mxu0 %v3996
    %3998 = vmatprep.subr.mxu0 0.0
    %v3999 = vand.u32 %v81, 4294901760
    %4000 = vmatpush1.msra.mxu0 %v3999
    %4001 = vmatprep.subr.mxu0 0.0
    %v4002 = vand.u32 %v82, 4294901760
    %4003 = vmatpush1.msra.mxu0 %v4002
    %4004 = vmatprep.subr.mxu0 0.0
    %v4005 = vand.u32 %v83, 4294901760
    %4006 = vmatpush1.msra.mxu0 %v4005
    %4007 = vmatprep.subr.mxu0 0.0
    %v4008 = vand.u32 %v84, 4294901760
    %4009 = vmatpush1.msra.mxu0 %v4008
    %4010 = vmatprep.subr.mxu0 0.0
    %4011 = vmatpush1.msra.mxu0 0.0
    %4012 = vmatprep.subr.mxu0 0.0
    %4013 = vmatpush1.msra.mxu0 0.0
    %4014 = vmatprep.subr.mxu0 0.0
    %4015 = vmatpush1.msra.mxu0 0.0
    %4016 = vmatprep.subr.mxu0 0.0
    %4017 = vmatpush1.msra.mxu0 0.0
    %4018 = vmatprep.subr.mxu0 0.0
    %4019 = vmatpush1.msra.mxu0 0.0
    %4020 = vmatprep.subr.mxu0 0.0
    %4021 = vmatpush1.msra.mxu0 0.0
    %4022 = vmatprep.subr.mxu0 0.0
    %4023 = vmatpush1.msra.mxu0 0.0
    %4024 = vmatprep.subr.mxu0 0.0
    %4025 = vmatpush1.msra.mxu0 0.0
    %4026 = vmatprep.subr.mxu0 0.0
    %4027 = vmatpush1.msra.mxu0 0.0
    %4028 = vmatprep.subr.mxu0 0.0
    %4029 = vmatpush1.msra.mxu0 0.0
    %4030 = vmatprep.subr.mxu0 0.0
    %4031 = vmatpush1.msra.mxu0 0.0
    %4032 = vmatprep.subr.mxu0 0.0
    %4033 = vmatpush1.msra.mxu0 0.0
    %4034 = vmatprep.subr.mxu0 0.0
    %4035 = vmatpush1.msra.mxu0 0.0
    %4036 = vmatprep.subr.mxu0 0.0
    %4037 = vmatpush1.msra.mxu0 0.0
    %4038 = vmatprep.subr.mxu0 0.0
    %4039 = vmatpush1.msra.mxu0 0.0
    %4040 = vmatprep.subr.mxu0 0.0
    %4041 = vmatpush1.msra.mxu0 0.0
    %4042 = vmatprep.mubr.f32.mxu0 0.0
    %v4043 = vand.u32 %v3961, 4294901760
    %v4044 = vsub.f32 %v3961, %v4043
    %v4045 = vand.u32 %v4044, 4294901760
    %v4046 = vsub.f32 %v4044, %v4045
    %v4047 = vand.u32 %v4046, 4294901760
    %4048 = vmatmul.mubr.f32.gmra.mrb[0].mxu0 %v4047
    %v4049 = vpop.f32.mrb[0].mxu0
    %v4050 = vadd.f32 %v2012, %v4049
    %v4051 = vpop.f32.mrb[0].mxu0
    %4052 = vdwg.mxu0
    %4053 = vmatprep.subr.mxu0 0.0
    %v4054 = vand.u32 %v69, 4294901760
    %v4055 = vsub.f32 %v69, %v4054
    %v4056 = vand.u32 %v4055, 4294901760
    %v4057 = vsub.f32 %v4055, %v4056
    %v4058 = vand.u32 %v4057, 4294901760
    %4059 = vmatpush1.msra.mxu0 %v4058
    %4060 = vmatprep.subr.mxu0 0.0
    %v4061 = vand.u32 %v70, 4294901760
    %v4062 = vsub.f32 %v70, %v4061
    %v4063 = vand.u32 %v4062, 4294901760
    %v4064 = vsub.f32 %v4062, %v4063
    %v4065 = vand.u32 %v4064, 4294901760
    %4066 = vmatpush1.msra.mxu0 %v4065
    %4067 = vmatprep.subr.mxu0 0.0
    %v4068 = vand.u32 %v71, 4294901760
    %v4069 = vsub.f32 %v71, %v4068
    %v4070 = vand.u32 %v4069, 4294901760
    %v4071 = vsub.f32 %v4069, %v4070
    %v4072 = vand.u32 %v4071, 4294901760
    %4073 = vmatpush1.msra.mxu0 %v4072
    %4074 = vmatprep.subr.mxu0 0.0
    %v4075 = vand.u32 %v72, 4294901760
    %v4076 = vsub.f32 %v72, %v4075
    %v4077 = vand.u32 %v4076, 4294901760
    %v4078 = vsub.f32 %v4076, %v4077
    %v4079 = vand.u32 %v4078, 4294901760
    %4080 = vmatpush1.msra.mxu0 %v4079
    %4081 = vmatprep.subr.mxu0 0.0
    %v4082 = vand.u32 %v73, 4294901760
    %v4083 = vsub.f32 %v73, %v4082
    %v4084 = vand.u32 %v4083, 4294901760
    %v4085 = vsub.f32 %v4083, %v4084
    %v4086 = vand.u32 %v4085, 4294901760
    %4087 = vmatpush1.msra.mxu0 %v4086
    %4088 = vmatprep.subr.mxu0 0.0
    %v4089 = vand.u32 %v74, 4294901760
    %v4090 = vsub.f32 %v74, %v4089
    %v4091 = vand.u32 %v4090, 4294901760
    %v4092 = vsub.f32 %v4090, %v4091
    %v4093 = vand.u32 %v4092, 4294901760
    %4094 = vmatpush1.msra.mxu0 %v4093
    %4095 = vmatprep.subr.mxu0 0.0
    %v4096 = vand.u32 %v75, 4294901760
    %v4097 = vsub.f32 %v75, %v4096
    %v4098 = vand.u32 %v4097, 4294901760
    %v4099 = vsub.f32 %v4097, %v4098
    %v4100 = vand.u32 %v4099, 4294901760
    %4101 = vmatpush1.msra.mxu0 %v4100
    %4102 = vmatprep.subr.mxu0 0.0
    %v4103 = vand.u32 %v76, 4294901760
    %v4104 = vsub.f32 %v76, %v4103
    %v4105 = vand.u32 %v4104, 4294901760
    %v4106 = vsub.f32 %v4104, %v4105
    %v4107 = vand.u32 %v4106, 4294901760
    %4108 = vmatpush1.msra.mxu0 %v4107
    %4109 = vmatprep.subr.mxu0 0.0
    %v4110 = vand.u32 %v77, 4294901760
    %v4111 = vsub.f32 %v77, %v4110
    %v4112 = vand.u32 %v4111, 4294901760
    %v4113 = vsub.f32 %v4111, %v4112
    %v4114 = vand.u32 %v4113, 4294901760
    %4115 = vmatpush1.msra.mxu0 %v4114
    %4116 = vmatprep.subr.mxu0 0.0
    %v4117 = vand.u32 %v78, 4294901760
    %v4118 = vsub.f32 %v78, %v4117
    %v4119 = vand.u32 %v4118, 4294901760
    %v4120 = vsub.f32 %v4118, %v4119
    %v4121 = vand.u32 %v4120, 4294901760
    %4122 = vmatpush1.msra.mxu0 %v4121
    %4123 = vmatprep.subr.mxu0 0.0
    %v4124 = vand.u32 %v79, 4294901760
    %v4125 = vsub.f32 %v79, %v4124
    %v4126 = vand.u32 %v4125, 4294901760
    %v4127 = vsub.f32 %v4125, %v4126
    %v4128 = vand.u32 %v4127, 4294901760
    %4129 = vmatpush1.msra.mxu0 %v4128
    %4130 = vmatprep.subr.mxu0 0.0
    %v4131 = vand.u32 %v80, 4294901760
    %v4132 = vsub.f32 %v80, %v4131
    %v4133 = vand.u32 %v4132, 4294901760
    %v4134 = vsub.f32 %v4132, %v4133
    %v4135 = vand.u32 %v4134, 4294901760
    %4136 = vmatpush1.msra.mxu0 %v4135
    %4137 = vmatprep.subr.mxu0 0.0
    %v4138 = vand.u32 %v81, 4294901760
    %v4139 = vsub.f32 %v81, %v4138
    %v4140 = vand.u32 %v4139, 4294901760
    %v4141 = vsub.f32 %v4139, %v4140
    %v4142 = vand.u32 %v4141, 4294901760
    %4143 = vmatpush1.msra.mxu0 %v4142
    %4144 = vmatprep.subr.mxu0 0.0
    %v4145 = vand.u32 %v82, 4294901760
    %v4146 = vsub.f32 %v82, %v4145
    %v4147 = vand.u32 %v4146, 4294901760
    %v4148 = vsub.f32 %v4146, %v4147
    %v4149 = vand.u32 %v4148, 4294901760
    %4150 = vmatpush1.msra.mxu0 %v4149
    %4151 = vmatprep.subr.mxu0 0.0
    %v4152 = vand.u32 %v83, 4294901760
    %v4153 = vsub.f32 %v83, %v4152
    %v4154 = vand.u32 %v4153, 4294901760
    %v4155 = vsub.f32 %v4153, %v4154
    %v4156 = vand.u32 %v4155, 4294901760
    %4157 = vmatpush1.msra.mxu0 %v4156
    %4158 = vmatprep.subr.mxu0 0.0
    %v4159 = vand.u32 %v84, 4294901760
    %v4160 = vsub.f32 %v84, %v4159
    %v4161 = vand.u32 %v4160, 4294901760
    %v4162 = vsub.f32 %v4160, %v4161
    %v4163 = vand.u32 %v4162, 4294901760
    %4164 = vmatpush1.msra.mxu0 %v4163
    %4165 = vmatprep.subr.mxu0 0.0
    %4166 = vmatpush1.msra.mxu0 0.0
    %4167 = vmatprep.subr.mxu0 0.0
    %4168 = vmatpush1.msra.mxu0 0.0
    %4169 = vmatprep.subr.mxu0 0.0
    %4170 = vmatpush1.msra.mxu0 0.0
    %4171 = vmatprep.subr.mxu0 0.0
    %4172 = vmatpush1.msra.mxu0 0.0
    %4173 = vmatprep.subr.mxu0 0.0
    %4174 = vmatpush1.msra.mxu0 0.0
    %4175 = vmatprep.subr.mxu0 0.0
    %4176 = vmatpush1.msra.mxu0 0.0
    %4177 = vmatprep.subr.mxu0 0.0
    %4178 = vmatpush1.msra.mxu0 0.0
    %4179 = vmatprep.subr.mxu0 0.0
    %4180 = vmatpush1.msra.mxu0 0.0
    %4181 = vmatprep.subr.mxu0 0.0
    %4182 = vmatpush1.msra.mxu0 0.0
    %4183 = vmatprep.subr.mxu0 0.0
    %4184 = vmatpush1.msra.mxu0 0.0
    %4185 = vmatprep.subr.mxu0 0.0
    %4186 = vmatpush1.msra.mxu0 0.0
    %4187 = vmatprep.subr.mxu0 0.0
    %4188 = vmatpush1.msra.mxu0 0.0
    %4189 = vmatprep.subr.mxu0 0.0
    %4190 = vmatpush1.msra.mxu0 0.0
    %4191 = vmatprep.subr.mxu0 0.0
    %4192 = vmatpush1.msra.mxu0 0.0
    %4193 = vmatprep.subr.mxu0 0.0
    %4194 = vmatpush1.msra.mxu0 0.0
    %4195 = vmatprep.subr.mxu0 0.0
    %4196 = vmatpush1.msra.mxu0 0.0
    %4197 = vmatprep.mubr.f32.mxu0 0.0
    %v4198 = vand.u32 %v3961, 4294901760
    %4199 = vmatmul.mubr.f32.gmra.mrb[0].mxu0 %v4198
    %v4200 = vpop.f32.mrb[0].mxu0
    %v4201 = vadd.f32 %v4050, %v4200
    %v4202 = vpop.f32.mrb[0].mxu0
    %4203 = vdwg.mxu0
    %4204 = vmatprep.subr.mxu0 0.0
    %v4205 = vand.u32 %v69, 4294901760
    %v4206 = vsub.f32 %v69, %v4205
    %4207 = vmatpush1.msra.mxu0 %v4206
    %4208 = vmatprep.subr.mxu0 0.0
    %v4209 = vand.u32 %v70, 4294901760
    %v4210 = vsub.f32 %v70, %v4209
    %4211 = vmatpush1.msra.mxu0 %v4210
    %4212 = vmatprep.subr.mxu0 0.0
    %v4213 = vand.u32 %v71, 4294901760
    %v4214 = vsub.f32 %v71, %v4213
    %4215 = vmatpush1.msra.mxu0 %v4214
    %4216 = vmatprep.subr.mxu0 0.0
    %v4217 = vand.u32 %v72, 4294901760
    %v4218 = vsub.f32 %v72, %v4217
    %4219 = vmatpush1.msra.mxu0 %v4218
    %4220 = vmatprep.subr.mxu0 0.0
    %v4221 = vand.u32 %v73, 4294901760
    %v4222 = vsub.f32 %v73, %v4221
    %4223 = vmatpush1.msra.mxu0 %v4222
    %4224 = vmatprep.subr.mxu0 0.0
    %v4225 = vand.u32 %v74, 4294901760
    %v4226 = vsub.f32 %v74, %v4225
    %4227 = vmatpush1.msra.mxu0 %v4226
    %4228 = vmatprep.subr.mxu0 0.0
    %v4229 = vand.u32 %v75, 4294901760
    %v4230 = vsub.f32 %v75, %v4229
    %4231 = vmatpush1.msra.mxu0 %v4230
    %4232 = vmatprep.subr.mxu0 0.0
    %v4233 = vand.u32 %v76, 4294901760
    %v4234 = vsub.f32 %v76, %v4233
    %4235 = vmatpush1.msra.mxu0 %v4234
    %4236 = vmatprep.subr.mxu0 0.0
    %v4237 = vand.u32 %v77, 4294901760
    %v4238 = vsub.f32 %v77, %v4237
    %4239 = vmatpush1.msra.mxu0 %v4238
    %4240 = vmatprep.subr.mxu0 0.0
    %v4241 = vand.u32 %v78, 4294901760
    %v4242 = vsub.f32 %v78, %v4241
    %4243 = vmatpush1.msra.mxu0 %v4242
    %4244 = vmatprep.subr.mxu0 0.0
    %v4245 = vand.u32 %v79, 4294901760
    %v4246 = vsub.f32 %v79, %v4245
    %4247 = vmatpush1.msra.mxu0 %v4246
    %4248 = vmatprep.subr.mxu0 0.0
    %v4249 = vand.u32 %v80, 4294901760
    %v4250 = vsub.f32 %v80, %v4249
    %4251 = vmatpush1.msra.mxu0 %v4250
    %4252 = vmatprep.subr.mxu0 0.0
    %v4253 = vand.u32 %v81, 4294901760
    %v4254 = vsub.f32 %v81, %v4253
    %4255 = vmatpush1.msra.mxu0 %v4254
    %4256 = vmatprep.subr.mxu0 0.0
    %v4257 = vand.u32 %v82, 4294901760
    %v4258 = vsub.f32 %v82, %v4257
    %4259 = vmatpush1.msra.mxu0 %v4258
    %4260 = vmatprep.subr.mxu0 0.0
    %v4261 = vand.u32 %v83, 4294901760
    %v4262 = vsub.f32 %v83, %v4261
    %4263 = vmatpush1.msra.mxu0 %v4262
    %4264 = vmatprep.subr.mxu0 0.0
    %v4265 = vand.u32 %v84, 4294901760
    %v4266 = vsub.f32 %v84, %v4265
    %4267 = vmatpush1.msra.mxu0 %v4266
    %4268 = vmatprep.subr.mxu0 0.0
    %4269 = vmatpush1.msra.mxu0 0.0
    %4270 = vmatprep.subr.mxu0 0.0
    %4271 = vmatpush1.msra.mxu0 0.0
    %4272 = vmatprep.subr.mxu0 0.0
    %4273 = vmatpush1.msra.mxu0 0.0
    %4274 = vmatprep.subr.mxu0 0.0
    %4275 = vmatpush1.msra.mxu0 0.0
    %4276 = vmatprep.subr.mxu0 0.0
    %4277 = vmatpush1.msra.mxu0 0.0
    %4278 = vmatprep.subr.mxu0 0.0
    %4279 = vmatpush1.msra.mxu0 0.0
    %4280 = vmatprep.subr.mxu0 0.0
    %4281 = vmatpush1.msra.mxu0 0.0
    %4282 = vmatprep.subr.mxu0 0.0
    %4283 = vmatpush1.msra.mxu0 0.0
    %4284 = vmatprep.subr.mxu0 0.0
    %4285 = vmatpush1.msra.mxu0 0.0
    %4286 = vmatprep.subr.mxu0 0.0
    %4287 = vmatpush1.msra.mxu0 0.0
    %4288 = vmatprep.subr.mxu0 0.0
    %4289 = vmatpush1.msra.mxu0 0.0
    %4290 = vmatprep.subr.mxu0 0.0
    %4291 = vmatpush1.msra.mxu0 0.0
    %4292 = vmatprep.subr.mxu0 0.0
    %4293 = vmatpush1.msra.mxu0 0.0
    %4294 = vmatprep.subr.mxu0 0.0
    %4295 = vmatpush1.msra.mxu0 0.0
    %4296 = vmatprep.subr.mxu0 0.0
    %4297 = vmatpush1.msra.mxu0 0.0
    %4298 = vmatprep.subr.mxu0 0.0
    %4299 = vmatpush1.msra.mxu0 0.0
    %4300 = vmatprep.mubr.f32.mxu0 0.0
    %v4301 = vand.u32 %v3961, 4294901760
    %v4302 = vsub.f32 %v3961, %v4301
    %4303 = vmatmul.mubr.f32.gmra.mrb[0].mxu0 %v4302
    %v4304 = vpop.f32.mrb[0].mxu0
    %v4305 = vadd.f32 %v4201, %v4304
    %v4306 = vpop.f32.mrb[0].mxu0
    %4307 = vdwg.mxu0
    %4308 = vmatprep.subr.mxu0 0.0
    %v4309 = vand.u32 %v69, 4294901760
    %4310 = vmatpush1.msra.mxu0 %v4309
    %4311 = vmatprep.subr.mxu0 0.0
    %v4312 = vand.u32 %v70, 4294901760
    %4313 = vmatpush1.msra.mxu0 %v4312
    %4314 = vmatprep.subr.mxu0 0.0
    %v4315 = vand.u32 %v71, 4294901760
    %4316 = vmatpush1.msra.mxu0 %v4315
    %4317 = vmatprep.subr.mxu0 0.0
    %v4318 = vand.u32 %v72, 4294901760
    %4319 = vmatpush1.msra.mxu0 %v4318
    %4320 = vmatprep.subr.mxu0 0.0
    %v4321 = vand.u32 %v73, 4294901760
    %4322 = vmatpush1.msra.mxu0 %v4321
    %4323 = vmatprep.subr.mxu0 0.0
    %v4324 = vand.u32 %v74, 4294901760
    %4325 = vmatpush1.msra.mxu0 %v4324
    %4326 = vmatprep.subr.mxu0 0.0
    %v4327 = vand.u32 %v75, 4294901760
    %4328 = vmatpush1.msra.mxu0 %v4327
    %4329 = vmatprep.subr.mxu0 0.0
    %v4330 = vand.u32 %v76, 4294901760
    %4331 = vmatpush1.msra.mxu0 %v4330
    %4332 = vmatprep.subr.mxu0 0.0
    %v4333 = vand.u32 %v77, 4294901760
    %4334 = vmatpush1.msra.mxu0 %v4333
    %4335 = vmatprep.subr.mxu0 0.0
    %v4336 = vand.u32 %v78, 4294901760
    %4337 = vmatpush1.msra.mxu0 %v4336
    %4338 = vmatprep.subr.mxu0 0.0
    %v4339 = vand.u32 %v79, 4294901760
    %4340 = vmatpush1.msra.mxu0 %v4339
    %4341 = vmatprep.subr.mxu0 0.0
    %v4342 = vand.u32 %v80, 4294901760
    %4343 = vmatpush1.msra.mxu0 %v4342
    %4344 = vmatprep.subr.mxu0 0.0
    %v4345 = vand.u32 %v81, 4294901760
    %4346 = vmatpush1.msra.mxu0 %v4345
    %4347 = vmatprep.subr.mxu0 0.0
    %v4348 = vand.u32 %v82, 4294901760
    %4349 = vmatpush1.msra.mxu0 %v4348
    %4350 = vmatprep.subr.mxu0 0.0
    %v4351 = vand.u32 %v83, 4294901760
    %4352 = vmatpush1.msra.mxu0 %v4351
    %4353 = vmatprep.subr.mxu0 0.0
    %v4354 = vand.u32 %v84, 4294901760
    %4355 = vmatpush1.msra.mxu0 %v4354
    %4356 = vmatprep.subr.mxu0 0.0
    %4357 = vmatpush1.msra.mxu0 0.0
    %4358 = vmatprep.subr.mxu0 0.0
    %4359 = vmatpush1.msra.mxu0 0.0
    %4360 = vmatprep.subr.mxu0 0.0
    %4361 = vmatpush1.msra.mxu0 0.0
    %4362 = vmatprep.subr.mxu0 0.0
    %4363 = vmatpush1.msra.mxu0 0.0
    %4364 = vmatprep.subr.mxu0 0.0
    %4365 = vmatpush1.msra.mxu0 0.0
    %4366 = vmatprep.subr.mxu0 0.0
    %4367 = vmatpush1.msra.mxu0 0.0
    %4368 = vmatprep.subr.mxu0 0.0
    %4369 = vmatpush1.msra.mxu0 0.0
    %4370 = vmatprep.subr.mxu0 0.0
    %4371 = vmatpush1.msra.mxu0 0.0
    %4372 = vmatprep.subr.mxu0 0.0
    %4373 = vmatpush1.msra.mxu0 0.0
    %4374 = vmatprep.subr.mxu0 0.0
    %4375 = vmatpush1.msra.mxu0 0.0
    %4376 = vmatprep.subr.mxu0 0.0
    %4377 = vmatpush1.msra.mxu0 0.0
    %4378 = vmatprep.subr.mxu0 0.0
    %4379 = vmatpush1.msra.mxu0 0.0
    %4380 = vmatprep.subr.mxu0 0.0
    %4381 = vmatpush1.msra.mxu0 0.0
    %4382 = vmatprep.subr.mxu0 0.0
    %4383 = vmatpush1.msra.mxu0 0.0
    %4384 = vmatprep.subr.mxu0 0.0
    %4385 = vmatpush1.msra.mxu0 0.0
    %4386 = vmatprep.subr.mxu0 0.0
    %4387 = vmatpush1.msra.mxu0 0.0
    %4388 = vmatprep.mubr.f32.mxu0 0.0
    %v4389 = vand.u32 %v3961, 4294901760
    %v4390 = vsub.f32 %v3961, %v4389
    %v4391 = vand.u32 %v4390, 4294901760
    %4392 = vmatmul.mubr.f32.gmra.mrb[0].mxu0 %v4391
    %v4393 = vpop.f32.mrb[0].mxu0
    %v4394 = vadd.f32 %v4305, %v4393
    %v4395 = vpop.f32.mrb[0].mxu0
    %4396 = vdwg.mxu0
    %4397 = vmatprep.subr.mxu0 0.0
    %v4398 = vand.u32 %v69, 4294901760
    %v4399 = vsub.f32 %v69, %v4398
    %v4400 = vand.u32 %v4399, 4294901760
    %4401 = vmatpush1.msra.mxu0 %v4400
    %4402 = vmatprep.subr.mxu0 0.0
    %v4403 = vand.u32 %v70, 4294901760
    %v4404 = vsub.f32 %v70, %v4403
    %v4405 = vand.u32 %v4404, 4294901760
    %4406 = vmatpush1.msra.mxu0 %v4405
    %4407 = vmatprep.subr.mxu0 0.0
    %v4408 = vand.u32 %v71, 4294901760
    %v4409 = vsub.f32 %v71, %v4408
    %v4410 = vand.u32 %v4409, 4294901760
    %4411 = vmatpush1.msra.mxu0 %v4410
    %4412 = vmatprep.subr.mxu0 0.0
    %v4413 = vand.u32 %v72, 4294901760
    %v4414 = vsub.f32 %v72, %v4413
    %v4415 = vand.u32 %v4414, 4294901760
    %4416 = vmatpush1.msra.mxu0 %v4415
    %4417 = vmatprep.subr.mxu0 0.0
    %v4418 = vand.u32 %v73, 4294901760
    %v4419 = vsub.f32 %v73, %v4418
    %v4420 = vand.u32 %v4419, 4294901760
    %4421 = vmatpush1.msra.mxu0 %v4420
    %4422 = vmatprep.subr.mxu0 0.0
    %v4423 = vand.u32 %v74, 4294901760
    %v4424 = vsub.f32 %v74, %v4423
    %v4425 = vand.u32 %v4424, 4294901760
    %4426 = vmatpush1.msra.mxu0 %v4425
    %4427 = vmatprep.subr.mxu0 0.0
    %v4428 = vand.u32 %v75, 4294901760
    %v4429 = vsub.f32 %v75, %v4428
    %v4430 = vand.u32 %v4429, 4294901760
    %4431 = vmatpush1.msra.mxu0 %v4430
    %4432 = vmatprep.subr.mxu0 0.0
    %v4433 = vand.u32 %v76, 4294901760
    %v4434 = vsub.f32 %v76, %v4433
    %v4435 = vand.u32 %v4434, 4294901760
    %4436 = vmatpush1.msra.mxu0 %v4435
    %4437 = vmatprep.subr.mxu0 0.0
    %v4438 = vand.u32 %v77, 4294901760
    %v4439 = vsub.f32 %v77, %v4438
    %v4440 = vand.u32 %v4439, 4294901760
    %4441 = vmatpush1.msra.mxu0 %v4440
    %4442 = vmatprep.subr.mxu0 0.0
    %v4443 = vand.u32 %v78, 4294901760
    %v4444 = vsub.f32 %v78, %v4443
    %v4445 = vand.u32 %v4444, 4294901760
    %4446 = vmatpush1.msra.mxu0 %v4445
    %4447 = vmatprep.subr.mxu0 0.0
    %v4448 = vand.u32 %v79, 4294901760
    %v4449 = vsub.f32 %v79, %v4448
    %v4450 = vand.u32 %v4449, 4294901760
    %4451 = vmatpush1.msra.mxu0 %v4450
    %4452 = vmatprep.subr.mxu0 0.0
    %v4453 = vand.u32 %v80, 4294901760
    %v4454 = vsub.f32 %v80, %v4453
    %v4455 = vand.u32 %v4454, 4294901760
    %4456 = vmatpush1.msra.mxu0 %v4455
    %4457 = vmatprep.subr.mxu0 0.0
    %v4458 = vand.u32 %v81, 4294901760
    %v4459 = vsub.f32 %v81, %v4458
    %v4460 = vand.u32 %v4459, 4294901760
    %4461 = vmatpush1.msra.mxu0 %v4460
    %4462 = vmatprep.subr.mxu0 0.0
    %v4463 = vand.u32 %v82, 4294901760
    %v4464 = vsub.f32 %v82, %v4463
    %v4465 = vand.u32 %v4464, 4294901760
    %4466 = vmatpush1.msra.mxu0 %v4465
    %4467 = vmatprep.subr.mxu0 0.0
    %v4468 = vand.u32 %v83, 4294901760
    %v4469 = vsub.f32 %v83, %v4468
    %v4470 = vand.u32 %v4469, 4294901760
    %4471 = vmatpush1.msra.mxu0 %v4470
    %4472 = vmatprep.subr.mxu0 0.0
    %v4473 = vand.u32 %v84, 4294901760
    %v4474 = vsub.f32 %v84, %v4473
    %v4475 = vand.u32 %v4474, 4294901760
    %4476 = vmatpush1.msra.mxu0 %v4475
    %4477 = vmatprep.subr.mxu0 0.0
    %4478 = vmatpush1.msra.mxu0 0.0
    %4479 = vmatprep.subr.mxu0 0.0
    %4480 = vmatpush1.msra.mxu0 0.0
    %4481 = vmatprep.subr.mxu0 0.0
    %4482 = vmatpush1.msra.mxu0 0.0
    %4483 = vmatprep.subr.mxu0 0.0
    %4484 = vmatpush1.msra.mxu0 0.0
    %4485 = vmatprep.subr.mxu0 0.0
    %4486 = vmatpush1.msra.mxu0 0.0
    %4487 = vmatprep.subr.mxu0 0.0
    %4488 = vmatpush1.msra.mxu0 0.0
    %4489 = vmatprep.subr.mxu0 0.0
    %4490 = vmatpush1.msra.mxu0 0.0
    %4491 = vmatprep.subr.mxu0 0.0
    %4492 = vmatpush1.msra.mxu0 0.0
    %4493 = vmatprep.subr.mxu0 0.0
    %4494 = vmatpush1.msra.mxu0 0.0
    %4495 = vmatprep.subr.mxu0 0.0
    %4496 = vmatpush1.msra.mxu0 0.0
    %4497 = vmatprep.subr.mxu0 0.0
    %4498 = vmatpush1.msra.mxu0 0.0
    %4499 = vmatprep.subr.mxu0 0.0
    %4500 = vmatpush1.msra.mxu0 0.0
    %4501 = vmatprep.subr.mxu0 0.0
    %4502 = vmatpush1.msra.mxu0 0.0
    %4503 = vmatprep.subr.mxu0 0.0
    %4504 = vmatpush1.msra.mxu0 0.0
    %4505 = vmatprep.subr.mxu0 0.0
    %4506 = vmatpush1.msra.mxu0 0.0
    %4507 = vmatprep.subr.mxu0 0.0
    %4508 = vmatpush1.msra.mxu0 0.0
    %4509 = vmatprep.mubr.f32.mxu0 0.0
    %v4510 = vand.u32 %v3961, 4294901760
    %4511 = vmatmul.mubr.f32.gmra.mrb[0].mxu0 %v4510
    %v4512 = vpop.f32.mrb[0].mxu0
    %v4513 = vadd.f32 %v4394, %v4512
    %v4514 = vpop.f32.mrb[0].mxu0
    %4515 = vdwg.mxu0
    %4516 = vmatprep.subr.mxu0 0.0
    %v4517 = vand.u32 %v69, 4294901760
    %4518 = vmatpush1.msra.mxu0 %v4517
    %4519 = vmatprep.subr.mxu0 0.0
    %v4520 = vand.u32 %v70, 4294901760
    %4521 = vmatpush1.msra.mxu0 %v4520
    %4522 = vmatprep.subr.mxu0 0.0
    %v4523 = vand.u32 %v71, 4294901760
    %4524 = vmatpush1.msra.mxu0 %v4523
    %4525 = vmatprep.subr.mxu0 0.0
    %v4526 = vand.u32 %v72, 4294901760
    %4527 = vmatpush1.msra.mxu0 %v4526
    %4528 = vmatprep.subr.mxu0 0.0
    %v4529 = vand.u32 %v73, 4294901760
    %4530 = vmatpush1.msra.mxu0 %v4529
    %4531 = vmatprep.subr.mxu0 0.0
    %v4532 = vand.u32 %v74, 4294901760
    %4533 = vmatpush1.msra.mxu0 %v4532
    %4534 = vmatprep.subr.mxu0 0.0
    %v4535 = vand.u32 %v75, 4294901760
    %4536 = vmatpush1.msra.mxu0 %v4535
    %4537 = vmatprep.subr.mxu0 0.0
    %v4538 = vand.u32 %v76, 4294901760
    %4539 = vmatpush1.msra.mxu0 %v4538
    %4540 = vmatprep.subr.mxu0 0.0
    %v4541 = vand.u32 %v77, 4294901760
    %4542 = vmatpush1.msra.mxu0 %v4541
    %4543 = vmatprep.subr.mxu0 0.0
    %v4544 = vand.u32 %v78, 4294901760
    %4545 = vmatpush1.msra.mxu0 %v4544
    %4546 = vmatprep.subr.mxu0 0.0
    %v4547 = vand.u32 %v79, 4294901760
    %4548 = vmatpush1.msra.mxu0 %v4547
    %4549 = vmatprep.subr.mxu0 0.0
    %v4550 = vand.u32 %v80, 4294901760
    %4551 = vmatpush1.msra.mxu0 %v4550
    %4552 = vmatprep.subr.mxu0 0.0
    %v4553 = vand.u32 %v81, 4294901760
    %4554 = vmatpush1.msra.mxu0 %v4553
    %4555 = vmatprep.subr.mxu0 0.0
    %v4556 = vand.u32 %v82, 4294901760
    %4557 = vmatpush1.msra.mxu0 %v4556
    %4558 = vmatprep.subr.mxu0 0.0
    %v4559 = vand.u32 %v83, 4294901760
    %4560 = vmatpush1.msra.mxu0 %v4559
    %4561 = vmatprep.subr.mxu0 0.0
    %v4562 = vand.u32 %v84, 4294901760
    %4563 = vmatpush1.msra.mxu0 %v4562
    %4564 = vmatprep.subr.mxu0 0.0
    %4565 = vmatpush1.msra.mxu0 0.0
    %4566 = vmatprep.subr.mxu0 0.0
    %4567 = vmatpush1.msra.mxu0 0.0
    %4568 = vmatprep.subr.mxu0 0.0
    %4569 = vmatpush1.msra.mxu0 0.0
    %4570 = vmatprep.subr.mxu0 0.0
    %4571 = vmatpush1.msra.mxu0 0.0
    %4572 = vmatprep.subr.mxu0 0.0
    %4573 = vmatpush1.msra.mxu0 0.0
    %4574 = vmatprep.subr.mxu0 0.0
    %4575 = vmatpush1.msra.mxu0 0.0
    %4576 = vmatprep.subr.mxu0 0.0
    %4577 = vmatpush1.msra.mxu0 0.0
    %4578 = vmatprep.subr.mxu0 0.0
    %4579 = vmatpush1.msra.mxu0 0.0
    %4580 = vmatprep.subr.mxu0 0.0
    %4581 = vmatpush1.msra.mxu0 0.0
    %4582 = vmatprep.subr.mxu0 0.0
    %4583 = vmatpush1.msra.mxu0 0.0
    %4584 = vmatprep.subr.mxu0 0.0
    %4585 = vmatpush1.msra.mxu0 0.0
    %4586 = vmatprep.subr.mxu0 0.0
    %4587 = vmatpush1.msra.mxu0 0.0
    %4588 = vmatprep.subr.mxu0 0.0
    %4589 = vmatpush1.msra.mxu0 0.0
    %4590 = vmatprep.subr.mxu0 0.0
    %4591 = vmatpush1.msra.mxu0 0.0
    %4592 = vmatprep.subr.mxu0 0.0
    %4593 = vmatpush1.msra.mxu0 0.0
    %4594 = vmatprep.subr.mxu0 0.0
    %4595 = vmatpush1.msra.mxu0 0.0
    %4596 = vmatprep.mubr.f32.mxu0 0.0
    %v4597 = vand.u32 %v3961, 4294901760
    %4598 = vmatmul.mubr.f32.gmra.mrb[0].mxu0 %v4597
    %v4599 = vpop.f32.mrb[0].mxu0
    %v4600 = vadd.f32 %v4513, %v4599
    %v4601 = vpop.f32.mrb[0].mxu0
    %4602 = vdwg.mxu0
    %s4603 = scalar_lea.vmem [#allocation8], 4
    %4604 = vst [vmem:[%s4603] sm:$0xf] %v4600
    // Predicated region
    $region30: #{tpu_custom_call.1} parent=1 // pred_check
      _
    $region31: #{tpu_custom_call.1} parent=1 // pred_check_branch
      %4606 = sbr.rel (0) target = $region33
    $region32: #{tpu_custom_call.1} parent=1 // pred_region
      %s4608 = ssub.s32 128, 128
      %4609 = vsyncadd [#allocation4], %s4608
      %s4610 = sshll.u32 [#allocation8], 4
      %s4611 = int_to_ptr.vmem [resolvable:$true] %s4610
      %4616 = dma.vmem_to_hbm [thread:$0]  %s4611, 128, %s4, [#allocation4], 64, 64, 4
    $region33: #{tpu_custom_call.1} parent=1 // pred_fallthru
      _
    // Predicated region
    $region34: #{tpu_custom_call.1} parent=1 // pred_check
      _
    $region35: #{tpu_custom_call.1} parent=1 // pred_check_branch
      %4618 = sbr.rel (0) target = $region37
    $region36: #{tpu_custom_call.1} parent=1 // pred_region
      %4619 = dma.done [#allocation4], 128
    $region37: #{tpu_custom_call.1} parent=1 // pred_fallthru
      _
    %4620 = vsyncpa [#allocation3], 1
    %4621 = vsyncpa [#allocation6], 1
    %4622 = vsyncpa [#allocation4], 1

</llo_original>
